<compile_context>
chip_gen: v7x
topology: tpu7x:2x2x1
jax: 0.10.0
libtpu: 0.0.40
codegen_flags: <defaults>
</compile_context>

<pallas_src>
import jax
import jax.numpy as jnp
from jax.experimental import pallas as pl
from jax.experimental.pallas import tpu as pltpu


_VMEM = pl.BlockSpec(memory_space=pltpu.MemorySpace.VMEM)
_MXU_DTYPE = jnp.bfloat16   # MXU operand dtype (accumulation stays f32)


# ----------------------------- Pallas kernel -------------------------------

def _make_fused_kernel(n_layers):
    """Builds the fused LSTM-stack + FC kernel for a fixed number of layers."""

    def kernel(*refs):
        x_ref, h0_ref, c0_ref = refs[:3]
        w_refs = refs[3:3 + 3 * n_layers]               # (wih, whh, b) per layer
        fcw_ref, fcb_ref = refs[3 + 3 * n_layers:5 + 3 * n_layers]
        out_ref, hT_ref, cT_ref = refs[5 + 3 * n_layers:8 + 3 * n_layers]
        y_scr = refs[8 + 3 * n_layers]                  # VMEM scratch (B, T, H) f32

        B, T, F = x_ref.shape
        H = h0_ref.shape[2]

        # Layer-0 input: flatten (B, T, F) -> (B*T, F) once (rows are b*T + t).
        xin = x_ref[...].reshape(B * T, F)

        for l in range(n_layers):
            wih = w_refs[3 * l + 0][...]                # (Fin, 4H) bf16, pre-transposed
            whh = w_refs[3 * l + 1][...]                # (H,   4H) bf16, pre-transposed
            b = w_refs[3 * l + 2][...]                  # (1,   4H) f32, b_ih + b_hh

            # Batched input projection for the whole sequence + hoisted bias.
            xw = jnp.dot(xin.astype(_MXU_DTYPE), wih,
                         preferred_element_type=jnp.float32) + b     # (B*T, 4H)
            xw = xw.reshape(B, T, 4 * H)

            h = h0_ref[l]                               # (B, H) f32
            c = c0_ref[l]                               # (B, H) f32
            for t in range(T):                          # fully unrolled recurrence
                gates = xw[:, t, :] + jnp.dot(
                    h.astype(_MXU_DTYPE), whh,
                    preferred_element_type=jnp.float32)              # (B, 4H) f32
                i = jax.nn.sigmoid(gates[:, 0 * H:1 * H])
                f = jax.nn.sigmoid(gates[:, 1 * H:2 * H])
                g = jnp.tanh(gates[:, 2 * H:3 * H])
                o = jax.nn.sigmoid(gates[:, 3 * H:4 * H])
                c = f * c + i * g
                h = o * jnp.tanh(c)
                y_scr[:, t, :] = h                      # activation stays in VMEM

            hT_ref[l] = h
            cT_ref[l] = c
            # Next layer's input (dropout = identity at inference), VMEM-resident.
            xin = y_scr[...].reshape(B * T, H)

        # Linear head on the last layer's activations.
        out = jnp.dot(xin.astype(_MXU_DTYPE), fcw_ref[...],
                      preferred_element_type=jnp.float32) + fcb_ref[...]
        out_ref[...] = out.reshape(B, T, -1)

    return kernel


# ------------------------------- wrapper ------------------------------------

def model_forward(params, hidden, x):
    """Equivalent of Model.forward(hidden, x) -> (out, (h_n, c_n))."""
    h0, c0 = hidden                                     # each (n_layers, B, H)
    n_layers, B, H = h0.shape
    T = x.shape[1]
    I = params["fc_w"].shape[1]

    flat_w = []
    for w_ih, w_hh, b in params["lstm"]:
        flat_w += [w_ih, w_hh, b]

    out, h_n, c_n = pl.pallas_call(
        _make_fused_kernel(n_layers),
        out_shape=(
            jax.ShapeDtypeStruct((B, T, I), jnp.float32),
            jax.ShapeDtypeStruct((n_layers, B, H), jnp.float32),
            jax.ShapeDtypeStruct((n_layers, B, H), jnp.float32),
        ),
        in_specs=[_VMEM] * (3 + len(flat_w) + 2),
        out_specs=(_VMEM, _VMEM, _VMEM),
        scratch_shapes=[pltpu.VMEM((B, T, H), jnp.float32)],
    )(x, h0, c0, *flat_w, params["fc_w"], params["fc_b"])
    return out, (h_n, c_n)


# ------------------------- params / reference ------------------------------

def init_params(key, input_size, hidden_size, n_layers):
    """PyTorch-style init; weights pre-transposed + cast to bf16 once here."""
    k = 1.0 / float(jnp.sqrt(hidden_size))
    params = {"lstm": []}
    for l in range(n_layers):
        feat = input_size if l == 0 else hidden_size
        key, k1, k2, k3, k4 = jax.random.split(key, 5)
        w_ih = jax.random.uniform(k1, (4 * hidden_size, feat), jnp.float32, -k, k)
        w_hh = jax.random.uniform(k2, (4 * hidden_size, hidden_size), jnp.float32, -k, k)
        b_ih = jax.random.uniform(k3, (4 * hidden_size,), jnp.float32, -k, k)
        b_hh = jax.random.uniform(k4, (4 * hidden_size,), jnp.float32, -k, k)
        params["lstm"].append((
            jnp.asarray(w_ih.T, dtype=_MXU_DTYPE),              # (Fin, 4H)
            jnp.asarray(w_hh.T, dtype=_MXU_DTYPE),              # (H,  4H)
            (b_ih + b_hh).reshape(1, -1).astype(jnp.float32),   # (1,  4H)
        ))
    key, k1, k2 = jax.random.split(key, 3)
    fc_w = jax.random.uniform(k1, (input_size, hidden_size), jnp.float32, -k, k)
    fc_b = jax.random.uniform(k2, (input_size,), jnp.float32, -k, k)
    params["fc_w"] = jnp.asarray(fc_w.T, dtype=_MXU_DTYPE)      # (H, I)
    params["fc_b"] = fc_b.reshape(1, -1).astype(jnp.float32)    # (1, I)
    return params


def ref_forward(params, hidden, x, mm_dtype=jnp.float32):
    """Pure-JAX reference (PyTorch gate order i,f,g,o; same transposed params)."""
    h0, c0 = hidden
    n_layers = len(params["lstm"])
    B, T, _ = x.shape

    def mm(a, w):
        return jnp.dot(a.astype(mm_dtype), w.astype(mm_dtype),
                       preferred_element_type=jnp.float32)

    h = [h0[l] for l in range(n_layers)]
    c = [c0[l] for l in range(n_layers)]
    layer_in = x
    for l in range(n_layers):
        w_ih, w_hh, b = params["lstm"][l]
        H = h[l].shape[1]
        ys = []
        for t in range(T):
            gates = mm(layer_in[:, t, :], w_ih) + mm(h[l], w_hh) + b
            i = jax.nn.sigmoid(gates[:, :H])
            f = jax.nn.sigmoid(gates[:, H:2 * H])
            g = jnp.tanh(gates[:, 2 * H:3 * H])
            o = jax.nn.sigmoid(gates[:, 3 * H:])
            c[l] = f * c[l] + i * g
            h[l] = o * jnp.tanh(c[l])
            ys.append(h[l])
        layer_in = jnp.stack(ys, axis=1)
    H = layer_in.shape[-1]
    out = mm(layer_in.reshape(B * T, H), params["fc_w"]) + params["fc_b"]
    return out.reshape(B, T, -1), (jnp.stack(h), jnp.stack(c))


# --------------------------------- main -------------------------------------

if __name__ == "__main__":
    input_size, hidden_size, n_layers = 16, 32, 3
    B, T = 2, 8

    key = jax.random.PRNGKey(0)
    key, kp, kx, kh, kc = jax.random.split(key, 5)
    params = init_params(kp, input_size, hidden_size, n_layers)

    x = jax.random.normal(kx, (B, T, input_size), jnp.float32)
    h0 = jax.random.normal(kh, (n_layers, B, hidden_size), jnp.float32) * 0.1
    c0 = jax.random.normal(kc, (n_layers, B, hidden_size), jnp.float32) * 0.1
    hidden = (h0, c0)

    out, (h_n, c_n) = model_forward(params, hidden, x)
    jax.block_until_ready((out, h_n, c_n))

    # Tight check vs. a reference using the same bf16 MXU operands.
    out_m, (h_m, c_m) = ref_forward(params, hidden, x, mm_dtype=_MXU_DTYPE)
    assert jnp.allclose(out, out_m, atol=2e-3), "output mismatch (bf16-matched ref)"
    assert jnp.allclose(h_n, h_m, atol=2e-3), "h_n mismatch (bf16-matched ref)"
    assert jnp.allclose(c_n, c_m, atol=2e-3), "c_n mismatch (bf16-matched ref)"

    # Loose check vs. the full-f32 reference (difference is only the bf16
    # quantization of MXU operands; elementwise math is f32 in both paths).
    out_r, (h_r, c_r) = ref_forward(params, hidden, x, mm_dtype=jnp.float32)
    assert jnp.allclose(out, out_r, atol=1e-1), "output mismatch (f32 ref)"
    assert jnp.allclose(h_n, h_r, atol=1e-1), "h_n mismatch (f32 ref)"
    assert jnp.allclose(c_n, c_r, atol=1e-1), "c_n mismatch (f32 ref)"

    print("KERNEL_OK")
</pallas_src>

<mosaic_0001>
module attributes {stable_mosaic.version = 11 : i64} {
  func.func @kernel(%arg0: memref<2x8x16xf32, #tpu.memory_space<vmem>>, %arg1: memref<3x2x32xf32, #tpu.memory_space<vmem>>, %arg2: memref<3x2x32xf32, #tpu.memory_space<vmem>>, %arg3: memref<16x128xbf16, #tpu.memory_space<vmem>>, %arg4: memref<32x128xbf16, #tpu.memory_space<vmem>>, %arg5: memref<1x128xf32, #tpu.memory_space<vmem>>, %arg6: memref<32x128xbf16, #tpu.memory_space<vmem>>, %arg7: memref<32x128xbf16, #tpu.memory_space<vmem>>, %arg8: memref<1x128xf32, #tpu.memory_space<vmem>>, %arg9: memref<32x128xbf16, #tpu.memory_space<vmem>>, %arg10: memref<32x128xbf16, #tpu.memory_space<vmem>>, %arg11: memref<1x128xf32, #tpu.memory_space<vmem>>, %arg12: memref<32x16xbf16, #tpu.memory_space<vmem>>, %arg13: memref<1x16xf32, #tpu.memory_space<vmem>>, %arg14: memref<2x8x16xf32, #tpu.memory_space<vmem>>, %arg15: memref<3x2x32xf32, #tpu.memory_space<vmem>>, %arg16: memref<3x2x32xf32, #tpu.memory_space<vmem>>, %arg17: memref<2x8x32xf32, #tpu.memory_space<vmem>>) attributes {dimension_semantics = [], scalar_prefetch = 0 : i64, scratch_operands = 1 : i64, tpu.core_type = #tpu.core_type<tc>} {
    %c0 = arith.constant 0 : index
    %c0_0 = arith.constant 0 : index
    %c0_1 = arith.constant 0 : index
    %0 = vector.load %arg0[%c0, %c0_0, %c0_1] : memref<2x8x16xf32, #tpu.memory_space<vmem>>, vector<2x8x16xf32>
    %1 = vector.shape_cast %0 : vector<2x8x16xf32> to vector<16x16xf32>
    %c0_2 = arith.constant 0 : index
    %c0_3 = arith.constant 0 : index
    %2 = vector.load %arg3[%c0_2, %c0_3] : memref<16x128xbf16, #tpu.memory_space<vmem>>, vector<16x128xbf16>
    %c0_4 = arith.constant 0 : index
    %c0_5 = arith.constant 0 : index
    %3 = vector.load %arg4[%c0_4, %c0_5] : memref<32x128xbf16, #tpu.memory_space<vmem>>, vector<32x128xbf16>
    %c0_6 = arith.constant 0 : index
    %c0_7 = arith.constant 0 : index
    %4 = vector.load %arg5[%c0_6, %c0_7] : memref<1x128xf32, #tpu.memory_space<vmem>>, vector<1x128xf32>
    %5 = arith.truncf %1 : vector<16x16xf32> to vector<16x16xbf16>
    %cst = arith.constant dense<0.000000e+00> : vector<16x128xf32>
    %6 = tpu.matmul %5, %2, %cst {dimension_numbers = #tpu.dot_dimension_numbers<[1], [0], [0], [1], [0, 0, 1, 1], [], []>} : vector<16x16xbf16>, vector<16x128xbf16>, vector<16x128xf32> -> vector<16x128xf32>
    %7 = vector.broadcast %4 : vector<1x128xf32> to vector<16x128xf32>
    %8 = arith.addf %6, %7 : vector<16x128xf32>
    %9 = vector.shape_cast %8 : vector<16x128xf32> to vector<2x8x128xf32>
    %c0_8 = arith.constant 0 : index
    %c0_9 = arith.constant 0 : index
    %c0_10 = arith.constant 0 : index
    %10 = vector.load %arg1[%c0_8, %c0_9, %c0_10] : memref<3x2x32xf32, #tpu.memory_space<vmem>>, vector<1x2x32xf32>
    %11 = vector.shape_cast %10 : vector<1x2x32xf32> to vector<2x32xf32>
    %c0_11 = arith.constant 0 : index
    %c0_12 = arith.constant 0 : index
    %c0_13 = arith.constant 0 : index
    %12 = vector.load %arg2[%c0_11, %c0_12, %c0_13] : memref<3x2x32xf32, #tpu.memory_space<vmem>>, vector<1x2x32xf32>
    %13 = vector.shape_cast %12 : vector<1x2x32xf32> to vector<2x32xf32>
    %14 = vector.extract_strided_slice %9 {offsets = [0, 0, 0], sizes = [2, 1, 128], strides = [1, 1, 1]} : vector<2x8x128xf32> to vector<2x1x128xf32>
    %15 = vector.shape_cast %14 : vector<2x1x128xf32> to vector<2x128xf32>
    %16 = arith.truncf %11 : vector<2x32xf32> to vector<2x32xbf16>
    %cst_14 = arith.constant dense<0.000000e+00> : vector<2x128xf32>
    %17 = tpu.matmul %16, %3, %cst_14 {dimension_numbers = #tpu.dot_dimension_numbers<[1], [0], [0], [1], [0, 0, 1, 1], [], []>} : vector<2x32xbf16>, vector<32x128xbf16>, vector<2x128xf32> -> vector<2x128xf32>
    %18 = arith.addf %15, %17 : vector<2x128xf32>
    %19 = vector.extract_strided_slice %18 {offsets = [0, 0], sizes = [2, 32], strides = [1, 1]} : vector<2x128xf32> to vector<2x32xf32>
    %20 = arith.negf %19 : vector<2x32xf32>
    %21 = math.exp %20 : vector<2x32xf32>
    %cst_15 = arith.constant 1.000000e+00 : f32
    %22 = vector.broadcast %cst_15 : f32 to vector<2x32xf32>
    %23 = arith.addf %22, %21 : vector<2x32xf32>
    %24 = arith.divf %22, %23 : vector<2x32xf32>
    %25 = vector.extract_strided_slice %18 {offsets = [0, 32], sizes = [2, 32], strides = [1, 1]} : vector<2x128xf32> to vector<2x32xf32>
    %26 = arith.negf %25 : vector<2x32xf32>
    %27 = math.exp %26 : vector<2x32xf32>
    %cst_16 = arith.constant 1.000000e+00 : f32
    %28 = vector.broadcast %cst_16 : f32 to vector<2x32xf32>
    %29 = arith.addf %28, %27 : vector<2x32xf32>
    %30 = arith.divf %28, %29 : vector<2x32xf32>
    %31 = vector.extract_strided_slice %18 {offsets = [0, 64], sizes = [2, 32], strides = [1, 1]} : vector<2x128xf32> to vector<2x32xf32>
    %32 = math.tanh %31 : vector<2x32xf32>
    %33 = vector.extract_strided_slice %18 {offsets = [0, 96], sizes = [2, 32], strides = [1, 1]} : vector<2x128xf32> to vector<2x32xf32>
    %34 = arith.negf %33 : vector<2x32xf32>
    %35 = math.exp %34 : vector<2x32xf32>
    %cst_17 = arith.constant 1.000000e+00 : f32
    %36 = vector.broadcast %cst_17 : f32 to vector<2x32xf32>
    %37 = arith.addf %36, %35 : vector<2x32xf32>
    %38 = arith.divf %36, %37 : vector<2x32xf32>
    %39 = arith.mulf %30, %13 : vector<2x32xf32>
    %40 = arith.mulf %24, %32 : vector<2x32xf32>
    %41 = arith.addf %39, %40 : vector<2x32xf32>
    %42 = math.tanh %41 : vector<2x32xf32>
    %43 = arith.mulf %38, %42 : vector<2x32xf32>
    %c0_18 = arith.constant 0 : index
    %c0_19 = arith.constant 0 : index
    %c0_20 = arith.constant 0 : index
    %44 = vector.load %arg17[%c0_18, %c0_19, %c0_20] : memref<2x8x32xf32, #tpu.memory_space<vmem>>, vector<2x1x32xf32>
    %45 = vector.shape_cast %44 : vector<2x1x32xf32> to vector<2x32xf32>
    %46 = vector.shape_cast %43 : vector<2x32xf32> to vector<2x1x32xf32>
    tpu.vector_store %arg17[%c0_18, %c0_19, %c0_20], %46 {strides = array<i32>} : memref<2x8x32xf32, #tpu.memory_space<vmem>>, vector<2x1x32xf32>,
    %47 = vector.extract_strided_slice %9 {offsets = [0, 1, 0], sizes = [2, 1, 128], strides = [1, 1, 1]} : vector<2x8x128xf32> to vector<2x1x128xf32>
    %48 = vector.shape_cast %47 : vector<2x1x128xf32> to vector<2x128xf32>
    %49 = arith.truncf %43 : vector<2x32xf32> to vector<2x32xbf16>
    %cst_21 = arith.constant dense<0.000000e+00> : vector<2x128xf32>
    %50 = tpu.matmul %49, %3, %cst_21 {dimension_numbers = #tpu.dot_dimension_numbers<[1], [0], [0], [1], [0, 0, 1, 1], [], []>} : vector<2x32xbf16>, vector<32x128xbf16>, vector<2x128xf32> -> vector<2x128xf32>
    %51 = arith.addf %48, %50 : vector<2x128xf32>
    %52 = vector.extract_strided_slice %51 {offsets = [0, 0], sizes = [2, 32], strides = [1, 1]} : vector<2x128xf32> to vector<2x32xf32>
    %53 = arith.negf %52 : vector<2x32xf32>
    %54 = math.exp %53 : vector<2x32xf32>
    %cst_22 = arith.constant 1.000000e+00 : f32
    %55 = vector.broadcast %cst_22 : f32 to vector<2x32xf32>
    %56 = arith.addf %55, %54 : vector<2x32xf32>
    %57 = arith.divf %55, %56 : vector<2x32xf32>
    %58 = vector.extract_strided_slice %51 {offsets = [0, 32], sizes = [2, 32], strides = [1, 1]} : vector<2x128xf32> to vector<2x32xf32>
    %59 = arith.negf %58 : vector<2x32xf32>
    %60 = math.exp %59 : vector<2x32xf32>
    %cst_23 = arith.constant 1.000000e+00 : f32
    %61 = vector.broadcast %cst_23 : f32 to vector<2x32xf32>
    %62 = arith.addf %61, %60 : vector<2x32xf32>
    %63 = arith.divf %61, %62 : vector<2x32xf32>
    %64 = vector.extract_strided_slice %51 {offsets = [0, 64], sizes = [2, 32], strides = [1, 1]} : vector<2x128xf32> to vector<2x32xf32>
    %65 = math.tanh %64 : vector<2x32xf32>
    %66 = vector.extract_strided_slice %51 {offsets = [0, 96], sizes = [2, 32], strides = [1, 1]} : vector<2x128xf32> to vector<2x32xf32>
    %67 = arith.negf %66 : vector<2x32xf32>
    %68 = math.exp %67 : vector<2x32xf32>
    %cst_24 = arith.constant 1.000000e+00 : f32
    %69 = vector.broadcast %cst_24 : f32 to vector<2x32xf32>
    %70 = arith.addf %69, %68 : vector<2x32xf32>
    %71 = arith.divf %69, %70 : vector<2x32xf32>
    %72 = arith.mulf %63, %41 : vector<2x32xf32>
    %73 = arith.mulf %57, %65 : vector<2x32xf32>
    %74 = arith.addf %72, %73 : vector<2x32xf32>
    %75 = math.tanh %74 : vector<2x32xf32>
    %76 = arith.mulf %71, %75 : vector<2x32xf32>
    %c0_25 = arith.constant 0 : index
    %c1 = arith.constant 1 : index
    %c0_26 = arith.constant 0 : index
    %77 = vector.load %arg17[%c0_25, %c1, %c0_26] : memref<2x8x32xf32, #tpu.memory_space<vmem>>, vector<2x1x32xf32>
    %78 = vector.shape_cast %77 : vector<2x1x32xf32> to vector<2x32xf32>
    %79 = vector.shape_cast %76 : vector<2x32xf32> to vector<2x1x32xf32>
    tpu.vector_store %arg17[%c0_25, %c1, %c0_26], %79 {strides = array<i32>} : memref<2x8x32xf32, #tpu.memory_space<vmem>>, vector<2x1x32xf32>,
    %80 = vector.extract_strided_slice %9 {offsets = [0, 2, 0], sizes = [2, 1, 128], strides = [1, 1, 1]} : vector<2x8x128xf32> to vector<2x1x128xf32>
    %81 = vector.shape_cast %80 : vector<2x1x128xf32> to vector<2x128xf32>
    %82 = arith.truncf %76 : vector<2x32xf32> to vector<2x32xbf16>
    %cst_27 = arith.constant dense<0.000000e+00> : vector<2x128xf32>
    %83 = tpu.matmul %82, %3, %cst_27 {dimension_numbers = #tpu.dot_dimension_numbers<[1], [0], [0], [1], [0, 0, 1, 1], [], []>} : vector<2x32xbf16>, vector<32x128xbf16>, vector<2x128xf32> -> vector<2x128xf32>
    %84 = arith.addf %81, %83 : vector<2x128xf32>
    %85 = vector.extract_strided_slice %84 {offsets = [0, 0], sizes = [2, 32], strides = [1, 1]} : vector<2x128xf32> to vector<2x32xf32>
    %86 = arith.negf %85 : vector<2x32xf32>
    %87 = math.exp %86 : vector<2x32xf32>
    %cst_28 = arith.constant 1.000000e+00 : f32
    %88 = vector.broadcast %cst_28 : f32 to vector<2x32xf32>
    %89 = arith.addf %88, %87 : vector<2x32xf32>
    %90 = arith.divf %88, %89 : vector<2x32xf32>
    %91 = vector.extract_strided_slice %84 {offsets = [0, 32], sizes = [2, 32], strides = [1, 1]} : vector<2x128xf32> to vector<2x32xf32>
    %92 = arith.negf %91 : vector<2x32xf32>
    %93 = math.exp %92 : vector<2x32xf32>
    %cst_29 = arith.constant 1.000000e+00 : f32
    %94 = vector.broadcast %cst_29 : f32 to vector<2x32xf32>
    %95 = arith.addf %94, %93 : vector<2x32xf32>
    %96 = arith.divf %94, %95 : vector<2x32xf32>
    %97 = vector.extract_strided_slice %84 {offsets = [0, 64], sizes = [2, 32], strides = [1, 1]} : vector<2x128xf32> to vector<2x32xf32>
    %98 = math.tanh %97 : vector<2x32xf32>
    %99 = vector.extract_strided_slice %84 {offsets = [0, 96], sizes = [2, 32], strides = [1, 1]} : vector<2x128xf32> to vector<2x32xf32>
    %100 = arith.negf %99 : vector<2x32xf32>
    %101 = math.exp %100 : vector<2x32xf32>
    %cst_30 = arith.constant 1.000000e+00 : f32
    %102 = vector.broadcast %cst_30 : f32 to vector<2x32xf32>
    %103 = arith.addf %102, %101 : vector<2x32xf32>
    %104 = arith.divf %102, %103 : vector<2x32xf32>
    %105 = arith.mulf %96, %74 : vector<2x32xf32>
    %106 = arith.mulf %90, %98 : vector<2x32xf32>
    %107 = arith.addf %105, %106 : vector<2x32xf32>
    %108 = math.tanh %107 : vector<2x32xf32>
    %109 = arith.mulf %104, %108 : vector<2x32xf32>
    %c0_31 = arith.constant 0 : index
    %c2 = arith.constant 2 : index
    %c0_32 = arith.constant 0 : index
    %110 = vector.load %arg17[%c0_31, %c2, %c0_32] : memref<2x8x32xf32, #tpu.memory_space<vmem>>, vector<2x1x32xf32>
    %111 = vector.shape_cast %110 : vector<2x1x32xf32> to vector<2x32xf32>
    %112 = vector.shape_cast %109 : vector<2x32xf32> to vector<2x1x32xf32>
    tpu.vector_store %arg17[%c0_31, %c2, %c0_32], %112 {strides = array<i32>} : memref<2x8x32xf32, #tpu.memory_space<vmem>>, vector<2x1x32xf32>,
    %113 = vector.extract_strided_slice %9 {offsets = [0, 3, 0], sizes = [2, 1, 128], strides = [1, 1, 1]} : vector<2x8x128xf32> to vector<2x1x128xf32>
    %114 = vector.shape_cast %113 : vector<2x1x128xf32> to vector<2x128xf32>
    %115 = arith.truncf %109 : vector<2x32xf32> to vector<2x32xbf16>
    %cst_33 = arith.constant dense<0.000000e+00> : vector<2x128xf32>
    %116 = tpu.matmul %115, %3, %cst_33 {dimension_numbers = #tpu.dot_dimension_numbers<[1], [0], [0], [1], [0, 0, 1, 1], [], []>} : vector<2x32xbf16>, vector<32x128xbf16>, vector<2x128xf32> -> vector<2x128xf32>
    %117 = arith.addf %114, %116 : vector<2x128xf32>
    %118 = vector.extract_strided_slice %117 {offsets = [0, 0], sizes = [2, 32], strides = [1, 1]} : vector<2x128xf32> to vector<2x32xf32>
    %119 = arith.negf %118 : vector<2x32xf32>
    %120 = math.exp %119 : vector<2x32xf32>
    %cst_34 = arith.constant 1.000000e+00 : f32
    %121 = vector.broadcast %cst_34 : f32 to vector<2x32xf32>
    %122 = arith.addf %121, %120 : vector<2x32xf32>
    %123 = arith.divf %121, %122 : vector<2x32xf32>
    %124 = vector.extract_strided_slice %117 {offsets = [0, 32], sizes = [2, 32], strides = [1, 1]} : vector<2x128xf32> to vector<2x32xf32>
    %125 = arith.negf %124 : vector<2x32xf32>
    %126 = math.exp %125 : vector<2x32xf32>
    %cst_35 = arith.constant 1.000000e+00 : f32
    %127 = vector.broadcast %cst_35 : f32 to vector<2x32xf32>
    %128 = arith.addf %127, %126 : vector<2x32xf32>
    %129 = arith.divf %127, %128 : vector<2x32xf32>
    %130 = vector.extract_strided_slice %117 {offsets = [0, 64], sizes = [2, 32], strides = [1, 1]} : vector<2x128xf32> to vector<2x32xf32>
    %131 = math.tanh %130 : vector<2x32xf32>
    %132 = vector.extract_strided_slice %117 {offsets = [0, 96], sizes = [2, 32], strides = [1, 1]} : vector<2x128xf32> to vector<2x32xf32>
    %133 = arith.negf %132 : vector<2x32xf32>
    %134 = math.exp %133 : vector<2x32xf32>
    %cst_36 = arith.constant 1.000000e+00 : f32
    %135 = vector.broadcast %cst_36 : f32 to vector<2x32xf32>
    %136 = arith.addf %135, %134 : vector<2x32xf32>
    %137 = arith.divf %135, %136 : vector<2x32xf32>
    %138 = arith.mulf %129, %107 : vector<2x32xf32>
    %139 = arith.mulf %123, %131 : vector<2x32xf32>
    %140 = arith.addf %138, %139 : vector<2x32xf32>
    %141 = math.tanh %140 : vector<2x32xf32>
    %142 = arith.mulf %137, %141 : vector<2x32xf32>
    %c0_37 = arith.constant 0 : index
    %c3 = arith.constant 3 : index
    %c0_38 = arith.constant 0 : index
    %143 = vector.load %arg17[%c0_37, %c3, %c0_38] : memref<2x8x32xf32, #tpu.memory_space<vmem>>, vector<2x1x32xf32>
    %144 = vector.shape_cast %143 : vector<2x1x32xf32> to vector<2x32xf32>
    %145 = vector.shape_cast %142 : vector<2x32xf32> to vector<2x1x32xf32>
    tpu.vector_store %arg17[%c0_37, %c3, %c0_38], %145 {strides = array<i32>} : memref<2x8x32xf32, #tpu.memory_space<vmem>>, vector<2x1x32xf32>,
    %146 = vector.extract_strided_slice %9 {offsets = [0, 4, 0], sizes = [2, 1, 128], strides = [1, 1, 1]} : vector<2x8x128xf32> to vector<2x1x128xf32>
    %147 = vector.shape_cast %146 : vector<2x1x128xf32> to vector<2x128xf32>
    %148 = arith.truncf %142 : vector<2x32xf32> to vector<2x32xbf16>
    %cst_39 = arith.constant dense<0.000000e+00> : vector<2x128xf32>
    %149 = tpu.matmul %148, %3, %cst_39 {dimension_numbers = #tpu.dot_dimension_numbers<[1], [0], [0], [1], [0, 0, 1, 1], [], []>} : vector<2x32xbf16>, vector<32x128xbf16>, vector<2x128xf32> -> vector<2x128xf32>
    %150 = arith.addf %147, %149 : vector<2x128xf32>
    %151 = vector.extract_strided_slice %150 {offsets = [0, 0], sizes = [2, 32], strides = [1, 1]} : vector<2x128xf32> to vector<2x32xf32>
    %152 = arith.negf %151 : vector<2x32xf32>
    %153 = math.exp %152 : vector<2x32xf32>
    %cst_40 = arith.constant 1.000000e+00 : f32
    %154 = vector.broadcast %cst_40 : f32 to vector<2x32xf32>
    %155 = arith.addf %154, %153 : vector<2x32xf32>
    %156 = arith.divf %154, %155 : vector<2x32xf32>
    %157 = vector.extract_strided_slice %150 {offsets = [0, 32], sizes = [2, 32], strides = [1, 1]} : vector<2x128xf32> to vector<2x32xf32>
    %158 = arith.negf %157 : vector<2x32xf32>
    %159 = math.exp %158 : vector<2x32xf32>
    %cst_41 = arith.constant 1.000000e+00 : f32
    %160 = vector.broadcast %cst_41 : f32 to vector<2x32xf32>
    %161 = arith.addf %160, %159 : vector<2x32xf32>
    %162 = arith.divf %160, %161 : vector<2x32xf32>
    %163 = vector.extract_strided_slice %150 {offsets = [0, 64], sizes = [2, 32], strides = [1, 1]} : vector<2x128xf32> to vector<2x32xf32>
    %164 = math.tanh %163 : vector<2x32xf32>
    %165 = vector.extract_strided_slice %150 {offsets = [0, 96], sizes = [2, 32], strides = [1, 1]} : vector<2x128xf32> to vector<2x32xf32>
    %166 = arith.negf %165 : vector<2x32xf32>
    %167 = math.exp %166 : vector<2x32xf32>
    %cst_42 = arith.constant 1.000000e+00 : f32
    %168 = vector.broadcast %cst_42 : f32 to vector<2x32xf32>
    %169 = arith.addf %168, %167 : vector<2x32xf32>
    %170 = arith.divf %168, %169 : vector<2x32xf32>
    %171 = arith.mulf %162, %140 : vector<2x32xf32>
    %172 = arith.mulf %156, %164 : vector<2x32xf32>
    %173 = arith.addf %171, %172 : vector<2x32xf32>
    %174 = math.tanh %173 : vector<2x32xf32>
    %175 = arith.mulf %170, %174 : vector<2x32xf32>
    %c0_43 = arith.constant 0 : index
    %c4 = arith.constant 4 : index
    %c0_44 = arith.constant 0 : index
    %176 = vector.load %arg17[%c0_43, %c4, %c0_44] : memref<2x8x32xf32, #tpu.memory_space<vmem>>, vector<2x1x32xf32>
    %177 = vector.shape_cast %176 : vector<2x1x32xf32> to vector<2x32xf32>
    %178 = vector.shape_cast %175 : vector<2x32xf32> to vector<2x1x32xf32>
    tpu.vector_store %arg17[%c0_43, %c4, %c0_44], %178 {strides = array<i32>} : memref<2x8x32xf32, #tpu.memory_space<vmem>>, vector<2x1x32xf32>,
    %179 = vector.extract_strided_slice %9 {offsets = [0, 5, 0], sizes = [2, 1, 128], strides = [1, 1, 1]} : vector<2x8x128xf32> to vector<2x1x128xf32>
    %180 = vector.shape_cast %179 : vector<2x1x128xf32> to vector<2x128xf32>
    %181 = arith.truncf %175 : vector<2x32xf32> to vector<2x32xbf16>
    %cst_45 = arith.constant dense<0.000000e+00> : vector<2x128xf32>
    %182 = tpu.matmul %181, %3, %cst_45 {dimension_numbers = #tpu.dot_dimension_numbers<[1], [0], [0], [1], [0, 0, 1, 1], [], []>} : vector<2x32xbf16>, vector<32x128xbf16>, vector<2x128xf32> -> vector<2x128xf32>
    %183 = arith.addf %180, %182 : vector<2x128xf32>
    %184 = vector.extract_strided_slice %183 {offsets = [0, 0], sizes = [2, 32], strides = [1, 1]} : vector<2x128xf32> to vector<2x32xf32>
    %185 = arith.negf %184 : vector<2x32xf32>
    %186 = math.exp %185 : vector<2x32xf32>
    %cst_46 = arith.constant 1.000000e+00 : f32
    %187 = vector.broadcast %cst_46 : f32 to vector<2x32xf32>
    %188 = arith.addf %187, %186 : vector<2x32xf32>
    %189 = arith.divf %187, %188 : vector<2x32xf32>
    %190 = vector.extract_strided_slice %183 {offsets = [0, 32], sizes = [2, 32], strides = [1, 1]} : vector<2x128xf32> to vector<2x32xf32>
    %191 = arith.negf %190 : vector<2x32xf32>
    %192 = math.exp %191 : vector<2x32xf32>
    %cst_47 = arith.constant 1.000000e+00 : f32
    %193 = vector.broadcast %cst_47 : f32 to vector<2x32xf32>
    %194 = arith.addf %193, %192 : vector<2x32xf32>
    %195 = arith.divf %193, %194 : vector<2x32xf32>
    %196 = vector.extract_strided_slice %183 {offsets = [0, 64], sizes = [2, 32], strides = [1, 1]} : vector<2x128xf32> to vector<2x32xf32>
    %197 = math.tanh %196 : vector<2x32xf32>
    %198 = vector.extract_strided_slice %183 {offsets = [0, 96], sizes = [2, 32], strides = [1, 1]} : vector<2x128xf32> to vector<2x32xf32>
    %199 = arith.negf %198 : vector<2x32xf32>
    %200 = math.exp %199 : vector<2x32xf32>
    %cst_48 = arith.constant 1.000000e+00 : f32
    %201 = vector.broadcast %cst_48 : f32 to vector<2x32xf32>
    %202 = arith.addf %201, %200 : vector<2x32xf32>
    %203 = arith.divf %201, %202 : vector<2x32xf32>
    %204 = arith.mulf %195, %173 : vector<2x32xf32>
    %205 = arith.mulf %189, %197 : vector<2x32xf32>
    %206 = arith.addf %204, %205 : vector<2x32xf32>
    %207 = math.tanh %206 : vector<2x32xf32>
    %208 = arith.mulf %203, %207 : vector<2x32xf32>
    %c0_49 = arith.constant 0 : index
    %c5 = arith.constant 5 : index
    %c0_50 = arith.constant 0 : index
    %209 = vector.load %arg17[%c0_49, %c5, %c0_50] : memref<2x8x32xf32, #tpu.memory_space<vmem>>, vector<2x1x32xf32>
    %210 = vector.shape_cast %209 : vector<2x1x32xf32> to vector<2x32xf32>
    %211 = vector.shape_cast %208 : vector<2x32xf32> to vector<2x1x32xf32>
    tpu.vector_store %arg17[%c0_49, %c5, %c0_50], %211 {strides = array<i32>} : memref<2x8x32xf32, #tpu.memory_space<vmem>>, vector<2x1x32xf32>,
    %212 = vector.extract_strided_slice %9 {offsets = [0, 6, 0], sizes = [2, 1, 128], strides = [1, 1, 1]} : vector<2x8x128xf32> to vector<2x1x128xf32>
    %213 = vector.shape_cast %212 : vector<2x1x128xf32> to vector<2x128xf32>
    %214 = arith.truncf %208 : vector<2x32xf32> to vector<2x32xbf16>
    %cst_51 = arith.constant dense<0.000000e+00> : vector<2x128xf32>
    %215 = tpu.matmul %214, %3, %cst_51 {dimension_numbers = #tpu.dot_dimension_numbers<[1], [0], [0], [1], [0, 0, 1, 1], [], []>} : vector<2x32xbf16>, vector<32x128xbf16>, vector<2x128xf32> -> vector<2x128xf32>
    %216 = arith.addf %213, %215 : vector<2x128xf32>
    %217 = vector.extract_strided_slice %216 {offsets = [0, 0], sizes = [2, 32], strides = [1, 1]} : vector<2x128xf32> to vector<2x32xf32>
    %218 = arith.negf %217 : vector<2x32xf32>
    %219 = math.exp %218 : vector<2x32xf32>
    %cst_52 = arith.constant 1.000000e+00 : f32
    %220 = vector.broadcast %cst_52 : f32 to vector<2x32xf32>
    %221 = arith.addf %220, %219 : vector<2x32xf32>
    %222 = arith.divf %220, %221 : vector<2x32xf32>
    %223 = vector.extract_strided_slice %216 {offsets = [0, 32], sizes = [2, 32], strides = [1, 1]} : vector<2x128xf32> to vector<2x32xf32>
    %224 = arith.negf %223 : vector<2x32xf32>
    %225 = math.exp %224 : vector<2x32xf32>
    %cst_53 = arith.constant 1.000000e+00 : f32
    %226 = vector.broadcast %cst_53 : f32 to vector<2x32xf32>
    %227 = arith.addf %226, %225 : vector<2x32xf32>
    %228 = arith.divf %226, %227 : vector<2x32xf32>
    %229 = vector.extract_strided_slice %216 {offsets = [0, 64], sizes = [2, 32], strides = [1, 1]} : vector<2x128xf32> to vector<2x32xf32>
    %230 = math.tanh %229 : vector<2x32xf32>
    %231 = vector.extract_strided_slice %216 {offsets = [0, 96], sizes = [2, 32], strides = [1, 1]} : vector<2x128xf32> to vector<2x32xf32>
    %232 = arith.negf %231 : vector<2x32xf32>
    %233 = math.exp %232 : vector<2x32xf32>
    %cst_54 = arith.constant 1.000000e+00 : f32
    %234 = vector.broadcast %cst_54 : f32 to vector<2x32xf32>
    %235 = arith.addf %234, %233 : vector<2x32xf32>
    %236 = arith.divf %234, %235 : vector<2x32xf32>
    %237 = arith.mulf %228, %206 : vector<2x32xf32>
    %238 = arith.mulf %222, %230 : vector<2x32xf32>
    %239 = arith.addf %237, %238 : vector<2x32xf32>
    %240 = math.tanh %239 : vector<2x32xf32>
    %241 = arith.mulf %236, %240 : vector<2x32xf32>
    %c0_55 = arith.constant 0 : index
    %c6 = arith.constant 6 : index
    %c0_56 = arith.constant 0 : index
    %242 = vector.load %arg17[%c0_55, %c6, %c0_56] : memref<2x8x32xf32, #tpu.memory_space<vmem>>, vector<2x1x32xf32>
    %243 = vector.shape_cast %242 : vector<2x1x32xf32> to vector<2x32xf32>
    %244 = vector.shape_cast %241 : vector<2x32xf32> to vector<2x1x32xf32>
    tpu.vector_store %arg17[%c0_55, %c6, %c0_56], %244 {strides = array<i32>} : memref<2x8x32xf32, #tpu.memory_space<vmem>>, vector<2x1x32xf32>,
    %245 = vector.extract_strided_slice %9 {offsets = [0, 7, 0], sizes = [2, 1, 128], strides = [1, 1, 1]} : vector<2x8x128xf32> to vector<2x1x128xf32>
    %246 = vector.shape_cast %245 : vector<2x1x128xf32> to vector<2x128xf32>
    %247 = arith.truncf %241 : vector<2x32xf32> to vector<2x32xbf16>
    %cst_57 = arith.constant dense<0.000000e+00> : vector<2x128xf32>
    %248 = tpu.matmul %247, %3, %cst_57 {dimension_numbers = #tpu.dot_dimension_numbers<[1], [0], [0], [1], [0, 0, 1, 1], [], []>} : vector<2x32xbf16>, vector<32x128xbf16>, vector<2x128xf32> -> vector<2x128xf32>
    %249 = arith.addf %246, %248 : vector<2x128xf32>
    %250 = vector.extract_strided_slice %249 {offsets = [0, 0], sizes = [2, 32], strides = [1, 1]} : vector<2x128xf32> to vector<2x32xf32>
    %251 = arith.negf %250 : vector<2x32xf32>
    %252 = math.exp %251 : vector<2x32xf32>
    %cst_58 = arith.constant 1.000000e+00 : f32
    %253 = vector.broadcast %cst_58 : f32 to vector<2x32xf32>
    %254 = arith.addf %253, %252 : vector<2x32xf32>
    %255 = arith.divf %253, %254 : vector<2x32xf32>
    %256 = vector.extract_strided_slice %249 {offsets = [0, 32], sizes = [2, 32], strides = [1, 1]} : vector<2x128xf32> to vector<2x32xf32>
    %257 = arith.negf %256 : vector<2x32xf32>
    %258 = math.exp %257 : vector<2x32xf32>
    %cst_59 = arith.constant 1.000000e+00 : f32
    %259 = vector.broadcast %cst_59 : f32 to vector<2x32xf32>
    %260 = arith.addf %259, %258 : vector<2x32xf32>
    %261 = arith.divf %259, %260 : vector<2x32xf32>
    %262 = vector.extract_strided_slice %249 {offsets = [0, 64], sizes = [2, 32], strides = [1, 1]} : vector<2x128xf32> to vector<2x32xf32>
    %263 = math.tanh %262 : vector<2x32xf32>
    %264 = vector.extract_strided_slice %249 {offsets = [0, 96], sizes = [2, 32], strides = [1, 1]} : vector<2x128xf32> to vector<2x32xf32>
    %265 = arith.negf %264 : vector<2x32xf32>
    %266 = math.exp %265 : vector<2x32xf32>
    %cst_60 = arith.constant 1.000000e+00 : f32
    %267 = vector.broadcast %cst_60 : f32 to vector<2x32xf32>
    %268 = arith.addf %267, %266 : vector<2x32xf32>
    %269 = arith.divf %267, %268 : vector<2x32xf32>
    %270 = arith.mulf %261, %239 : vector<2x32xf32>
    %271 = arith.mulf %255, %263 : vector<2x32xf32>
    %272 = arith.addf %270, %271 : vector<2x32xf32>
    %273 = math.tanh %272 : vector<2x32xf32>
    %274 = arith.mulf %269, %273 : vector<2x32xf32>
    %c0_61 = arith.constant 0 : index
    %c7 = arith.constant 7 : index
    %c0_62 = arith.constant 0 : index
    %275 = vector.load %arg17[%c0_61, %c7, %c0_62] : memref<2x8x32xf32, #tpu.memory_space<vmem>>, vector<2x1x32xf32>
    %276 = vector.shape_cast %275 : vector<2x1x32xf32> to vector<2x32xf32>
    %277 = vector.shape_cast %274 : vector<2x32xf32> to vector<2x1x32xf32>
    tpu.vector_store %arg17[%c0_61, %c7, %c0_62], %277 {strides = array<i32>} : memref<2x8x32xf32, #tpu.memory_space<vmem>>, vector<2x1x32xf32>,
    %c0_63 = arith.constant 0 : index
    %c0_64 = arith.constant 0 : index
    %c0_65 = arith.constant 0 : index
    %278 = vector.load %arg15[%c0_63, %c0_64, %c0_65] : memref<3x2x32xf32, #tpu.memory_space<vmem>>, vector<1x2x32xf32>
    %279 = vector.shape_cast %278 : vector<1x2x32xf32> to vector<2x32xf32>
    %280 = vector.shape_cast %274 : vector<2x32xf32> to vector<1x2x32xf32>
    tpu.vector_store %arg15[%c0_63, %c0_64, %c0_65], %280 {strides = array<i32>} : memref<3x2x32xf32, #tpu.memory_space<vmem>>, vector<1x2x32xf32>,
    %c0_66 = arith.constant 0 : index
    %c0_67 = arith.constant 0 : index
    %c0_68 = arith.constant 0 : index
    %281 = vector.load %arg16[%c0_66, %c0_67, %c0_68] : memref<3x2x32xf32, #tpu.memory_space<vmem>>, vector<1x2x32xf32>
    %282 = vector.shape_cast %281 : vector<1x2x32xf32> to vector<2x32xf32>
    %283 = vector.shape_cast %272 : vector<2x32xf32> to vector<1x2x32xf32>
    tpu.vector_store %arg16[%c0_66, %c0_67, %c0_68], %283 {strides = array<i32>} : memref<3x2x32xf32, #tpu.memory_space<vmem>>, vector<1x2x32xf32>,
    %c0_69 = arith.constant 0 : index
    %c0_70 = arith.constant 0 : index
    %c0_71 = arith.constant 0 : index
    %284 = vector.load %arg17[%c0_69, %c0_70, %c0_71] : memref<2x8x32xf32, #tpu.memory_space<vmem>>, vector<2x8x32xf32>
    %285 = vector.shape_cast %284 : vector<2x8x32xf32> to vector<16x32xf32>
    %c0_72 = arith.constant 0 : index
    %c0_73 = arith.constant 0 : index
    %286 = vector.load %arg6[%c0_72, %c0_73] : memref<32x128xbf16, #tpu.memory_space<vmem>>, vector<32x128xbf16>
    %c0_74 = arith.constant 0 : index
    %c0_75 = arith.constant 0 : index
    %287 = vector.load %arg7[%c0_74, %c0_75] : memref<32x128xbf16, #tpu.memory_space<vmem>>, vector<32x128xbf16>
    %c0_76 = arith.constant 0 : index
    %c0_77 = arith.constant 0 : index
    %288 = vector.load %arg8[%c0_76, %c0_77] : memref<1x128xf32, #tpu.memory_space<vmem>>, vector<1x128xf32>
    %289 = arith.truncf %285 : vector<16x32xf32> to vector<16x32xbf16>
    %cst_78 = arith.constant dense<0.000000e+00> : vector<16x128xf32>
    %290 = tpu.matmul %289, %286, %cst_78 {dimension_numbers = #tpu.dot_dimension_numbers<[1], [0], [0], [1], [0, 0, 1, 1], [], []>} : vector<16x32xbf16>, vector<32x128xbf16>, vector<16x128xf32> -> vector<16x128xf32>
    %291 = vector.broadcast %288 : vector<1x128xf32> to vector<16x128xf32>
    %292 = arith.addf %290, %291 : vector<16x128xf32>
    %293 = vector.shape_cast %292 : vector<16x128xf32> to vector<2x8x128xf32>
    %c1_79 = arith.constant 1 : index
    %c0_80 = arith.constant 0 : index
    %c0_81 = arith.constant 0 : index
    %294 = vector.load %arg1[%c1_79, %c0_80, %c0_81] : memref<3x2x32xf32, #tpu.memory_space<vmem>>, vector<1x2x32xf32>
    %295 = vector.shape_cast %294 : vector<1x2x32xf32> to vector<2x32xf32>
    %c1_82 = arith.constant 1 : index
    %c0_83 = arith.constant 0 : index
    %c0_84 = arith.constant 0 : index
    %296 = vector.load %arg2[%c1_82, %c0_83, %c0_84] : memref<3x2x32xf32, #tpu.memory_space<vmem>>, vector<1x2x32xf32>
    %297 = vector.shape_cast %296 : vector<1x2x32xf32> to vector<2x32xf32>
    %298 = vector.extract_strided_slice %293 {offsets = [0, 0, 0], sizes = [2, 1, 128], strides = [1, 1, 1]} : vector<2x8x128xf32> to vector<2x1x128xf32>
    %299 = vector.shape_cast %298 : vector<2x1x128xf32> to vector<2x128xf32>
    %300 = arith.truncf %295 : vector<2x32xf32> to vector<2x32xbf16>
    %cst_85 = arith.constant dense<0.000000e+00> : vector<2x128xf32>
    %301 = tpu.matmul %300, %287, %cst_85 {dimension_numbers = #tpu.dot_dimension_numbers<[1], [0], [0], [1], [0, 0, 1, 1], [], []>} : vector<2x32xbf16>, vector<32x128xbf16>, vector<2x128xf32> -> vector<2x128xf32>
    %302 = arith.addf %299, %301 : vector<2x128xf32>
    %303 = vector.extract_strided_slice %302 {offsets = [0, 0], sizes = [2, 32], strides = [1, 1]} : vector<2x128xf32> to vector<2x32xf32>
    %304 = arith.negf %303 : vector<2x32xf32>
    %305 = math.exp %304 : vector<2x32xf32>
    %cst_86 = arith.constant 1.000000e+00 : f32
    %306 = vector.broadcast %cst_86 : f32 to vector<2x32xf32>
    %307 = arith.addf %306, %305 : vector<2x32xf32>
    %308 = arith.divf %306, %307 : vector<2x32xf32>
    %309 = vector.extract_strided_slice %302 {offsets = [0, 32], sizes = [2, 32], strides = [1, 1]} : vector<2x128xf32> to vector<2x32xf32>
    %310 = arith.negf %309 : vector<2x32xf32>
    %311 = math.exp %310 : vector<2x32xf32>
    %cst_87 = arith.constant 1.000000e+00 : f32
    %312 = vector.broadcast %cst_87 : f32 to vector<2x32xf32>
    %313 = arith.addf %312, %311 : vector<2x32xf32>
    %314 = arith.divf %312, %313 : vector<2x32xf32>
    %315 = vector.extract_strided_slice %302 {offsets = [0, 64], sizes = [2, 32], strides = [1, 1]} : vector<2x128xf32> to vector<2x32xf32>
    %316 = math.tanh %315 : vector<2x32xf32>
    %317 = vector.extract_strided_slice %302 {offsets = [0, 96], sizes = [2, 32], strides = [1, 1]} : vector<2x128xf32> to vector<2x32xf32>
    %318 = arith.negf %317 : vector<2x32xf32>
    %319 = math.exp %318 : vector<2x32xf32>
    %cst_88 = arith.constant 1.000000e+00 : f32
    %320 = vector.broadcast %cst_88 : f32 to vector<2x32xf32>
    %321 = arith.addf %320, %319 : vector<2x32xf32>
    %322 = arith.divf %320, %321 : vector<2x32xf32>
    %323 = arith.mulf %314, %297 : vector<2x32xf32>
    %324 = arith.mulf %308, %316 : vector<2x32xf32>
    %325 = arith.addf %323, %324 : vector<2x32xf32>
    %326 = math.tanh %325 : vector<2x32xf32>
    %327 = arith.mulf %322, %326 : vector<2x32xf32>
    %c0_89 = arith.constant 0 : index
    %c0_90 = arith.constant 0 : index
    %c0_91 = arith.constant 0 : index
    %328 = vector.load %arg17[%c0_89, %c0_90, %c0_91] : memref<2x8x32xf32, #tpu.memory_space<vmem>>, vector<2x1x32xf32>
    %329 = vector.shape_cast %328 : vector<2x1x32xf32> to vector<2x32xf32>
    %330 = vector.shape_cast %327 : vector<2x32xf32> to vector<2x1x32xf32>
    tpu.vector_store %arg17[%c0_89, %c0_90, %c0_91], %330 {strides = array<i32>} : memref<2x8x32xf32, #tpu.memory_space<vmem>>, vector<2x1x32xf32>,
    %331 = vector.extract_strided_slice %293 {offsets = [0, 1, 0], sizes = [2, 1, 128], strides = [1, 1, 1]} : vector<2x8x128xf32> to vector<2x1x128xf32>
    %332 = vector.shape_cast %331 : vector<2x1x128xf32> to vector<2x128xf32>
    %333 = arith.truncf %327 : vector<2x32xf32> to vector<2x32xbf16>
    %cst_92 = arith.constant dense<0.000000e+00> : vector<2x128xf32>
    %334 = tpu.matmul %333, %287, %cst_92 {dimension_numbers = #tpu.dot_dimension_numbers<[1], [0], [0], [1], [0, 0, 1, 1], [], []>} : vector<2x32xbf16>, vector<32x128xbf16>, vector<2x128xf32> -> vector<2x128xf32>
    %335 = arith.addf %332, %334 : vector<2x128xf32>
    %336 = vector.extract_strided_slice %335 {offsets = [0, 0], sizes = [2, 32], strides = [1, 1]} : vector<2x128xf32> to vector<2x32xf32>
    %337 = arith.negf %336 : vector<2x32xf32>
    %338 = math.exp %337 : vector<2x32xf32>
    %cst_93 = arith.constant 1.000000e+00 : f32
    %339 = vector.broadcast %cst_93 : f32 to vector<2x32xf32>
    %340 = arith.addf %339, %338 : vector<2x32xf32>
    %341 = arith.divf %339, %340 : vector<2x32xf32>
    %342 = vector.extract_strided_slice %335 {offsets = [0, 32], sizes = [2, 32], strides = [1, 1]} : vector<2x128xf32> to vector<2x32xf32>
    %343 = arith.negf %342 : vector<2x32xf32>
    %344 = math.exp %343 : vector<2x32xf32>
    %cst_94 = arith.constant 1.000000e+00 : f32
    %345 = vector.broadcast %cst_94 : f32 to vector<2x32xf32>
    %346 = arith.addf %345, %344 : vector<2x32xf32>
    %347 = arith.divf %345, %346 : vector<2x32xf32>
    %348 = vector.extract_strided_slice %335 {offsets = [0, 64], sizes = [2, 32], strides = [1, 1]} : vector<2x128xf32> to vector<2x32xf32>
    %349 = math.tanh %348 : vector<2x32xf32>
    %350 = vector.extract_strided_slice %335 {offsets = [0, 96], sizes = [2, 32], strides = [1, 1]} : vector<2x128xf32> to vector<2x32xf32>
    %351 = arith.negf %350 : vector<2x32xf32>
    %352 = math.exp %351 : vector<2x32xf32>
    %cst_95 = arith.constant 1.000000e+00 : f32
    %353 = vector.broadcast %cst_95 : f32 to vector<2x32xf32>
    %354 = arith.addf %353, %352 : vector<2x32xf32>
    %355 = arith.divf %353, %354 : vector<2x32xf32>
    %356 = arith.mulf %347, %325 : vector<2x32xf32>
    %357 = arith.mulf %341, %349 : vector<2x32xf32>
    %358 = arith.addf %356, %357 : vector<2x32xf32>
    %359 = math.tanh %358 : vector<2x32xf32>
    %360 = arith.mulf %355, %359 : vector<2x32xf32>
    %c0_96 = arith.constant 0 : index
    %c1_97 = arith.constant 1 : index
    %c0_98 = arith.constant 0 : index
    %361 = vector.load %arg17[%c0_96, %c1_97, %c0_98] : memref<2x8x32xf32, #tpu.memory_space<vmem>>, vector<2x1x32xf32>
    %362 = vector.shape_cast %361 : vector<2x1x32xf32> to vector<2x32xf32>
    %363 = vector.shape_cast %360 : vector<2x32xf32> to vector<2x1x32xf32>
    tpu.vector_store %arg17[%c0_96, %c1_97, %c0_98], %363 {strides = array<i32>} : memref<2x8x32xf32, #tpu.memory_space<vmem>>, vector<2x1x32xf32>,
    %364 = vector.extract_strided_slice %293 {offsets = [0, 2, 0], sizes = [2, 1, 128], strides = [1, 1, 1]} : vector<2x8x128xf32> to vector<2x1x128xf32>
    %365 = vector.shape_cast %364 : vector<2x1x128xf32> to vector<2x128xf32>
    %366 = arith.truncf %360 : vector<2x32xf32> to vector<2x32xbf16>
    %cst_99 = arith.constant dense<0.000000e+00> : vector<2x128xf32>
    %367 = tpu.matmul %366, %287, %cst_99 {dimension_numbers = #tpu.dot_dimension_numbers<[1], [0], [0], [1], [0, 0, 1, 1], [], []>} : vector<2x32xbf16>, vector<32x128xbf16>, vector<2x128xf32> -> vector<2x128xf32>
    %368 = arith.addf %365, %367 : vector<2x128xf32>
    %369 = vector.extract_strided_slice %368 {offsets = [0, 0], sizes = [2, 32], strides = [1, 1]} : vector<2x128xf32> to vector<2x32xf32>
    %370 = arith.negf %369 : vector<2x32xf32>
    %371 = math.exp %370 : vector<2x32xf32>
    %cst_100 = arith.constant 1.000000e+00 : f32
    %372 = vector.broadcast %cst_100 : f32 to vector<2x32xf32>
    %373 = arith.addf %372, %371 : vector<2x32xf32>
    %374 = arith.divf %372, %373 : vector<2x32xf32>
    %375 = vector.extract_strided_slice %368 {offsets = [0, 32], sizes = [2, 32], strides = [1, 1]} : vector<2x128xf32> to vector<2x32xf32>
    %376 = arith.negf %375 : vector<2x32xf32>
    %377 = math.exp %376 : vector<2x32xf32>
    %cst_101 = arith.constant 1.000000e+00 : f32
    %378 = vector.broadcast %cst_101 : f32 to vector<2x32xf32>
    %379 = arith.addf %378, %377 : vector<2x32xf32>
    %380 = arith.divf %378, %379 : vector<2x32xf32>
    %381 = vector.extract_strided_slice %368 {offsets = [0, 64], sizes = [2, 32], strides = [1, 1]} : vector<2x128xf32> to vector<2x32xf32>
    %382 = math.tanh %381 : vector<2x32xf32>
    %383 = vector.extract_strided_slice %368 {offsets = [0, 96], sizes = [2, 32], strides = [1, 1]} : vector<2x128xf32> to vector<2x32xf32>
    %384 = arith.negf %383 : vector<2x32xf32>
    %385 = math.exp %384 : vector<2x32xf32>
    %cst_102 = arith.constant 1.000000e+00 : f32
    %386 = vector.broadcast %cst_102 : f32 to vector<2x32xf32>
    %387 = arith.addf %386, %385 : vector<2x32xf32>
    %388 = arith.divf %386, %387 : vector<2x32xf32>
    %389 = arith.mulf %380, %358 : vector<2x32xf32>
    %390 = arith.mulf %374, %382 : vector<2x32xf32>
    %391 = arith.addf %389, %390 : vector<2x32xf32>
    %392 = math.tanh %391 : vector<2x32xf32>
    %393 = arith.mulf %388, %392 : vector<2x32xf32>
    %c0_103 = arith.constant 0 : index
    %c2_104 = arith.constant 2 : index
    %c0_105 = arith.constant 0 : index
    %394 = vector.load %arg17[%c0_103, %c2_104, %c0_105] : memref<2x8x32xf32, #tpu.memory_space<vmem>>, vector<2x1x32xf32>
    %395 = vector.shape_cast %394 : vector<2x1x32xf32> to vector<2x32xf32>
    %396 = vector.shape_cast %393 : vector<2x32xf32> to vector<2x1x32xf32>
    tpu.vector_store %arg17[%c0_103, %c2_104, %c0_105], %396 {strides = array<i32>} : memref<2x8x32xf32, #tpu.memory_space<vmem>>, vector<2x1x32xf32>,
    %397 = vector.extract_strided_slice %293 {offsets = [0, 3, 0], sizes = [2, 1, 128], strides = [1, 1, 1]} : vector<2x8x128xf32> to vector<2x1x128xf32>
    %398 = vector.shape_cast %397 : vector<2x1x128xf32> to vector<2x128xf32>
    %399 = arith.truncf %393 : vector<2x32xf32> to vector<2x32xbf16>
    %cst_106 = arith.constant dense<0.000000e+00> : vector<2x128xf32>
    %400 = tpu.matmul %399, %287, %cst_106 {dimension_numbers = #tpu.dot_dimension_numbers<[1], [0], [0], [1], [0, 0, 1, 1], [], []>} : vector<2x32xbf16>, vector<32x128xbf16>, vector<2x128xf32> -> vector<2x128xf32>
    %401 = arith.addf %398, %400 : vector<2x128xf32>
    %402 = vector.extract_strided_slice %401 {offsets = [0, 0], sizes = [2, 32], strides = [1, 1]} : vector<2x128xf32> to vector<2x32xf32>
    %403 = arith.negf %402 : vector<2x32xf32>
    %404 = math.exp %403 : vector<2x32xf32>
    %cst_107 = arith.constant 1.000000e+00 : f32
    %405 = vector.broadcast %cst_107 : f32 to vector<2x32xf32>
    %406 = arith.addf %405, %404 : vector<2x32xf32>
    %407 = arith.divf %405, %406 : vector<2x32xf32>
    %408 = vector.extract_strided_slice %401 {offsets = [0, 32], sizes = [2, 32], strides = [1, 1]} : vector<2x128xf32> to vector<2x32xf32>
    %409 = arith.negf %408 : vector<2x32xf32>
    %410 = math.exp %409 : vector<2x32xf32>
    %cst_108 = arith.constant 1.000000e+00 : f32
    %411 = vector.broadcast %cst_108 : f32 to vector<2x32xf32>
    %412 = arith.addf %411, %410 : vector<2x32xf32>
    %413 = arith.divf %411, %412 : vector<2x32xf32>
    %414 = vector.extract_strided_slice %401 {offsets = [0, 64], sizes = [2, 32], strides = [1, 1]} : vector<2x128xf32> to vector<2x32xf32>
    %415 = math.tanh %414 : vector<2x32xf32>
    %416 = vector.extract_strided_slice %401 {offsets = [0, 96], sizes = [2, 32], strides = [1, 1]} : vector<2x128xf32> to vector<2x32xf32>
    %417 = arith.negf %416 : vector<2x32xf32>
    %418 = math.exp %417 : vector<2x32xf32>
    %cst_109 = arith.constant 1.000000e+00 : f32
    %419 = vector.broadcast %cst_109 : f32 to vector<2x32xf32>
    %420 = arith.addf %419, %418 : vector<2x32xf32>
    %421 = arith.divf %419, %420 : vector<2x32xf32>
    %422 = arith.mulf %413, %391 : vector<2x32xf32>
    %423 = arith.mulf %407, %415 : vector<2x32xf32>
    %424 = arith.addf %422, %423 : vector<2x32xf32>
    %425 = math.tanh %424 : vector<2x32xf32>
    %426 = arith.mulf %421, %425 : vector<2x32xf32>
    %c0_110 = arith.constant 0 : index
    %c3_111 = arith.constant 3 : index
    %c0_112 = arith.constant 0 : index
    %427 = vector.load %arg17[%c0_110, %c3_111, %c0_112] : memref<2x8x32xf32, #tpu.memory_space<vmem>>, vector<2x1x32xf32>
    %428 = vector.shape_cast %427 : vector<2x1x32xf32> to vector<2x32xf32>
    %429 = vector.shape_cast %426 : vector<2x32xf32> to vector<2x1x32xf32>
    tpu.vector_store %arg17[%c0_110, %c3_111, %c0_112], %429 {strides = array<i32>} : memref<2x8x32xf32, #tpu.memory_space<vmem>>, vector<2x1x32xf32>,
    %430 = vector.extract_strided_slice %293 {offsets = [0, 4, 0], sizes = [2, 1, 128], strides = [1, 1, 1]} : vector<2x8x128xf32> to vector<2x1x128xf32>
    %431 = vector.shape_cast %430 : vector<2x1x128xf32> to vector<2x128xf32>
    %432 = arith.truncf %426 : vector<2x32xf32> to vector<2x32xbf16>
    %cst_113 = arith.constant dense<0.000000e+00> : vector<2x128xf32>
    %433 = tpu.matmul %432, %287, %cst_113 {dimension_numbers = #tpu.dot_dimension_numbers<[1], [0], [0], [1], [0, 0, 1, 1], [], []>} : vector<2x32xbf16>, vector<32x128xbf16>, vector<2x128xf32> -> vector<2x128xf32>
    %434 = arith.addf %431, %433 : vector<2x128xf32>
    %435 = vector.extract_strided_slice %434 {offsets = [0, 0], sizes = [2, 32], strides = [1, 1]} : vector<2x128xf32> to vector<2x32xf32>
    %436 = arith.negf %435 : vector<2x32xf32>
    %437 = math.exp %436 : vector<2x32xf32>
    %cst_114 = arith.constant 1.000000e+00 : f32
    %438 = vector.broadcast %cst_114 : f32 to vector<2x32xf32>
    %439 = arith.addf %438, %437 : vector<2x32xf32>
    %440 = arith.divf %438, %439 : vector<2x32xf32>
    %441 = vector.extract_strided_slice %434 {offsets = [0, 32], sizes = [2, 32], strides = [1, 1]} : vector<2x128xf32> to vector<2x32xf32>
    %442 = arith.negf %441 : vector<2x32xf32>
    %443 = math.exp %442 : vector<2x32xf32>
    %cst_115 = arith.constant 1.000000e+00 : f32
    %444 = vector.broadcast %cst_115 : f32 to vector<2x32xf32>
    %445 = arith.addf %444, %443 : vector<2x32xf32>
    %446 = arith.divf %444, %445 : vector<2x32xf32>
    %447 = vector.extract_strided_slice %434 {offsets = [0, 64], sizes = [2, 32], strides = [1, 1]} : vector<2x128xf32> to vector<2x32xf32>
    %448 = math.tanh %447 : vector<2x32xf32>
    %449 = vector.extract_strided_slice %434 {offsets = [0, 96], sizes = [2, 32], strides = [1, 1]} : vector<2x128xf32> to vector<2x32xf32>
    %450 = arith.negf %449 : vector<2x32xf32>
    %451 = math.exp %450 : vector<2x32xf32>
    %cst_116 = arith.constant 1.000000e+00 : f32
    %452 = vector.broadcast %cst_116 : f32 to vector<2x32xf32>
    %453 = arith.addf %452, %451 : vector<2x32xf32>
    %454 = arith.divf %452, %453 : vector<2x32xf32>
    %455 = arith.mulf %446, %424 : vector<2x32xf32>
    %456 = arith.mulf %440, %448 : vector<2x32xf32>
    %457 = arith.addf %455, %456 : vector<2x32xf32>
    %458 = math.tanh %457 : vector<2x32xf32>
    %459 = arith.mulf %454, %458 : vector<2x32xf32>
    %c0_117 = arith.constant 0 : index
    %c4_118 = arith.constant 4 : index
    %c0_119 = arith.constant 0 : index
    %460 = vector.load %arg17[%c0_117, %c4_118, %c0_119] : memref<2x8x32xf32, #tpu.memory_space<vmem>>, vector<2x1x32xf32>
    %461 = vector.shape_cast %460 : vector<2x1x32xf32> to vector<2x32xf32>
    %462 = vector.shape_cast %459 : vector<2x32xf32> to vector<2x1x32xf32>
    tpu.vector_store %arg17[%c0_117, %c4_118, %c0_119], %462 {strides = array<i32>} : memref<2x8x32xf32, #tpu.memory_space<vmem>>, vector<2x1x32xf32>,
    %463 = vector.extract_strided_slice %293 {offsets = [0, 5, 0], sizes = [2, 1, 128], strides = [1, 1, 1]} : vector<2x8x128xf32> to vector<2x1x128xf32>
    %464 = vector.shape_cast %463 : vector<2x1x128xf32> to vector<2x128xf32>
    %465 = arith.truncf %459 : vector<2x32xf32> to vector<2x32xbf16>
    %cst_120 = arith.constant dense<0.000000e+00> : vector<2x128xf32>
    %466 = tpu.matmul %465, %287, %cst_120 {dimension_numbers = #tpu.dot_dimension_numbers<[1], [0], [0], [1], [0, 0, 1, 1], [], []>} : vector<2x32xbf16>, vector<32x128xbf16>, vector<2x128xf32> -> vector<2x128xf32>
    %467 = arith.addf %464, %466 : vector<2x128xf32>
    %468 = vector.extract_strided_slice %467 {offsets = [0, 0], sizes = [2, 32], strides = [1, 1]} : vector<2x128xf32> to vector<2x32xf32>
    %469 = arith.negf %468 : vector<2x32xf32>
    %470 = math.exp %469 : vector<2x32xf32>
    %cst_121 = arith.constant 1.000000e+00 : f32
    %471 = vector.broadcast %cst_121 : f32 to vector<2x32xf32>
    %472 = arith.addf %471, %470 : vector<2x32xf32>
    %473 = arith.divf %471, %472 : vector<2x32xf32>
    %474 = vector.extract_strided_slice %467 {offsets = [0, 32], sizes = [2, 32], strides = [1, 1]} : vector<2x128xf32> to vector<2x32xf32>
    %475 = arith.negf %474 : vector<2x32xf32>
    %476 = math.exp %475 : vector<2x32xf32>
    %cst_122 = arith.constant 1.000000e+00 : f32
    %477 = vector.broadcast %cst_122 : f32 to vector<2x32xf32>
    %478 = arith.addf %477, %476 : vector<2x32xf32>
    %479 = arith.divf %477, %478 : vector<2x32xf32>
    %480 = vector.extract_strided_slice %467 {offsets = [0, 64], sizes = [2, 32], strides = [1, 1]} : vector<2x128xf32> to vector<2x32xf32>
    %481 = math.tanh %480 : vector<2x32xf32>
    %482 = vector.extract_strided_slice %467 {offsets = [0, 96], sizes = [2, 32], strides = [1, 1]} : vector<2x128xf32> to vector<2x32xf32>
    %483 = arith.negf %482 : vector<2x32xf32>
    %484 = math.exp %483 : vector<2x32xf32>
    %cst_123 = arith.constant 1.000000e+00 : f32
    %485 = vector.broadcast %cst_123 : f32 to vector<2x32xf32>
    %486 = arith.addf %485, %484 : vector<2x32xf32>
    %487 = arith.divf %485, %486 : vector<2x32xf32>
    %488 = arith.mulf %479, %457 : vector<2x32xf32>
    %489 = arith.mulf %473, %481 : vector<2x32xf32>
    %490 = arith.addf %488, %489 : vector<2x32xf32>
    %491 = math.tanh %490 : vector<2x32xf32>
    %492 = arith.mulf %487, %491 : vector<2x32xf32>
    %c0_124 = arith.constant 0 : index
    %c5_125 = arith.constant 5 : index
    %c0_126 = arith.constant 0 : index
    %493 = vector.load %arg17[%c0_124, %c5_125, %c0_126] : memref<2x8x32xf32, #tpu.memory_space<vmem>>, vector<2x1x32xf32>
    %494 = vector.shape_cast %493 : vector<2x1x32xf32> to vector<2x32xf32>
    %495 = vector.shape_cast %492 : vector<2x32xf32> to vector<2x1x32xf32>
    tpu.vector_store %arg17[%c0_124, %c5_125, %c0_126], %495 {strides = array<i32>} : memref<2x8x32xf32, #tpu.memory_space<vmem>>, vector<2x1x32xf32>,
    %496 = vector.extract_strided_slice %293 {offsets = [0, 6, 0], sizes = [2, 1, 128], strides = [1, 1, 1]} : vector<2x8x128xf32> to vector<2x1x128xf32>
    %497 = vector.shape_cast %496 : vector<2x1x128xf32> to vector<2x128xf32>
    %498 = arith.truncf %492 : vector<2x32xf32> to vector<2x32xbf16>
    %cst_127 = arith.constant dense<0.000000e+00> : vector<2x128xf32>
    %499 = tpu.matmul %498, %287, %cst_127 {dimension_numbers = #tpu.dot_dimension_numbers<[1], [0], [0], [1], [0, 0, 1, 1], [], []>} : vector<2x32xbf16>, vector<32x128xbf16>, vector<2x128xf32> -> vector<2x128xf32>
    %500 = arith.addf %497, %499 : vector<2x128xf32>
    %501 = vector.extract_strided_slice %500 {offsets = [0, 0], sizes = [2, 32], strides = [1, 1]} : vector<2x128xf32> to vector<2x32xf32>
    %502 = arith.negf %501 : vector<2x32xf32>
    %503 = math.exp %502 : vector<2x32xf32>
    %cst_128 = arith.constant 1.000000e+00 : f32
    %504 = vector.broadcast %cst_128 : f32 to vector<2x32xf32>
    %505 = arith.addf %504, %503 : vector<2x32xf32>
    %506 = arith.divf %504, %505 : vector<2x32xf32>
    %507 = vector.extract_strided_slice %500 {offsets = [0, 32], sizes = [2, 32], strides = [1, 1]} : vector<2x128xf32> to vector<2x32xf32>
    %508 = arith.negf %507 : vector<2x32xf32>
    %509 = math.exp %508 : vector<2x32xf32>
    %cst_129 = arith.constant 1.000000e+00 : f32
    %510 = vector.broadcast %cst_129 : f32 to vector<2x32xf32>
    %511 = arith.addf %510, %509 : vector<2x32xf32>
    %512 = arith.divf %510, %511 : vector<2x32xf32>
    %513 = vector.extract_strided_slice %500 {offsets = [0, 64], sizes = [2, 32], strides = [1, 1]} : vector<2x128xf32> to vector<2x32xf32>
    %514 = math.tanh %513 : vector<2x32xf32>
    %515 = vector.extract_strided_slice %500 {offsets = [0, 96], sizes = [2, 32], strides = [1, 1]} : vector<2x128xf32> to vector<2x32xf32>
    %516 = arith.negf %515 : vector<2x32xf32>
    %517 = math.exp %516 : vector<2x32xf32>
    %cst_130 = arith.constant 1.000000e+00 : f32
    %518 = vector.broadcast %cst_130 : f32 to vector<2x32xf32>
    %519 = arith.addf %518, %517 : vector<2x32xf32>
    %520 = arith.divf %518, %519 : vector<2x32xf32>
    %521 = arith.mulf %512, %490 : vector<2x32xf32>
    %522 = arith.mulf %506, %514 : vector<2x32xf32>
    %523 = arith.addf %521, %522 : vector<2x32xf32>
    %524 = math.tanh %523 : vector<2x32xf32>
    %525 = arith.mulf %520, %524 : vector<2x32xf32>
    %c0_131 = arith.constant 0 : index
    %c6_132 = arith.constant 6 : index
    %c0_133 = arith.constant 0 : index
    %526 = vector.load %arg17[%c0_131, %c6_132, %c0_133] : memref<2x8x32xf32, #tpu.memory_space<vmem>>, vector<2x1x32xf32>
    %527 = vector.shape_cast %526 : vector<2x1x32xf32> to vector<2x32xf32>
    %528 = vector.shape_cast %525 : vector<2x32xf32> to vector<2x1x32xf32>
    tpu.vector_store %arg17[%c0_131, %c6_132, %c0_133], %528 {strides = array<i32>} : memref<2x8x32xf32, #tpu.memory_space<vmem>>, vector<2x1x32xf32>,
    %529 = vector.extract_strided_slice %293 {offsets = [0, 7, 0], sizes = [2, 1, 128], strides = [1, 1, 1]} : vector<2x8x128xf32> to vector<2x1x128xf32>
    %530 = vector.shape_cast %529 : vector<2x1x128xf32> to vector<2x128xf32>
    %531 = arith.truncf %525 : vector<2x32xf32> to vector<2x32xbf16>
    %cst_134 = arith.constant dense<0.000000e+00> : vector<2x128xf32>
    %532 = tpu.matmul %531, %287, %cst_134 {dimension_numbers = #tpu.dot_dimension_numbers<[1], [0], [0], [1], [0, 0, 1, 1], [], []>} : vector<2x32xbf16>, vector<32x128xbf16>, vector<2x128xf32> -> vector<2x128xf32>
    %533 = arith.addf %530, %532 : vector<2x128xf32>
    %534 = vector.extract_strided_slice %533 {offsets = [0, 0], sizes = [2, 32], strides = [1, 1]} : vector<2x128xf32> to vector<2x32xf32>
    %535 = arith.negf %534 : vector<2x32xf32>
    %536 = math.exp %535 : vector<2x32xf32>
    %cst_135 = arith.constant 1.000000e+00 : f32
    %537 = vector.broadcast %cst_135 : f32 to vector<2x32xf32>
    %538 = arith.addf %537, %536 : vector<2x32xf32>
    %539 = arith.divf %537, %538 : vector<2x32xf32>
    %540 = vector.extract_strided_slice %533 {offsets = [0, 32], sizes = [2, 32], strides = [1, 1]} : vector<2x128xf32> to vector<2x32xf32>
    %541 = arith.negf %540 : vector<2x32xf32>
    %542 = math.exp %541 : vector<2x32xf32>
    %cst_136 = arith.constant 1.000000e+00 : f32
    %543 = vector.broadcast %cst_136 : f32 to vector<2x32xf32>
    %544 = arith.addf %543, %542 : vector<2x32xf32>
    %545 = arith.divf %543, %544 : vector<2x32xf32>
    %546 = vector.extract_strided_slice %533 {offsets = [0, 64], sizes = [2, 32], strides = [1, 1]} : vector<2x128xf32> to vector<2x32xf32>
    %547 = math.tanh %546 : vector<2x32xf32>
    %548 = vector.extract_strided_slice %533 {offsets = [0, 96], sizes = [2, 32], strides = [1, 1]} : vector<2x128xf32> to vector<2x32xf32>
    %549 = arith.negf %548 : vector<2x32xf32>
    %550 = math.exp %549 : vector<2x32xf32>
    %cst_137 = arith.constant 1.000000e+00 : f32
    %551 = vector.broadcast %cst_137 : f32 to vector<2x32xf32>
    %552 = arith.addf %551, %550 : vector<2x32xf32>
    %553 = arith.divf %551, %552 : vector<2x32xf32>
    %554 = arith.mulf %545, %523 : vector<2x32xf32>
    %555 = arith.mulf %539, %547 : vector<2x32xf32>
    %556 = arith.addf %554, %555 : vector<2x32xf32>
    %557 = math.tanh %556 : vector<2x32xf32>
    %558 = arith.mulf %553, %557 : vector<2x32xf32>
    %c0_138 = arith.constant 0 : index
    %c7_139 = arith.constant 7 : index
    %c0_140 = arith.constant 0 : index
    %559 = vector.load %arg17[%c0_138, %c7_139, %c0_140] : memref<2x8x32xf32, #tpu.memory_space<vmem>>, vector<2x1x32xf32>
    %560 = vector.shape_cast %559 : vector<2x1x32xf32> to vector<2x32xf32>
    %561 = vector.shape_cast %558 : vector<2x32xf32> to vector<2x1x32xf32>
    tpu.vector_store %arg17[%c0_138, %c7_139, %c0_140], %561 {strides = array<i32>} : memref<2x8x32xf32, #tpu.memory_space<vmem>>, vector<2x1x32xf32>,
    %c1_141 = arith.constant 1 : index
    %c0_142 = arith.constant 0 : index
    %c0_143 = arith.constant 0 : index
    %562 = vector.load %arg15[%c1_141, %c0_142, %c0_143] : memref<3x2x32xf32, #tpu.memory_space<vmem>>, vector<1x2x32xf32>
    %563 = vector.shape_cast %562 : vector<1x2x32xf32> to vector<2x32xf32>
    %564 = vector.shape_cast %558 : vector<2x32xf32> to vector<1x2x32xf32>
    tpu.vector_store %arg15[%c1_141, %c0_142, %c0_143], %564 {strides = array<i32>} : memref<3x2x32xf32, #tpu.memory_space<vmem>>, vector<1x2x32xf32>,
    %c1_144 = arith.constant 1 : index
    %c0_145 = arith.constant 0 : index
    %c0_146 = arith.constant 0 : index
    %565 = vector.load %arg16[%c1_144, %c0_145, %c0_146] : memref<3x2x32xf32, #tpu.memory_space<vmem>>, vector<1x2x32xf32>
    %566 = vector.shape_cast %565 : vector<1x2x32xf32> to vector<2x32xf32>
    %567 = vector.shape_cast %556 : vector<2x32xf32> to vector<1x2x32xf32>
    tpu.vector_store %arg16[%c1_144, %c0_145, %c0_146], %567 {strides = array<i32>} : memref<3x2x32xf32, #tpu.memory_space<vmem>>, vector<1x2x32xf32>,
    %c0_147 = arith.constant 0 : index
    %c0_148 = arith.constant 0 : index
    %c0_149 = arith.constant 0 : index
    %568 = vector.load %arg17[%c0_147, %c0_148, %c0_149] : memref<2x8x32xf32, #tpu.memory_space<vmem>>, vector<2x8x32xf32>
    %569 = vector.shape_cast %568 : vector<2x8x32xf32> to vector<16x32xf32>
    %c0_150 = arith.constant 0 : index
    %c0_151 = arith.constant 0 : index
    %570 = vector.load %arg9[%c0_150, %c0_151] : memref<32x128xbf16, #tpu.memory_space<vmem>>, vector<32x128xbf16>
    %c0_152 = arith.constant 0 : index
    %c0_153 = arith.constant 0 : index
    %571 = vector.load %arg10[%c0_152, %c0_153] : memref<32x128xbf16, #tpu.memory_space<vmem>>, vector<32x128xbf16>
    %c0_154 = arith.constant 0 : index
    %c0_155 = arith.constant 0 : index
    %572 = vector.load %arg11[%c0_154, %c0_155] : memref<1x128xf32, #tpu.memory_space<vmem>>, vector<1x128xf32>
    %573 = arith.truncf %569 : vector<16x32xf32> to vector<16x32xbf16>
    %cst_156 = arith.constant dense<0.000000e+00> : vector<16x128xf32>
    %574 = tpu.matmul %573, %570, %cst_156 {dimension_numbers = #tpu.dot_dimension_numbers<[1], [0], [0], [1], [0, 0, 1, 1], [], []>} : vector<16x32xbf16>, vector<32x128xbf16>, vector<16x128xf32> -> vector<16x128xf32>
    %575 = vector.broadcast %572 : vector<1x128xf32> to vector<16x128xf32>
    %576 = arith.addf %574, %575 : vector<16x128xf32>
    %577 = vector.shape_cast %576 : vector<16x128xf32> to vector<2x8x128xf32>
    %c2_157 = arith.constant 2 : index
    %c0_158 = arith.constant 0 : index
    %c0_159 = arith.constant 0 : index
    %578 = vector.load %arg1[%c2_157, %c0_158, %c0_159] : memref<3x2x32xf32, #tpu.memory_space<vmem>>, vector<1x2x32xf32>
    %579 = vector.shape_cast %578 : vector<1x2x32xf32> to vector<2x32xf32>
    %c2_160 = arith.constant 2 : index
    %c0_161 = arith.constant 0 : index
    %c0_162 = arith.constant 0 : index
    %580 = vector.load %arg2[%c2_160, %c0_161, %c0_162] : memref<3x2x32xf32, #tpu.memory_space<vmem>>, vector<1x2x32xf32>
    %581 = vector.shape_cast %580 : vector<1x2x32xf32> to vector<2x32xf32>
    %582 = vector.extract_strided_slice %577 {offsets = [0, 0, 0], sizes = [2, 1, 128], strides = [1, 1, 1]} : vector<2x8x128xf32> to vector<2x1x128xf32>
    %583 = vector.shape_cast %582 : vector<2x1x128xf32> to vector<2x128xf32>
    %584 = arith.truncf %579 : vector<2x32xf32> to vector<2x32xbf16>
    %cst_163 = arith.constant dense<0.000000e+00> : vector<2x128xf32>
    %585 = tpu.matmul %584, %571, %cst_163 {dimension_numbers = #tpu.dot_dimension_numbers<[1], [0], [0], [1], [0, 0, 1, 1], [], []>} : vector<2x32xbf16>, vector<32x128xbf16>, vector<2x128xf32> -> vector<2x128xf32>
    %586 = arith.addf %583, %585 : vector<2x128xf32>
    %587 = vector.extract_strided_slice %586 {offsets = [0, 0], sizes = [2, 32], strides = [1, 1]} : vector<2x128xf32> to vector<2x32xf32>
    %588 = arith.negf %587 : vector<2x32xf32>
    %589 = math.exp %588 : vector<2x32xf32>
    %cst_164 = arith.constant 1.000000e+00 : f32
    %590 = vector.broadcast %cst_164 : f32 to vector<2x32xf32>
    %591 = arith.addf %590, %589 : vector<2x32xf32>
    %592 = arith.divf %590, %591 : vector<2x32xf32>
    %593 = vector.extract_strided_slice %586 {offsets = [0, 32], sizes = [2, 32], strides = [1, 1]} : vector<2x128xf32> to vector<2x32xf32>
    %594 = arith.negf %593 : vector<2x32xf32>
    %595 = math.exp %594 : vector<2x32xf32>
    %cst_165 = arith.constant 1.000000e+00 : f32
    %596 = vector.broadcast %cst_165 : f32 to vector<2x32xf32>
    %597 = arith.addf %596, %595 : vector<2x32xf32>
    %598 = arith.divf %596, %597 : vector<2x32xf32>
    %599 = vector.extract_strided_slice %586 {offsets = [0, 64], sizes = [2, 32], strides = [1, 1]} : vector<2x128xf32> to vector<2x32xf32>
    %600 = math.tanh %599 : vector<2x32xf32>
    %601 = vector.extract_strided_slice %586 {offsets = [0, 96], sizes = [2, 32], strides = [1, 1]} : vector<2x128xf32> to vector<2x32xf32>
    %602 = arith.negf %601 : vector<2x32xf32>
    %603 = math.exp %602 : vector<2x32xf32>
    %cst_166 = arith.constant 1.000000e+00 : f32
    %604 = vector.broadcast %cst_166 : f32 to vector<2x32xf32>
    %605 = arith.addf %604, %603 : vector<2x32xf32>
    %606 = arith.divf %604, %605 : vector<2x32xf32>
    %607 = arith.mulf %598, %581 : vector<2x32xf32>
    %608 = arith.mulf %592, %600 : vector<2x32xf32>
    %609 = arith.addf %607, %608 : vector<2x32xf32>
    %610 = math.tanh %609 : vector<2x32xf32>
    %611 = arith.mulf %606, %610 : vector<2x32xf32>
    %c0_167 = arith.constant 0 : index
    %c0_168 = arith.constant 0 : index
    %c0_169 = arith.constant 0 : index
    %612 = vector.load %arg17[%c0_167, %c0_168, %c0_169] : memref<2x8x32xf32, #tpu.memory_space<vmem>>, vector<2x1x32xf32>
    %613 = vector.shape_cast %612 : vector<2x1x32xf32> to vector<2x32xf32>
    %614 = vector.shape_cast %611 : vector<2x32xf32> to vector<2x1x32xf32>
    tpu.vector_store %arg17[%c0_167, %c0_168, %c0_169], %614 {strides = array<i32>} : memref<2x8x32xf32, #tpu.memory_space<vmem>>, vector<2x1x32xf32>,
    %615 = vector.extract_strided_slice %577 {offsets = [0, 1, 0], sizes = [2, 1, 128], strides = [1, 1, 1]} : vector<2x8x128xf32> to vector<2x1x128xf32>
    %616 = vector.shape_cast %615 : vector<2x1x128xf32> to vector<2x128xf32>
    %617 = arith.truncf %611 : vector<2x32xf32> to vector<2x32xbf16>
    %cst_170 = arith.constant dense<0.000000e+00> : vector<2x128xf32>
    %618 = tpu.matmul %617, %571, %cst_170 {dimension_numbers = #tpu.dot_dimension_numbers<[1], [0], [0], [1], [0, 0, 1, 1], [], []>} : vector<2x32xbf16>, vector<32x128xbf16>, vector<2x128xf32> -> vector<2x128xf32>
    %619 = arith.addf %616, %618 : vector<2x128xf32>
    %620 = vector.extract_strided_slice %619 {offsets = [0, 0], sizes = [2, 32], strides = [1, 1]} : vector<2x128xf32> to vector<2x32xf32>
    %621 = arith.negf %620 : vector<2x32xf32>
    %622 = math.exp %621 : vector<2x32xf32>
    %cst_171 = arith.constant 1.000000e+00 : f32
    %623 = vector.broadcast %cst_171 : f32 to vector<2x32xf32>
    %624 = arith.addf %623, %622 : vector<2x32xf32>
    %625 = arith.divf %623, %624 : vector<2x32xf32>
    %626 = vector.extract_strided_slice %619 {offsets = [0, 32], sizes = [2, 32], strides = [1, 1]} : vector<2x128xf32> to vector<2x32xf32>
    %627 = arith.negf %626 : vector<2x32xf32>
    %628 = math.exp %627 : vector<2x32xf32>
    %cst_172 = arith.constant 1.000000e+00 : f32
    %629 = vector.broadcast %cst_172 : f32 to vector<2x32xf32>
    %630 = arith.addf %629, %628 : vector<2x32xf32>
    %631 = arith.divf %629, %630 : vector<2x32xf32>
    %632 = vector.extract_strided_slice %619 {offsets = [0, 64], sizes = [2, 32], strides = [1, 1]} : vector<2x128xf32> to vector<2x32xf32>
    %633 = math.tanh %632 : vector<2x32xf32>
    %634 = vector.extract_strided_slice %619 {offsets = [0, 96], sizes = [2, 32], strides = [1, 1]} : vector<2x128xf32> to vector<2x32xf32>
    %635 = arith.negf %634 : vector<2x32xf32>
    %636 = math.exp %635 : vector<2x32xf32>
    %cst_173 = arith.constant 1.000000e+00 : f32
    %637 = vector.broadcast %cst_173 : f32 to vector<2x32xf32>
    %638 = arith.addf %637, %636 : vector<2x32xf32>
    %639 = arith.divf %637, %638 : vector<2x32xf32>
    %640 = arith.mulf %631, %609 : vector<2x32xf32>
    %641 = arith.mulf %625, %633 : vector<2x32xf32>
    %642 = arith.addf %640, %641 : vector<2x32xf32>
    %643 = math.tanh %642 : vector<2x32xf32>
    %644 = arith.mulf %639, %643 : vector<2x32xf32>
    %c0_174 = arith.constant 0 : index
    %c1_175 = arith.constant 1 : index
    %c0_176 = arith.constant 0 : index
    %645 = vector.load %arg17[%c0_174, %c1_175, %c0_176] : memref<2x8x32xf32, #tpu.memory_space<vmem>>, vector<2x1x32xf32>
    %646 = vector.shape_cast %645 : vector<2x1x32xf32> to vector<2x32xf32>
    %647 = vector.shape_cast %644 : vector<2x32xf32> to vector<2x1x32xf32>
    tpu.vector_store %arg17[%c0_174, %c1_175, %c0_176], %647 {strides = array<i32>} : memref<2x8x32xf32, #tpu.memory_space<vmem>>, vector<2x1x32xf32>,
    %648 = vector.extract_strided_slice %577 {offsets = [0, 2, 0], sizes = [2, 1, 128], strides = [1, 1, 1]} : vector<2x8x128xf32> to vector<2x1x128xf32>
    %649 = vector.shape_cast %648 : vector<2x1x128xf32> to vector<2x128xf32>
    %650 = arith.truncf %644 : vector<2x32xf32> to vector<2x32xbf16>
    %cst_177 = arith.constant dense<0.000000e+00> : vector<2x128xf32>
    %651 = tpu.matmul %650, %571, %cst_177 {dimension_numbers = #tpu.dot_dimension_numbers<[1], [0], [0], [1], [0, 0, 1, 1], [], []>} : vector<2x32xbf16>, vector<32x128xbf16>, vector<2x128xf32> -> vector<2x128xf32>
    %652 = arith.addf %649, %651 : vector<2x128xf32>
    %653 = vector.extract_strided_slice %652 {offsets = [0, 0], sizes = [2, 32], strides = [1, 1]} : vector<2x128xf32> to vector<2x32xf32>
    %654 = arith.negf %653 : vector<2x32xf32>
    %655 = math.exp %654 : vector<2x32xf32>
    %cst_178 = arith.constant 1.000000e+00 : f32
    %656 = vector.broadcast %cst_178 : f32 to vector<2x32xf32>
    %657 = arith.addf %656, %655 : vector<2x32xf32>
    %658 = arith.divf %656, %657 : vector<2x32xf32>
    %659 = vector.extract_strided_slice %652 {offsets = [0, 32], sizes = [2, 32], strides = [1, 1]} : vector<2x128xf32> to vector<2x32xf32>
    %660 = arith.negf %659 : vector<2x32xf32>
    %661 = math.exp %660 : vector<2x32xf32>
    %cst_179 = arith.constant 1.000000e+00 : f32
    %662 = vector.broadcast %cst_179 : f32 to vector<2x32xf32>
    %663 = arith.addf %662, %661 : vector<2x32xf32>
    %664 = arith.divf %662, %663 : vector<2x32xf32>
    %665 = vector.extract_strided_slice %652 {offsets = [0, 64], sizes = [2, 32], strides = [1, 1]} : vector<2x128xf32> to vector<2x32xf32>
    %666 = math.tanh %665 : vector<2x32xf32>
    %667 = vector.extract_strided_slice %652 {offsets = [0, 96], sizes = [2, 32], strides = [1, 1]} : vector<2x128xf32> to vector<2x32xf32>
    %668 = arith.negf %667 : vector<2x32xf32>
    %669 = math.exp %668 : vector<2x32xf32>
    %cst_180 = arith.constant 1.000000e+00 : f32
    %670 = vector.broadcast %cst_180 : f32 to vector<2x32xf32>
    %671 = arith.addf %670, %669 : vector<2x32xf32>
    %672 = arith.divf %670, %671 : vector<2x32xf32>
    %673 = arith.mulf %664, %642 : vector<2x32xf32>
    %674 = arith.mulf %658, %666 : vector<2x32xf32>
    %675 = arith.addf %673, %674 : vector<2x32xf32>
    %676 = math.tanh %675 : vector<2x32xf32>
    %677 = arith.mulf %672, %676 : vector<2x32xf32>
    %c0_181 = arith.constant 0 : index
    %c2_182 = arith.constant 2 : index
    %c0_183 = arith.constant 0 : index
    %678 = vector.load %arg17[%c0_181, %c2_182, %c0_183] : memref<2x8x32xf32, #tpu.memory_space<vmem>>, vector<2x1x32xf32>
    %679 = vector.shape_cast %678 : vector<2x1x32xf32> to vector<2x32xf32>
    %680 = vector.shape_cast %677 : vector<2x32xf32> to vector<2x1x32xf32>
    tpu.vector_store %arg17[%c0_181, %c2_182, %c0_183], %680 {strides = array<i32>} : memref<2x8x32xf32, #tpu.memory_space<vmem>>, vector<2x1x32xf32>,
    %681 = vector.extract_strided_slice %577 {offsets = [0, 3, 0], sizes = [2, 1, 128], strides = [1, 1, 1]} : vector<2x8x128xf32> to vector<2x1x128xf32>
    %682 = vector.shape_cast %681 : vector<2x1x128xf32> to vector<2x128xf32>
    %683 = arith.truncf %677 : vector<2x32xf32> to vector<2x32xbf16>
    %cst_184 = arith.constant dense<0.000000e+00> : vector<2x128xf32>
    %684 = tpu.matmul %683, %571, %cst_184 {dimension_numbers = #tpu.dot_dimension_numbers<[1], [0], [0], [1], [0, 0, 1, 1], [], []>} : vector<2x32xbf16>, vector<32x128xbf16>, vector<2x128xf32> -> vector<2x128xf32>
    %685 = arith.addf %682, %684 : vector<2x128xf32>
    %686 = vector.extract_strided_slice %685 {offsets = [0, 0], sizes = [2, 32], strides = [1, 1]} : vector<2x128xf32> to vector<2x32xf32>
    %687 = arith.negf %686 : vector<2x32xf32>
    %688 = math.exp %687 : vector<2x32xf32>
    %cst_185 = arith.constant 1.000000e+00 : f32
    %689 = vector.broadcast %cst_185 : f32 to vector<2x32xf32>
    %690 = arith.addf %689, %688 : vector<2x32xf32>
    %691 = arith.divf %689, %690 : vector<2x32xf32>
    %692 = vector.extract_strided_slice %685 {offsets = [0, 32], sizes = [2, 32], strides = [1, 1]} : vector<2x128xf32> to vector<2x32xf32>
    %693 = arith.negf %692 : vector<2x32xf32>
    %694 = math.exp %693 : vector<2x32xf32>
    %cst_186 = arith.constant 1.000000e+00 : f32
    %695 = vector.broadcast %cst_186 : f32 to vector<2x32xf32>
    %696 = arith.addf %695, %694 : vector<2x32xf32>
    %697 = arith.divf %695, %696 : vector<2x32xf32>
    %698 = vector.extract_strided_slice %685 {offsets = [0, 64], sizes = [2, 32], strides = [1, 1]} : vector<2x128xf32> to vector<2x32xf32>
    %699 = math.tanh %698 : vector<2x32xf32>
    %700 = vector.extract_strided_slice %685 {offsets = [0, 96], sizes = [2, 32], strides = [1, 1]} : vector<2x128xf32> to vector<2x32xf32>
    %701 = arith.negf %700 : vector<2x32xf32>
    %702 = math.exp %701 : vector<2x32xf32>
    %cst_187 = arith.constant 1.000000e+00 : f32
    %703 = vector.broadcast %cst_187 : f32 to vector<2x32xf32>
    %704 = arith.addf %703, %702 : vector<2x32xf32>
    %705 = arith.divf %703, %704 : vector<2x32xf32>
    %706 = arith.mulf %697, %675 : vector<2x32xf32>
    %707 = arith.mulf %691, %699 : vector<2x32xf32>
    %708 = arith.addf %706, %707 : vector<2x32xf32>
    %709 = math.tanh %708 : vector<2x32xf32>
    %710 = arith.mulf %705, %709 : vector<2x32xf32>
    %c0_188 = arith.constant 0 : index
    %c3_189 = arith.constant 3 : index
    %c0_190 = arith.constant 0 : index
    %711 = vector.load %arg17[%c0_188, %c3_189, %c0_190] : memref<2x8x32xf32, #tpu.memory_space<vmem>>, vector<2x1x32xf32>
    %712 = vector.shape_cast %711 : vector<2x1x32xf32> to vector<2x32xf32>
    %713 = vector.shape_cast %710 : vector<2x32xf32> to vector<2x1x32xf32>
    tpu.vector_store %arg17[%c0_188, %c3_189, %c0_190], %713 {strides = array<i32>} : memref<2x8x32xf32, #tpu.memory_space<vmem>>, vector<2x1x32xf32>,
    %714 = vector.extract_strided_slice %577 {offsets = [0, 4, 0], sizes = [2, 1, 128], strides = [1, 1, 1]} : vector<2x8x128xf32> to vector<2x1x128xf32>
    %715 = vector.shape_cast %714 : vector<2x1x128xf32> to vector<2x128xf32>
    %716 = arith.truncf %710 : vector<2x32xf32> to vector<2x32xbf16>
    %cst_191 = arith.constant dense<0.000000e+00> : vector<2x128xf32>
    %717 = tpu.matmul %716, %571, %cst_191 {dimension_numbers = #tpu.dot_dimension_numbers<[1], [0], [0], [1], [0, 0, 1, 1], [], []>} : vector<2x32xbf16>, vector<32x128xbf16>, vector<2x128xf32> -> vector<2x128xf32>
    %718 = arith.addf %715, %717 : vector<2x128xf32>
    %719 = vector.extract_strided_slice %718 {offsets = [0, 0], sizes = [2, 32], strides = [1, 1]} : vector<2x128xf32> to vector<2x32xf32>
    %720 = arith.negf %719 : vector<2x32xf32>
    %721 = math.exp %720 : vector<2x32xf32>
    %cst_192 = arith.constant 1.000000e+00 : f32
    %722 = vector.broadcast %cst_192 : f32 to vector<2x32xf32>
    %723 = arith.addf %722, %721 : vector<2x32xf32>
    %724 = arith.divf %722, %723 : vector<2x32xf32>
    %725 = vector.extract_strided_slice %718 {offsets = [0, 32], sizes = [2, 32], strides = [1, 1]} : vector<2x128xf32> to vector<2x32xf32>
    %726 = arith.negf %725 : vector<2x32xf32>
    %727 = math.exp %726 : vector<2x32xf32>
    %cst_193 = arith.constant 1.000000e+00 : f32
    %728 = vector.broadcast %cst_193 : f32 to vector<2x32xf32>
    %729 = arith.addf %728, %727 : vector<2x32xf32>
    %730 = arith.divf %728, %729 : vector<2x32xf32>
    %731 = vector.extract_strided_slice %718 {offsets = [0, 64], sizes = [2, 32], strides = [1, 1]} : vector<2x128xf32> to vector<2x32xf32>
    %732 = math.tanh %731 : vector<2x32xf32>
    %733 = vector.extract_strided_slice %718 {offsets = [0, 96], sizes = [2, 32], strides = [1, 1]} : vector<2x128xf32> to vector<2x32xf32>
    %734 = arith.negf %733 : vector<2x32xf32>
    %735 = math.exp %734 : vector<2x32xf32>
    %cst_194 = arith.constant 1.000000e+00 : f32
    %736 = vector.broadcast %cst_194 : f32 to vector<2x32xf32>
    %737 = arith.addf %736, %735 : vector<2x32xf32>
    %738 = arith.divf %736, %737 : vector<2x32xf32>
    %739 = arith.mulf %730, %708 : vector<2x32xf32>
    %740 = arith.mulf %724, %732 : vector<2x32xf32>
    %741 = arith.addf %739, %740 : vector<2x32xf32>
    %742 = math.tanh %741 : vector<2x32xf32>
    %743 = arith.mulf %738, %742 : vector<2x32xf32>
    %c0_195 = arith.constant 0 : index
    %c4_196 = arith.constant 4 : index
    %c0_197 = arith.constant 0 : index
    %744 = vector.load %arg17[%c0_195, %c4_196, %c0_197] : memref<2x8x32xf32, #tpu.memory_space<vmem>>, vector<2x1x32xf32>
    %745 = vector.shape_cast %744 : vector<2x1x32xf32> to vector<2x32xf32>
    %746 = vector.shape_cast %743 : vector<2x32xf32> to vector<2x1x32xf32>
    tpu.vector_store %arg17[%c0_195, %c4_196, %c0_197], %746 {strides = array<i32>} : memref<2x8x32xf32, #tpu.memory_space<vmem>>, vector<2x1x32xf32>,
    %747 = vector.extract_strided_slice %577 {offsets = [0, 5, 0], sizes = [2, 1, 128], strides = [1, 1, 1]} : vector<2x8x128xf32> to vector<2x1x128xf32>
    %748 = vector.shape_cast %747 : vector<2x1x128xf32> to vector<2x128xf32>
    %749 = arith.truncf %743 : vector<2x32xf32> to vector<2x32xbf16>
    %cst_198 = arith.constant dense<0.000000e+00> : vector<2x128xf32>
    %750 = tpu.matmul %749, %571, %cst_198 {dimension_numbers = #tpu.dot_dimension_numbers<[1], [0], [0], [1], [0, 0, 1, 1], [], []>} : vector<2x32xbf16>, vector<32x128xbf16>, vector<2x128xf32> -> vector<2x128xf32>
    %751 = arith.addf %748, %750 : vector<2x128xf32>
    %752 = vector.extract_strided_slice %751 {offsets = [0, 0], sizes = [2, 32], strides = [1, 1]} : vector<2x128xf32> to vector<2x32xf32>
    %753 = arith.negf %752 : vector<2x32xf32>
    %754 = math.exp %753 : vector<2x32xf32>
    %cst_199 = arith.constant 1.000000e+00 : f32
    %755 = vector.broadcast %cst_199 : f32 to vector<2x32xf32>
    %756 = arith.addf %755, %754 : vector<2x32xf32>
    %757 = arith.divf %755, %756 : vector<2x32xf32>
    %758 = vector.extract_strided_slice %751 {offsets = [0, 32], sizes = [2, 32], strides = [1, 1]} : vector<2x128xf32> to vector<2x32xf32>
    %759 = arith.negf %758 : vector<2x32xf32>
    %760 = math.exp %759 : vector<2x32xf32>
    %cst_200 = arith.constant 1.000000e+00 : f32
    %761 = vector.broadcast %cst_200 : f32 to vector<2x32xf32>
    %762 = arith.addf %761, %760 : vector<2x32xf32>
    %763 = arith.divf %761, %762 : vector<2x32xf32>
    %764 = vector.extract_strided_slice %751 {offsets = [0, 64], sizes = [2, 32], strides = [1, 1]} : vector<2x128xf32> to vector<2x32xf32>
    %765 = math.tanh %764 : vector<2x32xf32>
    %766 = vector.extract_strided_slice %751 {offsets = [0, 96], sizes = [2, 32], strides = [1, 1]} : vector<2x128xf32> to vector<2x32xf32>
    %767 = arith.negf %766 : vector<2x32xf32>
    %768 = math.exp %767 : vector<2x32xf32>
    %cst_201 = arith.constant 1.000000e+00 : f32
    %769 = vector.broadcast %cst_201 : f32 to vector<2x32xf32>
    %770 = arith.addf %769, %768 : vector<2x32xf32>
    %771 = arith.divf %769, %770 : vector<2x32xf32>
    %772 = arith.mulf %763, %741 : vector<2x32xf32>
    %773 = arith.mulf %757, %765 : vector<2x32xf32>
    %774 = arith.addf %772, %773 : vector<2x32xf32>
    %775 = math.tanh %774 : vector<2x32xf32>
    %776 = arith.mulf %771, %775 : vector<2x32xf32>
    %c0_202 = arith.constant 0 : index
    %c5_203 = arith.constant 5 : index
    %c0_204 = arith.constant 0 : index
    %777 = vector.load %arg17[%c0_202, %c5_203, %c0_204] : memref<2x8x32xf32, #tpu.memory_space<vmem>>, vector<2x1x32xf32>
    %778 = vector.shape_cast %777 : vector<2x1x32xf32> to vector<2x32xf32>
    %779 = vector.shape_cast %776 : vector<2x32xf32> to vector<2x1x32xf32>
    tpu.vector_store %arg17[%c0_202, %c5_203, %c0_204], %779 {strides = array<i32>} : memref<2x8x32xf32, #tpu.memory_space<vmem>>, vector<2x1x32xf32>,
    %780 = vector.extract_strided_slice %577 {offsets = [0, 6, 0], sizes = [2, 1, 128], strides = [1, 1, 1]} : vector<2x8x128xf32> to vector<2x1x128xf32>
    %781 = vector.shape_cast %780 : vector<2x1x128xf32> to vector<2x128xf32>
    %782 = arith.truncf %776 : vector<2x32xf32> to vector<2x32xbf16>
    %cst_205 = arith.constant dense<0.000000e+00> : vector<2x128xf32>
    %783 = tpu.matmul %782, %571, %cst_205 {dimension_numbers = #tpu.dot_dimension_numbers<[1], [0], [0], [1], [0, 0, 1, 1], [], []>} : vector<2x32xbf16>, vector<32x128xbf16>, vector<2x128xf32> -> vector<2x128xf32>
    %784 = arith.addf %781, %783 : vector<2x128xf32>
    %785 = vector.extract_strided_slice %784 {offsets = [0, 0], sizes = [2, 32], strides = [1, 1]} : vector<2x128xf32> to vector<2x32xf32>
    %786 = arith.negf %785 : vector<2x32xf32>
    %787 = math.exp %786 : vector<2x32xf32>
    %cst_206 = arith.constant 1.000000e+00 : f32
    %788 = vector.broadcast %cst_206 : f32 to vector<2x32xf32>
    %789 = arith.addf %788, %787 : vector<2x32xf32>
    %790 = arith.divf %788, %789 : vector<2x32xf32>
    %791 = vector.extract_strided_slice %784 {offsets = [0, 32], sizes = [2, 32], strides = [1, 1]} : vector<2x128xf32> to vector<2x32xf32>
    %792 = arith.negf %791 : vector<2x32xf32>
    %793 = math.exp %792 : vector<2x32xf32>
    %cst_207 = arith.constant 1.000000e+00 : f32
    %794 = vector.broadcast %cst_207 : f32 to vector<2x32xf32>
    %795 = arith.addf %794, %793 : vector<2x32xf32>
    %796 = arith.divf %794, %795 : vector<2x32xf32>
    %797 = vector.extract_strided_slice %784 {offsets = [0, 64], sizes = [2, 32], strides = [1, 1]} : vector<2x128xf32> to vector<2x32xf32>
    %798 = math.tanh %797 : vector<2x32xf32>
    %799 = vector.extract_strided_slice %784 {offsets = [0, 96], sizes = [2, 32], strides = [1, 1]} : vector<2x128xf32> to vector<2x32xf32>
    %800 = arith.negf %799 : vector<2x32xf32>
    %801 = math.exp %800 : vector<2x32xf32>
    %cst_208 = arith.constant 1.000000e+00 : f32
    %802 = vector.broadcast %cst_208 : f32 to vector<2x32xf32>
    %803 = arith.addf %802, %801 : vector<2x32xf32>
    %804 = arith.divf %802, %803 : vector<2x32xf32>
    %805 = arith.mulf %796, %774 : vector<2x32xf32>
    %806 = arith.mulf %790, %798 : vector<2x32xf32>
    %807 = arith.addf %805, %806 : vector<2x32xf32>
    %808 = math.tanh %807 : vector<2x32xf32>
    %809 = arith.mulf %804, %808 : vector<2x32xf32>
    %c0_209 = arith.constant 0 : index
    %c6_210 = arith.constant 6 : index
    %c0_211 = arith.constant 0 : index
    %810 = vector.load %arg17[%c0_209, %c6_210, %c0_211] : memref<2x8x32xf32, #tpu.memory_space<vmem>>, vector<2x1x32xf32>
    %811 = vector.shape_cast %810 : vector<2x1x32xf32> to vector<2x32xf32>
    %812 = vector.shape_cast %809 : vector<2x32xf32> to vector<2x1x32xf32>
    tpu.vector_store %arg17[%c0_209, %c6_210, %c0_211], %812 {strides = array<i32>} : memref<2x8x32xf32, #tpu.memory_space<vmem>>, vector<2x1x32xf32>,
    %813 = vector.extract_strided_slice %577 {offsets = [0, 7, 0], sizes = [2, 1, 128], strides = [1, 1, 1]} : vector<2x8x128xf32> to vector<2x1x128xf32>
    %814 = vector.shape_cast %813 : vector<2x1x128xf32> to vector<2x128xf32>
    %815 = arith.truncf %809 : vector<2x32xf32> to vector<2x32xbf16>
    %cst_212 = arith.constant dense<0.000000e+00> : vector<2x128xf32>
    %816 = tpu.matmul %815, %571, %cst_212 {dimension_numbers = #tpu.dot_dimension_numbers<[1], [0], [0], [1], [0, 0, 1, 1], [], []>} : vector<2x32xbf16>, vector<32x128xbf16>, vector<2x128xf32> -> vector<2x128xf32>
    %817 = arith.addf %814, %816 : vector<2x128xf32>
    %818 = vector.extract_strided_slice %817 {offsets = [0, 0], sizes = [2, 32], strides = [1, 1]} : vector<2x128xf32> to vector<2x32xf32>
    %819 = arith.negf %818 : vector<2x32xf32>
    %820 = math.exp %819 : vector<2x32xf32>
    %cst_213 = arith.constant 1.000000e+00 : f32
    %821 = vector.broadcast %cst_213 : f32 to vector<2x32xf32>
    %822 = arith.addf %821, %820 : vector<2x32xf32>
    %823 = arith.divf %821, %822 : vector<2x32xf32>
    %824 = vector.extract_strided_slice %817 {offsets = [0, 32], sizes = [2, 32], strides = [1, 1]} : vector<2x128xf32> to vector<2x32xf32>
    %825 = arith.negf %824 : vector<2x32xf32>
    %826 = math.exp %825 : vector<2x32xf32>
    %cst_214 = arith.constant 1.000000e+00 : f32
    %827 = vector.broadcast %cst_214 : f32 to vector<2x32xf32>
    %828 = arith.addf %827, %826 : vector<2x32xf32>
    %829 = arith.divf %827, %828 : vector<2x32xf32>
    %830 = vector.extract_strided_slice %817 {offsets = [0, 64], sizes = [2, 32], strides = [1, 1]} : vector<2x128xf32> to vector<2x32xf32>
    %831 = math.tanh %830 : vector<2x32xf32>
    %832 = vector.extract_strided_slice %817 {offsets = [0, 96], sizes = [2, 32], strides = [1, 1]} : vector<2x128xf32> to vector<2x32xf32>
    %833 = arith.negf %832 : vector<2x32xf32>
    %834 = math.exp %833 : vector<2x32xf32>
    %cst_215 = arith.constant 1.000000e+00 : f32
    %835 = vector.broadcast %cst_215 : f32 to vector<2x32xf32>
    %836 = arith.addf %835, %834 : vector<2x32xf32>
    %837 = arith.divf %835, %836 : vector<2x32xf32>
    %838 = arith.mulf %829, %807 : vector<2x32xf32>
    %839 = arith.mulf %823, %831 : vector<2x32xf32>
    %840 = arith.addf %838, %839 : vector<2x32xf32>
    %841 = math.tanh %840 : vector<2x32xf32>
    %842 = arith.mulf %837, %841 : vector<2x32xf32>
    %c0_216 = arith.constant 0 : index
    %c7_217 = arith.constant 7 : index
    %c0_218 = arith.constant 0 : index
    %843 = vector.load %arg17[%c0_216, %c7_217, %c0_218] : memref<2x8x32xf32, #tpu.memory_space<vmem>>, vector<2x1x32xf32>
    %844 = vector.shape_cast %843 : vector<2x1x32xf32> to vector<2x32xf32>
    %845 = vector.shape_cast %842 : vector<2x32xf32> to vector<2x1x32xf32>
    tpu.vector_store %arg17[%c0_216, %c7_217, %c0_218], %845 {strides = array<i32>} : memref<2x8x32xf32, #tpu.memory_space<vmem>>, vector<2x1x32xf32>,
    %c2_219 = arith.constant 2 : index
    %c0_220 = arith.constant 0 : index
    %c0_221 = arith.constant 0 : index
    %846 = vector.load %arg15[%c2_219, %c0_220, %c0_221] : memref<3x2x32xf32, #tpu.memory_space<vmem>>, vector<1x2x32xf32>
    %847 = vector.shape_cast %846 : vector<1x2x32xf32> to vector<2x32xf32>
    %848 = vector.shape_cast %842 : vector<2x32xf32> to vector<1x2x32xf32>
    tpu.vector_store %arg15[%c2_219, %c0_220, %c0_221], %848 {strides = array<i32>} : memref<3x2x32xf32, #tpu.memory_space<vmem>>, vector<1x2x32xf32>,
    %c2_222 = arith.constant 2 : index
    %c0_223 = arith.constant 0 : index
    %c0_224 = arith.constant 0 : index
    %849 = vector.load %arg16[%c2_222, %c0_223, %c0_224] : memref<3x2x32xf32, #tpu.memory_space<vmem>>, vector<1x2x32xf32>
    %850 = vector.shape_cast %849 : vector<1x2x32xf32> to vector<2x32xf32>
    %851 = vector.shape_cast %840 : vector<2x32xf32> to vector<1x2x32xf32>
    tpu.vector_store %arg16[%c2_222, %c0_223, %c0_224], %851 {strides = array<i32>} : memref<3x2x32xf32, #tpu.memory_space<vmem>>, vector<1x2x32xf32>,
    %c0_225 = arith.constant 0 : index
    %c0_226 = arith.constant 0 : index
    %c0_227 = arith.constant 0 : index
    %852 = vector.load %arg17[%c0_225, %c0_226, %c0_227] : memref<2x8x32xf32, #tpu.memory_space<vmem>>, vector<2x8x32xf32>
    %853 = vector.shape_cast %852 : vector<2x8x32xf32> to vector<16x32xf32>
    %854 = arith.truncf %853 : vector<16x32xf32> to vector<16x32xbf16>
    %c0_228 = arith.constant 0 : index
    %c0_229 = arith.constant 0 : index
    %855 = vector.load %arg12[%c0_228, %c0_229] : memref<32x16xbf16, #tpu.memory_space<vmem>>, vector<32x16xbf16>
    %cst_230 = arith.constant dense<0.000000e+00> : vector<16x16xf32>
    %856 = tpu.matmul %854, %855, %cst_230 {dimension_numbers = #tpu.dot_dimension_numbers<[1], [0], [0], [1], [0, 0, 1, 1], [], []>} : vector<16x32xbf16>, vector<32x16xbf16>, vector<16x16xf32> -> vector<16x16xf32>
    %c0_231 = arith.constant 0 : index
    %c0_232 = arith.constant 0 : index
    %857 = vector.load %arg13[%c0_231, %c0_232] : memref<1x16xf32, #tpu.memory_space<vmem>>, vector<1x16xf32>
    %858 = vector.broadcast %857 : vector<1x16xf32> to vector<16x16xf32>
    %859 = arith.addf %856, %858 : vector<16x16xf32>
    %860 = vector.shape_cast %859 : vector<16x16xf32> to vector<2x8x16xf32>
    %c0_233 = arith.constant 0 : index
    %c0_234 = arith.constant 0 : index
    %c0_235 = arith.constant 0 : index
    %861 = vector.load %arg14[%c0_233, %c0_234, %c0_235] : memref<2x8x16xf32, #tpu.memory_space<vmem>>, vector<2x8x16xf32>
    tpu.vector_store %arg14[%c0_233, %c0_234, %c0_235], %860 {strides = array<i32>} : memref<2x8x16xf32, #tpu.memory_space<vmem>>, vector<2x8x16xf32>,
    return
  }
}

</mosaic_0001>

<llo_original>
// kernel: tpu_custom_call.1
$region0: #{tpu_custom_call.1}
  #allocation0 [shape = 'u32[]', space=smem, size = 0x4, offset = 0x4, fixed_abs, tag = 'smem constant byte address 0x4 - core index']
  #allocation1 [shape = 'u32[144,128]{1,0:T(1,128)}', space=vmem, size = 0x12000, scoped, tag = 'internal scratch']
  #allocation2 [shape = 'f32[2,8,32]{2,1,0:T(8,128)}', space=vmem, size = 0x2000, scoped, tag = 'scratch operand']
  %s0 = inlined_call_operand.vmem [shape: f32[2,8,16], index: 0, kind: input, shape index: {}]
  %s1 = inlined_call_operand.hbm [shape: f32[3,2,32], index: 1, kind: input, shape index: {}]
  %s2 = inlined_call_operand.hbm [shape: f32[3,2,32], index: 2, kind: input, shape index: {}]
  %s3 = inlined_call_operand.hbm [shape: bf16[16,128], index: 3, kind: input, shape index: {}]
  %s4 = inlined_call_operand.vmem [shape: bf16[32,128], index: 4, kind: input, shape index: {}]
  %s5 = inlined_call_operand.vmem [shape: f32[1,128], index: 5, kind: input, shape index: {}]
  %s6 = inlined_call_operand.hbm [shape: bf16[32,128], index: 6, kind: input, shape index: {}]
  %s7 = inlined_call_operand.vmem [shape: bf16[32,128], index: 7, kind: input, shape index: {}]
  %s8 = inlined_call_operand.vmem [shape: f32[1,128], index: 8, kind: input, shape index: {}]
  %s9 = inlined_call_operand.hbm [shape: bf16[32,128], index: 9, kind: input, shape index: {}]
  %s10 = inlined_call_operand.hbm [shape: bf16[32,128], index: 10, kind: input, shape index: {}]
  %s11 = inlined_call_operand.vmem [shape: f32[1,128], index: 11, kind: input, shape index: {}]
  %s12 = inlined_call_operand.vmem [shape: bf16[32,16], index: 12, kind: input, shape index: {}]
  %s13 = inlined_call_operand.vmem [shape: f32[1,16], index: 13, kind: input, shape index: {}]
  %s14 = inlined_call_operand.hbm [shape: f32[2,8,16], index: 14, kind: output, shape index: {0}]
  %s15 = inlined_call_operand.hbm [shape: f32[3,2,32], index: 15, kind: output, shape index: {1}]
  %s16 = inlined_call_operand.hbm [shape: f32[3,2,32], index: 16, kind: output, shape index: {2}]
  %17 = xla_tuple %s14, %s15, %s16
  %s18 = sld [smem:[#allocation0]]
  $region106: #{tpu_custom_call.1} parent=0
    _
  %s20 = ssub.s32 1, %s18
  %s21 = scalar_select 0, %s20, %s18
  $region1: #{tpu_custom_call.1} parent=0
    #allocation3 [shape = 'u8[3072]{0}', space=vmem, size = 0xc00, scoped, tag = 'input window, operand 1, single buffered']
    #allocation4 [shape = 's32[1]{0}', space=sflag, size = 0x4, scoped, tag = 'scoped memory for tpu_custom_call.1']
    #allocation5 [shape = 's32[1]{0}', space=sflag, size = 0x4, scoped, tag = 'scoped memory for tpu_custom_call.1']
    #allocation6 [shape = 'u8[3072]{0}', space=vmem, size = 0xc00, scoped, tag = 'input window, operand 2, single buffered']
    #allocation7 [shape = 's32[1]{0}', space=sflag, size = 0x4, scoped, tag = 'scoped memory for tpu_custom_call.1']
    #allocation8 [shape = 'u8[4096]{0}', space=vmem, size = 0x1000, scoped, tag = 'input window, operand 3, single buffered']
    #allocation9 [shape = 'u8[8192]{0}', space=vmem, size = 0x2000, scoped, tag = 'input window, operand 6, single buffered']
    #allocation10 [shape = 's32[1]{0}', space=sflag, size = 0x4, scoped, tag = 'scoped memory for tpu_custom_call.1']
    #allocation11 [shape = 'u8[8192]{0}', space=vmem, size = 0x2000, scoped, tag = 'input window, operand 9, single buffered']
    #allocation12 [shape = 'u8[8192]{0}', space=vmem, size = 0x2000, scoped, tag = 'input window, operand 10, single buffered']
    #allocation13 [shape = 's32[1]{0}', space=sflag, size = 0x4, scoped, tag = 'scoped memory for tpu_custom_call.1']
    #allocation14 [shape = 'u8[8192]{0}', space=vmem, size = 0x2000, scoped, tag = 'output window, operand 0, single buffered']
    #allocation15 [shape = 'u8[3072]{0}', space=vmem, size = 0xc00, scoped, tag = 'output window, operand 1, single buffered']
    #allocation16 [shape = 's32[1]{0}', space=sflag, size = 0x4, scoped, tag = 'scoped memory for tpu_custom_call.1']
    #allocation17 [shape = 'u8[3072]{0}', space=vmem, size = 0xc00, scoped, tag = 'output window, operand 2, single buffered']
    %22 = vsyncpa [#allocation4], 0
    %23 = vsyncpa [#allocation7], 0
    %24 = vsyncpa [#allocation10], 0
    %25 = vsyncpa [#allocation13], 0
    %26 = vsyncpa [#allocation5], 0
    %27 = vsyncpa [#allocation16], 0
    // Predicated region
    $region2: #{tpu_custom_call.1} parent=1 // pred_check
      _
    $region3: #{tpu_custom_call.1} parent=1 // pred_check_branch
      %29 = sbr.rel (0) target = $region5
    $region4: #{tpu_custom_call.1} parent=1 // pred_region
      _
    $region5: #{tpu_custom_call.1} parent=1 // pred_fallthru
      _
    // Predicated region
    $region6: #{tpu_custom_call.1} parent=1 // pred_check
      _
    $region7: #{tpu_custom_call.1} parent=1 // pred_check_branch
      %31 = sbr.rel (0) target = $region9
    $region8: #{tpu_custom_call.1} parent=1 // pred_region
      %s33 = ssub.s32 96, 96
      %34 = vsyncadd [#allocation4], %s33
      %s35 = sshll.u32 [#allocation3], 4
      %s36 = int_to_ptr.vmem [resolvable:$true] %s35
      %41 = dma.hbm_to_vmem [thread:$0]  %s1, 96, %s36, [#allocation4], 32, 32, 2
    $region9: #{tpu_custom_call.1} parent=1 // pred_fallthru
      _
    // Predicated region
    $region10: #{tpu_custom_call.1} parent=1 // pred_check
      _
    $region11: #{tpu_custom_call.1} parent=1 // pred_check_branch
      %43 = sbr.rel (0) target = $region13
    $region12: #{tpu_custom_call.1} parent=1 // pred_region
      %s45 = ssub.s32 96, 96
      %46 = vsyncadd [#allocation7], %s45
      %s47 = sshll.u32 [#allocation6], 4
      %s48 = int_to_ptr.vmem [resolvable:$true] %s47
      %53 = dma.hbm_to_vmem [thread:$0]  %s2, 96, %s48, [#allocation7], 32, 32, 2
    $region13: #{tpu_custom_call.1} parent=1 // pred_fallthru
      _
    // Predicated region
    $region14: #{tpu_custom_call.1} parent=1 // pred_check
      _
    $region15: #{tpu_custom_call.1} parent=1 // pred_check_branch
      %55 = sbr.rel (0) target = $region17
    $region16: #{tpu_custom_call.1} parent=1 // pred_region
      %s57 = ssub.s32 128, 128
      %58 = vsyncadd [#allocation7], %s57
      %s59 = sshll.u32 [#allocation8], 4
      %s60 = int_to_ptr.vmem [resolvable:$true] %s59
      %65 = dma.hbm_to_vmem [thread:$0]  %s3, 128, %s60, [#allocation7], 64, 64, 4
    $region17: #{tpu_custom_call.1} parent=1 // pred_fallthru
      _
    // Predicated region
    $region18: #{tpu_custom_call.1} parent=1 // pred_check
      _
    $region19: #{tpu_custom_call.1} parent=1 // pred_check_branch
      %67 = sbr.rel (0) target = $region21
    $region20: #{tpu_custom_call.1} parent=1 // pred_region
      _
    $region21: #{tpu_custom_call.1} parent=1 // pred_fallthru
      _
    // Predicated region
    $region22: #{tpu_custom_call.1} parent=1 // pred_check
      _
    $region23: #{tpu_custom_call.1} parent=1 // pred_check_branch
      %69 = sbr.rel (0) target = $region25
    $region24: #{tpu_custom_call.1} parent=1 // pred_region
      _
    $region25: #{tpu_custom_call.1} parent=1 // pred_fallthru
      _
    // Predicated region
    $region26: #{tpu_custom_call.1} parent=1 // pred_check
      _
    $region27: #{tpu_custom_call.1} parent=1 // pred_check_branch
      %71 = sbr.rel (0) target = $region29
    $region28: #{tpu_custom_call.1} parent=1 // pred_region
      %s73 = ssub.s32 256, 256
      %74 = vsyncadd [#allocation10], %s73
      %s75 = sshll.u32 [#allocation9], 4
      %s76 = int_to_ptr.vmem [resolvable:$true] %s75
      %81 = dma.hbm_to_vmem [thread:$0]  %s6, 256, %s76, [#allocation10], 64, 64, 4
    $region29: #{tpu_custom_call.1} parent=1 // pred_fallthru
      _
    // Predicated region
    $region30: #{tpu_custom_call.1} parent=1 // pred_check
      _
    $region31: #{tpu_custom_call.1} parent=1 // pred_check_branch
      %83 = sbr.rel (0) target = $region33
    $region32: #{tpu_custom_call.1} parent=1 // pred_region
      _
    $region33: #{tpu_custom_call.1} parent=1 // pred_fallthru
      _
    // Predicated region
    $region34: #{tpu_custom_call.1} parent=1 // pred_check
      _
    $region35: #{tpu_custom_call.1} parent=1 // pred_check_branch
      %85 = sbr.rel (0) target = $region37
    $region36: #{tpu_custom_call.1} parent=1 // pred_region
      _
    $region37: #{tpu_custom_call.1} parent=1 // pred_fallthru
      _
    // Predicated region
    $region38: #{tpu_custom_call.1} parent=1 // pred_check
      _
    $region39: #{tpu_custom_call.1} parent=1 // pred_check_branch
      %87 = sbr.rel (0) target = $region41
    $region40: #{tpu_custom_call.1} parent=1 // pred_region
      %s89 = ssub.s32 256, 256
      %90 = vsyncadd [#allocation10], %s89
      %s91 = sshll.u32 [#allocation11], 4
      %s92 = int_to_ptr.vmem [resolvable:$true] %s91
      %97 = dma.hbm_to_vmem [thread:$0]  %s9, 256, %s92, [#allocation10], 64, 64, 4
    $region41: #{tpu_custom_call.1} parent=1 // pred_fallthru
      _
    // Predicated region
    $region42: #{tpu_custom_call.1} parent=1 // pred_check
      _
    $region43: #{tpu_custom_call.1} parent=1 // pred_check_branch
      %99 = sbr.rel (0) target = $region45
    $region44: #{tpu_custom_call.1} parent=1 // pred_region
      %s101 = ssub.s32 256, 256
      %102 = vsyncadd [#allocation13], %s101
      %s103 = sshll.u32 [#allocation12], 4
      %s104 = int_to_ptr.vmem [resolvable:$true] %s103
      %109 = dma.hbm_to_vmem [thread:$0]  %s10, 256, %s104, [#allocation13], 64, 64, 4
    $region45: #{tpu_custom_call.1} parent=1 // pred_fallthru
      _
    // Predicated region
    $region46: #{tpu_custom_call.1} parent=1 // pred_check
      _
    $region47: #{tpu_custom_call.1} parent=1 // pred_check_branch
      %111 = sbr.rel (0) target = $region49
    $region48: #{tpu_custom_call.1} parent=1 // pred_region
      _
    $region49: #{tpu_custom_call.1} parent=1 // pred_fallthru
      _
    // Predicated region
    $region50: #{tpu_custom_call.1} parent=1 // pred_check
      _
    $region51: #{tpu_custom_call.1} parent=1 // pred_check_branch
      %113 = sbr.rel (0) target = $region53
    $region52: #{tpu_custom_call.1} parent=1 // pred_region
      _
    $region53: #{tpu_custom_call.1} parent=1 // pred_fallthru
      _
    // Predicated region
    $region54: #{tpu_custom_call.1} parent=1 // pred_check
      _
    $region55: #{tpu_custom_call.1} parent=1 // pred_check_branch
      %115 = sbr.rel (0) target = $region57
    $region56: #{tpu_custom_call.1} parent=1 // pred_region
      _
    $region57: #{tpu_custom_call.1} parent=1 // pred_fallthru
      _
    // Predicated region
    $region58: #{tpu_custom_call.1} parent=1 // pred_check
      _
    $region59: #{tpu_custom_call.1} parent=1 // pred_check_branch
      %117 = sbr.rel (0) target = $region61
    $region60: #{tpu_custom_call.1} parent=1 // pred_region
      %118 = dma.done [#allocation4], 96
    $region61: #{tpu_custom_call.1} parent=1 // pred_fallthru
      _
    // Predicated region
    $region62: #{tpu_custom_call.1} parent=1 // pred_check
      _
    $region63: #{tpu_custom_call.1} parent=1 // pred_check_branch
      %120 = sbr.rel (0) target = $region65
    $region64: #{tpu_custom_call.1} parent=1 // pred_region
      %121 = dma.done [#allocation7], 96
    $region65: #{tpu_custom_call.1} parent=1 // pred_fallthru
      _
    // Predicated region
    $region66: #{tpu_custom_call.1} parent=1 // pred_check
      _
    $region67: #{tpu_custom_call.1} parent=1 // pred_check_branch
      %123 = sbr.rel (0) target = $region69
    $region68: #{tpu_custom_call.1} parent=1 // pred_region
      %124 = dma.done [#allocation7], 128
    $region69: #{tpu_custom_call.1} parent=1 // pred_fallthru
      _
    // Predicated region
    $region70: #{tpu_custom_call.1} parent=1 // pred_check
      _
    $region71: #{tpu_custom_call.1} parent=1 // pred_check_branch
      %126 = sbr.rel (0) target = $region73
    $region72: #{tpu_custom_call.1} parent=1 // pred_region
      %127 = dma.done [#allocation10], 256
    $region73: #{tpu_custom_call.1} parent=1 // pred_fallthru
      _
    // Predicated region
    $region74: #{tpu_custom_call.1} parent=1 // pred_check
      _
    $region75: #{tpu_custom_call.1} parent=1 // pred_check_branch
      %129 = sbr.rel (0) target = $region77
    $region76: #{tpu_custom_call.1} parent=1 // pred_region
      %130 = dma.done [#allocation10], 256
    $region77: #{tpu_custom_call.1} parent=1 // pred_fallthru
      _
    // Predicated region
    $region78: #{tpu_custom_call.1} parent=1 // pred_check
      _
    $region79: #{tpu_custom_call.1} parent=1 // pred_check_branch
      %132 = sbr.rel (0) target = $region81
    $region80: #{tpu_custom_call.1} parent=1 // pred_region
      %133 = dma.done [#allocation13], 256
    $region81: #{tpu_custom_call.1} parent=1 // pred_fallthru
      _
    %v135 = vld [vmem:[%s0] sm:$0xff]
    %v136 = vld [vmem:[%s0 + $0x8] sm:$0xff]
    %v137 = vld [vmem:[#allocation8] sm:$0xf]
    %v138 = vld [vmem:[#allocation8 + $0x4] sm:$0xf]
    %v139 = vld [vmem:[%s4] sm:$0xf]
    %v140 = vld [vmem:[%s4 + $0x4] sm:$0xf]
    %v141 = vld [vmem:[%s4 + $0x8] sm:$0xf]
    %v142 = vld [vmem:[%s4 + $0xc] sm:$0xf]
    %v143 = vld [vmem:[%s5] sm:$0x1]
    %v144 = vpack.c.bf16 %v136, %v135
    %v146 = vlaneseq
    %v147 = vshrl.u32 %v146, 7
    %v148 = vsub.s32 0, %v147
    %v149 = vrot.slane %v143, %v148
    %v153 = vunpack.c.l.b16 %v137
    %v154 = vunpack.c.l.b16 %v138
    %v155 = vpack.c.b16 %v154, %v153
    %vm157 = vcmask 130048
    %v159 = vsel %vm157, %v144, 0
    %161 = vmatprep.subr.bf16.mxu0 0
    %162 = vmatpush1.bf16.msra.mxu0 %v155
    %163 = vmatprep.subr.bf16.mxu0 0
    %164 = vmatpush1.bf16.msra.mxu0 0
    %165 = vmatprep.subr.bf16.mxu0 0
    %166 = vmatpush1.bf16.msra.mxu0 0
    %167 = vmatprep.subr.bf16.mxu0 0
    %168 = vmatpush1.bf16.msra.mxu0 0
    %169 = vmatprep.subr.bf16.mxu0 0
    %170 = vmatpush1.bf16.msra.mxu0 0
    %171 = vmatprep.subr.bf16.mxu0 0
    %172 = vmatpush1.bf16.msra.mxu0 0
    %173 = vmatprep.subr.bf16.mxu0 0
    %174 = vmatpush1.bf16.msra.mxu0 0
    %175 = vmatprep.subr.bf16.mxu0 0
    %176 = vmatpush1.bf16.msra.mxu0 0
    %177 = vmatprep.subr.bf16.mxu0 0
    %178 = vmatpush1.bf16.msra.mxu0 0
    %179 = vmatprep.subr.bf16.mxu0 0
    %180 = vmatpush1.bf16.msra.mxu0 0
    %181 = vmatprep.subr.bf16.mxu0 0
    %182 = vmatpush1.bf16.msra.mxu0 0
    %183 = vmatprep.subr.bf16.mxu0 0
    %184 = vmatpush1.bf16.msra.mxu0 0
    %185 = vmatprep.subr.bf16.mxu0 0
    %186 = vmatpush1.bf16.msra.mxu0 0
    %187 = vmatprep.subr.bf16.mxu0 0
    %188 = vmatpush1.bf16.msra.mxu0 0
    %189 = vmatprep.subr.bf16.mxu0 0
    %190 = vmatpush1.bf16.msra.mxu0 0
    %191 = vmatprep.subr.bf16.mxu0 0
    %192 = vmatpush1.bf16.msra.mxu0 0
    %193 = vmatprep.mubr.bf16.mxu0 0
    %194 = vmatmul.mubr.bf16.gmra.mrb[0].mxu0 %v159
    %v195 = vpop.f32.mrb[0].mxu0
    %v196 = vadd.f32 %v149, %v195
    %v197 = vpop.f32.mrb[0].mxu0
    %v198 = vpop.f32.mrb[0].mxu0
    %v199 = vadd.f32 %v149, %v198
    %v200 = vpop.f32.mrb[0].mxu0
    %201 = vdwg.mxu0
    %v202 = vld [vmem:[#allocation3] sm:$0x3]
    %v203 = vld [vmem:[#allocation6] sm:$0x3]
    %v204 = vpack.c.bf16 %v202, %v202
    %v209 = vunpack.c.l.b16 %v139
    %v210 = vunpack.c.l.b16 %v140
    %v211 = vunpack.c.l.b16 %v141
    %v212 = vunpack.c.l.b16 %v142
    %v213 = vpack.c.b16 %v210, %v209
    %v214 = vpack.c.b16 %v212, %v211
    %vm217 = vcmask 261120
    %v219 = vsel %vm217, %v204, 0
    %221 = vmatprep.subr.bf16.mxu0 0
    %222 = vmatpush1.bf16.msra.mxu0 %v213
    %223 = vmatprep.subr.bf16.mxu0 0
    %224 = vmatpush1.bf16.msra.mxu0 %v214
    %225 = vmatprep.subr.bf16.mxu0 0
    %226 = vmatpush1.bf16.msra.mxu0 0
    %227 = vmatprep.subr.bf16.mxu0 0
    %228 = vmatpush1.bf16.msra.mxu0 0
    %229 = vmatprep.subr.bf16.mxu0 0
    %230 = vmatpush1.bf16.msra.mxu0 0
    %231 = vmatprep.subr.bf16.mxu0 0
    %232 = vmatpush1.bf16.msra.mxu0 0
    %233 = vmatprep.subr.bf16.mxu0 0
    %234 = vmatpush1.bf16.msra.mxu0 0
    %235 = vmatprep.subr.bf16.mxu0 0
    %236 = vmatpush1.bf16.msra.mxu0 0
    %237 = vmatprep.subr.bf16.mxu0 0
    %238 = vmatpush1.bf16.msra.mxu0 0
    %239 = vmatprep.subr.bf16.mxu0 0
    %240 = vmatpush1.bf16.msra.mxu0 0
    %241 = vmatprep.subr.bf16.mxu0 0
    %242 = vmatpush1.bf16.msra.mxu0 0
    %243 = vmatprep.subr.bf16.mxu0 0
    %244 = vmatpush1.bf16.msra.mxu0 0
    %245 = vmatprep.subr.bf16.mxu0 0
    %246 = vmatpush1.bf16.msra.mxu0 0
    %247 = vmatprep.subr.bf16.mxu0 0
    %248 = vmatpush1.bf16.msra.mxu0 0
    %249 = vmatprep.subr.bf16.mxu0 0
    %250 = vmatpush1.bf16.msra.mxu0 0
    %251 = vmatprep.subr.bf16.mxu0 0
    %252 = vmatpush1.bf16.msra.mxu0 0
    %253 = vmatprep.mubr.bf16.mxu0 0
    %254 = vmatmul.mubr.bf16.gmra.mrb[0].mxu0 %v219
    %v255 = vpop.f32.mrb[0].mxu0
    %v256 = vadd.f32 0.0, %v255
    %v257 = vpop.f32.mrb[0].mxu0
    %v258 = vpop.f32.mrb[0].mxu0
    %v259 = vpop.f32.mrb[0].mxu0
    %260 = vdwg.mxu0
    %v262 = vrot.slane %v256, 1
    %v265 = vadd.f32 %v196, %v256
    %v266 = vadd.f32 %v199, %v262
    %v267 = vxor.u32 %v265, 2147483648
    %v268 = vxor.u32 %v266, 2147483648
    %v269 = vmul.f32 %v267, 1.442695
    %v270 = vpow.pop %v269
    %v271 = vmul.f32 %v268, 1.442695
    %v272 = vpow.pop %v271
    %v273 = vadd.f32 %v270, 1.0
    %v274 = vadd.f32 %v272, 1.0
    %v275 = vrcp.pop %v273
    %v276 = vmul.f32 1.0, %v275
    %v277 = vrcp.pop %v274
    %v278 = vmul.f32 1.0, %v277
    %v279 = vtanh.pop %v265
    %v280 = vtanh.pop %v266
    %v282 = vrot.slane %v203, 1
    %283 = vrot.lane.b32.xlu0 %v203, 32
    %v284 = vpop.permute.xlu0 %283
    %285 = vrot.lane.b32.xlu0 %v282, 32
    %v286 = vpop.permute.xlu0 %285
    %v289 = vmul.f32 %v276, %v284
    %v290 = vmul.f32 %v278, %v286
    %293 = vrot.lane.b32.xlu0 %v279, 64
    %v294 = vpop.permute.xlu0 %293
    %295 = vrot.lane.b32.xlu0 %v280, 64
    %v296 = vpop.permute.xlu0 %295
    %v299 = vmul.f32 %v276, %v294
    %v300 = vmul.f32 %v278, %v296
    %303 = vrot.lane.b32.xlu0 %v299, 32
    %v304 = vpop.permute.xlu0 %303
    %305 = vrot.lane.b32.xlu0 %v300, 32
    %v306 = vpop.permute.xlu0 %305
    %v309 = vadd.f32 %v289, %v304
    %v310 = vadd.f32 %v290, %v306
    %v311 = vtanh.pop %v309
    %v312 = vtanh.pop %v310
    %315 = vrot.lane.b32.xlu0 %v311, 64
    %v316 = vpop.permute.xlu0 %315
    %317 = vrot.lane.b32.xlu0 %v312, 64
    %v318 = vpop.permute.xlu0 %317
    %v321 = vmul.f32 %v276, %v316
    %v322 = vmul.f32 %v278, %v318
    %325 = vrot.lane.b32.xlu0 %v321, 32
    %v326 = vpop.permute.xlu0 %325
    %327 = vrot.lane.b32.xlu0 %v322, 32
    %v328 = vpop.permute.xlu0 %327
    %vm331 = vcmask 253952
    %332 = vst.msk [vmem:[#allocation2] sm:$0x1] %vm331, %v326
    %333 = vst.msk [vmem:[#allocation2 + $0x8] sm:$0x1] %vm331, %v328
    %v334 = vpack.c.bf16 %v321, %v321
    %v335 = vpack.c.bf16 %v322, %v322
    %v338 = vunpack.c.l.b16 %v334
    %v339 = vunpack.c.l.b16 %v335
    %v340 = vrot.slane %v339, 7
    %vm341 = vcmask 1041409
    %v342 = vsel %vm341, %v340, %v338
    %v343 = vpack.c.b16 %v342, %v342
    %344 = vrot.lane.b32.xlu0 %v343, 32
    %v345 = vpop.permute.xlu0 %344
    %v347 = vsel %vm217, %v345, 0
    %349 = vmatprep.subr.bf16.mxu0 0
    %350 = vmatpush1.bf16.msra.mxu0 %v213
    %351 = vmatprep.subr.bf16.mxu0 0
    %352 = vmatpush1.bf16.msra.mxu0 %v214
    %353 = vmatprep.subr.bf16.mxu0 0
    %354 = vmatpush1.bf16.msra.mxu0 0
    %355 = vmatprep.subr.bf16.mxu0 0
    %356 = vmatpush1.bf16.msra.mxu0 0
    %357 = vmatprep.subr.bf16.mxu0 0
    %358 = vmatpush1.bf16.msra.mxu0 0
    %359 = vmatprep.subr.bf16.mxu0 0
    %360 = vmatpush1.bf16.msra.mxu0 0
    %361 = vmatprep.subr.bf16.mxu0 0
    %362 = vmatpush1.bf16.msra.mxu0 0
    %363 = vmatprep.subr.bf16.mxu0 0
    %364 = vmatpush1.bf16.msra.mxu0 0
    %365 = vmatprep.subr.bf16.mxu0 0
    %366 = vmatpush1.bf16.msra.mxu0 0
    %367 = vmatprep.subr.bf16.mxu0 0
    %368 = vmatpush1.bf16.msra.mxu0 0
    %369 = vmatprep.subr.bf16.mxu0 0
    %370 = vmatpush1.bf16.msra.mxu0 0
    %371 = vmatprep.subr.bf16.mxu0 0
    %372 = vmatpush1.bf16.msra.mxu0 0
    %373 = vmatprep.subr.bf16.mxu0 0
    %374 = vmatpush1.bf16.msra.mxu0 0
    %375 = vmatprep.subr.bf16.mxu0 0
    %376 = vmatpush1.bf16.msra.mxu0 0
    %377 = vmatprep.subr.bf16.mxu0 0
    %378 = vmatpush1.bf16.msra.mxu0 0
    %379 = vmatprep.subr.bf16.mxu0 0
    %380 = vmatpush1.bf16.msra.mxu0 0
    %381 = vmatprep.mubr.bf16.mxu0 0
    %382 = vmatmul.mubr.bf16.gmra.mrb[0].mxu0 %v347
    %v383 = vpop.f32.mrb[0].mxu0
    %v384 = vadd.f32 0.0, %v383
    %v385 = vpop.f32.mrb[0].mxu0
    %v386 = vpop.f32.mrb[0].mxu0
    %v387 = vpop.f32.mrb[0].mxu0
    %388 = vdwg.mxu0
    %v390 = vrot.slane %v384, 7
    %v393 = vadd.f32 %v196, %v390
    %v394 = vadd.f32 %v199, %v384
    %v395 = vxor.u32 %v393, 2147483648
    %v396 = vxor.u32 %v394, 2147483648
    %v397 = vmul.f32 %v395, 1.442695
    %v398 = vpow.pop %v397
    %v399 = vmul.f32 %v396, 1.442695
    %v400 = vpow.pop %v399
    %v401 = vadd.f32 %v398, 1.0
    %v402 = vadd.f32 %v400, 1.0
    %v403 = vrcp.pop %v401
    %v404 = vmul.f32 1.0, %v403
    %v405 = vrcp.pop %v402
    %v406 = vmul.f32 1.0, %v405
    %v407 = vtanh.pop %v393
    %v408 = vtanh.pop %v394
    %v411 = vrot.slane %v309, 7
    %v412 = vrot.slane %v310, 7
    %v415 = vmul.f32 %v404, %v411
    %v416 = vmul.f32 %v406, %v412
    %419 = vrot.lane.b32.xlu0 %v407, 64
    %v420 = vpop.permute.xlu0 %419
    %421 = vrot.lane.b32.xlu0 %v408, 64
    %v422 = vpop.permute.xlu0 %421
    %v425 = vmul.f32 %v404, %v420
    %v426 = vmul.f32 %v406, %v422
    %429 = vrot.lane.b32.xlu0 %v425, 32
    %v430 = vpop.permute.xlu0 %429
    %431 = vrot.lane.b32.xlu0 %v426, 32
    %v432 = vpop.permute.xlu0 %431
    %v435 = vadd.f32 %v415, %v430
    %v436 = vadd.f32 %v416, %v432
    %v437 = vtanh.pop %v435
    %v438 = vtanh.pop %v436
    %441 = vrot.lane.b32.xlu0 %v437, 64
    %v442 = vpop.permute.xlu0 %441
    %443 = vrot.lane.b32.xlu0 %v438, 64
    %v444 = vpop.permute.xlu0 %443
    %v447 = vmul.f32 %v404, %v442
    %v448 = vmul.f32 %v406, %v444
    %451 = vrot.lane.b32.xlu0 %v447, 32
    %v452 = vpop.permute.xlu0 %451
    %453 = vrot.lane.b32.xlu0 %v448, 32
    %v454 = vpop.permute.xlu0 %453
    %vm457 = vcmask 254977
    %458 = vst.msk [vmem:[#allocation2] sm:$0x2] %vm457, %v452
    %459 = vst.msk [vmem:[#allocation2 + $0x8] sm:$0x2] %vm457, %v454
    %v460 = vpack.c.bf16 %v447, %v447
    %v461 = vpack.c.bf16 %v448, %v448
    %v464 = vunpack.c.l.b16 %v460
    %v465 = vunpack.c.l.b16 %v461
    %v466 = vrot.slane %v464, 1
    %v467 = vsel %vm341, %v465, %v466
    %v468 = vpack.c.b16 %v467, %v467
    %469 = vrot.lane.b32.xlu0 %v468, 32
    %v470 = vpop.permute.xlu0 %469
    %v472 = vsel %vm217, %v470, 0
    %474 = vmatprep.subr.bf16.mxu0 0
    %475 = vmatpush1.bf16.msra.mxu0 %v213
    %476 = vmatprep.subr.bf16.mxu0 0
    %477 = vmatpush1.bf16.msra.mxu0 %v214
    %478 = vmatprep.subr.bf16.mxu0 0
    %479 = vmatpush1.bf16.msra.mxu0 0
    %480 = vmatprep.subr.bf16.mxu0 0
    %481 = vmatpush1.bf16.msra.mxu0 0
    %482 = vmatprep.subr.bf16.mxu0 0
    %483 = vmatpush1.bf16.msra.mxu0 0
    %484 = vmatprep.subr.bf16.mxu0 0
    %485 = vmatpush1.bf16.msra.mxu0 0
    %486 = vmatprep.subr.bf16.mxu0 0
    %487 = vmatpush1.bf16.msra.mxu0 0
    %488 = vmatprep.subr.bf16.mxu0 0
    %489 = vmatpush1.bf16.msra.mxu0 0
    %490 = vmatprep.subr.bf16.mxu0 0
    %491 = vmatpush1.bf16.msra.mxu0 0
    %492 = vmatprep.subr.bf16.mxu0 0
    %493 = vmatpush1.bf16.msra.mxu0 0
    %494 = vmatprep.subr.bf16.mxu0 0
    %495 = vmatpush1.bf16.msra.mxu0 0
    %496 = vmatprep.subr.bf16.mxu0 0
    %497 = vmatpush1.bf16.msra.mxu0 0
    %498 = vmatprep.subr.bf16.mxu0 0
    %499 = vmatpush1.bf16.msra.mxu0 0
    %500 = vmatprep.subr.bf16.mxu0 0
    %501 = vmatpush1.bf16.msra.mxu0 0
    %502 = vmatprep.subr.bf16.mxu0 0
    %503 = vmatpush1.bf16.msra.mxu0 0
    %504 = vmatprep.subr.bf16.mxu0 0
    %505 = vmatpush1.bf16.msra.mxu0 0
    %506 = vmatprep.mubr.bf16.mxu0 0
    %507 = vmatmul.mubr.bf16.gmra.mrb[0].mxu0 %v472
    %v508 = vpop.f32.mrb[0].mxu0
    %v509 = vadd.f32 0.0, %v508
    %v510 = vpop.f32.mrb[0].mxu0
    %v511 = vpop.f32.mrb[0].mxu0
    %v512 = vpop.f32.mrb[0].mxu0
    %513 = vdwg.mxu0
    %v515 = vrot.slane %v509, 6
    %v516 = vrot.slane %v509, 7
    %v519 = vadd.f32 %v196, %v515
    %v520 = vadd.f32 %v199, %v516
    %v521 = vxor.u32 %v519, 2147483648
    %v522 = vxor.u32 %v520, 2147483648
    %v523 = vmul.f32 %v521, 1.442695
    %v524 = vpow.pop %v523
    %v525 = vmul.f32 %v522, 1.442695
    %v526 = vpow.pop %v525
    %v527 = vadd.f32 %v524, 1.0
    %v528 = vadd.f32 %v526, 1.0
    %v529 = vrcp.pop %v527
    %v530 = vmul.f32 1.0, %v529
    %v531 = vrcp.pop %v528
    %v532 = vmul.f32 1.0, %v531
    %v533 = vtanh.pop %v519
    %v534 = vtanh.pop %v520
    %v537 = vrot.slane %v435, 7
    %v538 = vrot.slane %v436, 7
    %v541 = vmul.f32 %v530, %v537
    %v542 = vmul.f32 %v532, %v538
    %545 = vrot.lane.b32.xlu0 %v533, 64
    %v546 = vpop.permute.xlu0 %545
    %547 = vrot.lane.b32.xlu0 %v534, 64
    %v548 = vpop.permute.xlu0 %547
    %v551 = vmul.f32 %v530, %v546
    %v552 = vmul.f32 %v532, %v548
    %555 = vrot.lane.b32.xlu0 %v551, 32
    %v556 = vpop.permute.xlu0 %555
    %557 = vrot.lane.b32.xlu0 %v552, 32
    %v558 = vpop.permute.xlu0 %557
    %v561 = vadd.f32 %v541, %v556
    %v562 = vadd.f32 %v542, %v558
    %v563 = vtanh.pop %v561
    %v564 = vtanh.pop %v562
    %567 = vrot.lane.b32.xlu0 %v563, 64
    %v568 = vpop.permute.xlu0 %567
    %569 = vrot.lane.b32.xlu0 %v564, 64
    %v570 = vpop.permute.xlu0 %569
    %v573 = vmul.f32 %v530, %v568
    %v574 = vmul.f32 %v532, %v570
    %577 = vrot.lane.b32.xlu0 %v573, 32
    %v578 = vpop.permute.xlu0 %577
    %579 = vrot.lane.b32.xlu0 %v574, 32
    %v580 = vpop.permute.xlu0 %579
    %vm583 = vcmask 256002
    %584 = vst.msk [vmem:[#allocation2] sm:$0x4] %vm583, %v578
    %585 = vst.msk [vmem:[#allocation2 + $0x8] sm:$0x4] %vm583, %v580
    %v586 = vpack.c.bf16 %v573, %v573
    %v587 = vpack.c.bf16 %v574, %v574
    %v590 = vunpack.c.l.b16 %v586
    %v591 = vunpack.c.l.b16 %v587
    %v592 = vrot.slane %v590, 2
    %v593 = vrot.slane %v591, 1
    %v594 = vsel %vm341, %v593, %v592
    %v595 = vpack.c.b16 %v594, %v594
    %596 = vrot.lane.b32.xlu0 %v595, 32
    %v597 = vpop.permute.xlu0 %596
    %v599 = vsel %vm217, %v597, 0
    %601 = vmatprep.subr.bf16.mxu0 0
    %602 = vmatpush1.bf16.msra.mxu0 %v213
    %603 = vmatprep.subr.bf16.mxu0 0
    %604 = vmatpush1.bf16.msra.mxu0 %v214
    %605 = vmatprep.subr.bf16.mxu0 0
    %606 = vmatpush1.bf16.msra.mxu0 0
    %607 = vmatprep.subr.bf16.mxu0 0
    %608 = vmatpush1.bf16.msra.mxu0 0
    %609 = vmatprep.subr.bf16.mxu0 0
    %610 = vmatpush1.bf16.msra.mxu0 0
    %611 = vmatprep.subr.bf16.mxu0 0
    %612 = vmatpush1.bf16.msra.mxu0 0
    %613 = vmatprep.subr.bf16.mxu0 0
    %614 = vmatpush1.bf16.msra.mxu0 0
    %615 = vmatprep.subr.bf16.mxu0 0
    %616 = vmatpush1.bf16.msra.mxu0 0
    %617 = vmatprep.subr.bf16.mxu0 0
    %618 = vmatpush1.bf16.msra.mxu0 0
    %619 = vmatprep.subr.bf16.mxu0 0
    %620 = vmatpush1.bf16.msra.mxu0 0
    %621 = vmatprep.subr.bf16.mxu0 0
    %622 = vmatpush1.bf16.msra.mxu0 0
    %623 = vmatprep.subr.bf16.mxu0 0
    %624 = vmatpush1.bf16.msra.mxu0 0
    %625 = vmatprep.subr.bf16.mxu0 0
    %626 = vmatpush1.bf16.msra.mxu0 0
    %627 = vmatprep.subr.bf16.mxu0 0
    %628 = vmatpush1.bf16.msra.mxu0 0
    %629 = vmatprep.subr.bf16.mxu0 0
    %630 = vmatpush1.bf16.msra.mxu0 0
    %631 = vmatprep.subr.bf16.mxu0 0
    %632 = vmatpush1.bf16.msra.mxu0 0
    %633 = vmatprep.mubr.bf16.mxu0 0
    %634 = vmatmul.mubr.bf16.gmra.mrb[0].mxu0 %v599
    %v635 = vpop.f32.mrb[0].mxu0
    %v636 = vadd.f32 0.0, %v635
    %v637 = vpop.f32.mrb[0].mxu0
    %v638 = vpop.f32.mrb[0].mxu0
    %v639 = vpop.f32.mrb[0].mxu0
    %640 = vdwg.mxu0
    %v642 = vrot.slane %v636, 5
    %v643 = vrot.slane %v636, 6
    %v646 = vadd.f32 %v196, %v642
    %v647 = vadd.f32 %v199, %v643
    %v648 = vxor.u32 %v646, 2147483648
    %v649 = vxor.u32 %v647, 2147483648
    %v650 = vmul.f32 %v648, 1.442695
    %v651 = vpow.pop %v650
    %v652 = vmul.f32 %v649, 1.442695
    %v653 = vpow.pop %v652
    %v654 = vadd.f32 %v651, 1.0
    %v655 = vadd.f32 %v653, 1.0
    %v656 = vrcp.pop %v654
    %v657 = vmul.f32 1.0, %v656
    %v658 = vrcp.pop %v655
    %v659 = vmul.f32 1.0, %v658
    %v660 = vtanh.pop %v646
    %v661 = vtanh.pop %v647
    %v664 = vrot.slane %v561, 7
    %v665 = vrot.slane %v562, 7
    %v668 = vmul.f32 %v657, %v664
    %v669 = vmul.f32 %v659, %v665
    %672 = vrot.lane.b32.xlu0 %v660, 64
    %v673 = vpop.permute.xlu0 %672
    %674 = vrot.lane.b32.xlu0 %v661, 64
    %v675 = vpop.permute.xlu0 %674
    %v678 = vmul.f32 %v657, %v673
    %v679 = vmul.f32 %v659, %v675
    %682 = vrot.lane.b32.xlu0 %v678, 32
    %v683 = vpop.permute.xlu0 %682
    %684 = vrot.lane.b32.xlu0 %v679, 32
    %v685 = vpop.permute.xlu0 %684
    %v688 = vadd.f32 %v668, %v683
    %v689 = vadd.f32 %v669, %v685
    %v690 = vtanh.pop %v688
    %v691 = vtanh.pop %v689
    %694 = vrot.lane.b32.xlu0 %v690, 64
    %v695 = vpop.permute.xlu0 %694
    %696 = vrot.lane.b32.xlu0 %v691, 64
    %v697 = vpop.permute.xlu0 %696
    %v700 = vmul.f32 %v657, %v695
    %v701 = vmul.f32 %v659, %v697
    %704 = vrot.lane.b32.xlu0 %v700, 32
    %v705 = vpop.permute.xlu0 %704
    %706 = vrot.lane.b32.xlu0 %v701, 32
    %v707 = vpop.permute.xlu0 %706
    %vm710 = vcmask 257027
    %711 = vst.msk [vmem:[#allocation2] sm:$0x8] %vm710, %v705
    %712 = vst.msk [vmem:[#allocation2 + $0x8] sm:$0x8] %vm710, %v707
    %v713 = vpack.c.bf16 %v700, %v700
    %v714 = vpack.c.bf16 %v701, %v701
    %v717 = vunpack.c.l.b16 %v713
    %v718 = vunpack.c.l.b16 %v714
    %v719 = vrot.slane %v717, 3
    %v720 = vrot.slane %v718, 2
    %v721 = vsel %vm341, %v720, %v719
    %v722 = vpack.c.b16 %v721, %v721
    %723 = vrot.lane.b32.xlu0 %v722, 32
    %v724 = vpop.permute.xlu0 %723
    %v726 = vsel %vm217, %v724, 0
    %728 = vmatprep.subr.bf16.mxu0 0
    %729 = vmatpush1.bf16.msra.mxu0 %v213
    %730 = vmatprep.subr.bf16.mxu0 0
    %731 = vmatpush1.bf16.msra.mxu0 %v214
    %732 = vmatprep.subr.bf16.mxu0 0
    %733 = vmatpush1.bf16.msra.mxu0 0
    %734 = vmatprep.subr.bf16.mxu0 0
    %735 = vmatpush1.bf16.msra.mxu0 0
    %736 = vmatprep.subr.bf16.mxu0 0
    %737 = vmatpush1.bf16.msra.mxu0 0
    %738 = vmatprep.subr.bf16.mxu0 0
    %739 = vmatpush1.bf16.msra.mxu0 0
    %740 = vmatprep.subr.bf16.mxu0 0
    %741 = vmatpush1.bf16.msra.mxu0 0
    %742 = vmatprep.subr.bf16.mxu0 0
    %743 = vmatpush1.bf16.msra.mxu0 0
    %744 = vmatprep.subr.bf16.mxu0 0
    %745 = vmatpush1.bf16.msra.mxu0 0
    %746 = vmatprep.subr.bf16.mxu0 0
    %747 = vmatpush1.bf16.msra.mxu0 0
    %748 = vmatprep.subr.bf16.mxu0 0
    %749 = vmatpush1.bf16.msra.mxu0 0
    %750 = vmatprep.subr.bf16.mxu0 0
    %751 = vmatpush1.bf16.msra.mxu0 0
    %752 = vmatprep.subr.bf16.mxu0 0
    %753 = vmatpush1.bf16.msra.mxu0 0
    %754 = vmatprep.subr.bf16.mxu0 0
    %755 = vmatpush1.bf16.msra.mxu0 0
    %756 = vmatprep.subr.bf16.mxu0 0
    %757 = vmatpush1.bf16.msra.mxu0 0
    %758 = vmatprep.subr.bf16.mxu0 0
    %759 = vmatpush1.bf16.msra.mxu0 0
    %760 = vmatprep.mubr.bf16.mxu0 0
    %761 = vmatmul.mubr.bf16.gmra.mrb[0].mxu0 %v726
    %v762 = vpop.f32.mrb[0].mxu0
    %v763 = vadd.f32 0.0, %v762
    %v764 = vpop.f32.mrb[0].mxu0
    %v765 = vpop.f32.mrb[0].mxu0
    %v766 = vpop.f32.mrb[0].mxu0
    %767 = vdwg.mxu0
    %v769 = vrot.slane %v763, 4
    %v770 = vrot.slane %v763, 5
    %v773 = vadd.f32 %v196, %v769
    %v774 = vadd.f32 %v199, %v770
    %v775 = vxor.u32 %v773, 2147483648
    %v776 = vxor.u32 %v774, 2147483648
    %v777 = vmul.f32 %v775, 1.442695
    %v778 = vpow.pop %v777
    %v779 = vmul.f32 %v776, 1.442695
    %v780 = vpow.pop %v779
    %v781 = vadd.f32 %v778, 1.0
    %v782 = vadd.f32 %v780, 1.0
    %v783 = vrcp.pop %v781
    %v784 = vmul.f32 1.0, %v783
    %v785 = vrcp.pop %v782
    %v786 = vmul.f32 1.0, %v785
    %v787 = vtanh.pop %v773
    %v788 = vtanh.pop %v774
    %v791 = vrot.slane %v688, 7
    %v792 = vrot.slane %v689, 7
    %v795 = vmul.f32 %v784, %v791
    %v796 = vmul.f32 %v786, %v792
    %799 = vrot.lane.b32.xlu0 %v787, 64
    %v800 = vpop.permute.xlu0 %799
    %801 = vrot.lane.b32.xlu0 %v788, 64
    %v802 = vpop.permute.xlu0 %801
    %v805 = vmul.f32 %v784, %v800
    %v806 = vmul.f32 %v786, %v802
    %809 = vrot.lane.b32.xlu0 %v805, 32
    %v810 = vpop.permute.xlu0 %809
    %811 = vrot.lane.b32.xlu0 %v806, 32
    %v812 = vpop.permute.xlu0 %811
    %v815 = vadd.f32 %v795, %v810
    %v816 = vadd.f32 %v796, %v812
    %v817 = vtanh.pop %v815
    %v818 = vtanh.pop %v816
    %821 = vrot.lane.b32.xlu0 %v817, 64
    %v822 = vpop.permute.xlu0 %821
    %823 = vrot.lane.b32.xlu0 %v818, 64
    %v824 = vpop.permute.xlu0 %823
    %v827 = vmul.f32 %v784, %v822
    %v828 = vmul.f32 %v786, %v824
    %831 = vrot.lane.b32.xlu0 %v827, 32
    %v832 = vpop.permute.xlu0 %831
    %833 = vrot.lane.b32.xlu0 %v828, 32
    %v834 = vpop.permute.xlu0 %833
    %vm837 = vcmask 258052
    %838 = vst.msk [vmem:[#allocation2] sm:$0x10] %vm837, %v832
    %839 = vst.msk [vmem:[#allocation2 + $0x8] sm:$0x10] %vm837, %v834
    %v840 = vpack.c.bf16 %v827, %v827
    %v841 = vpack.c.bf16 %v828, %v828
    %v844 = vunpack.c.l.b16 %v840
    %v845 = vunpack.c.l.b16 %v841
    %v846 = vrot.slane %v844, 4
    %v847 = vrot.slane %v845, 3
    %v848 = vsel %vm341, %v847, %v846
    %v849 = vpack.c.b16 %v848, %v848
    %850 = vrot.lane.b32.xlu0 %v849, 32
    %v851 = vpop.permute.xlu0 %850
    %v853 = vsel %vm217, %v851, 0
    %855 = vmatprep.subr.bf16.mxu0 0
    %856 = vmatpush1.bf16.msra.mxu0 %v213
    %857 = vmatprep.subr.bf16.mxu0 0
    %858 = vmatpush1.bf16.msra.mxu0 %v214
    %859 = vmatprep.subr.bf16.mxu0 0
    %860 = vmatpush1.bf16.msra.mxu0 0
    %861 = vmatprep.subr.bf16.mxu0 0
    %862 = vmatpush1.bf16.msra.mxu0 0
    %863 = vmatprep.subr.bf16.mxu0 0
    %864 = vmatpush1.bf16.msra.mxu0 0
    %865 = vmatprep.subr.bf16.mxu0 0
    %866 = vmatpush1.bf16.msra.mxu0 0
    %867 = vmatprep.subr.bf16.mxu0 0
    %868 = vmatpush1.bf16.msra.mxu0 0
    %869 = vmatprep.subr.bf16.mxu0 0
    %870 = vmatpush1.bf16.msra.mxu0 0
    %871 = vmatprep.subr.bf16.mxu0 0
    %872 = vmatpush1.bf16.msra.mxu0 0
    %873 = vmatprep.subr.bf16.mxu0 0
    %874 = vmatpush1.bf16.msra.mxu0 0
    %875 = vmatprep.subr.bf16.mxu0 0
    %876 = vmatpush1.bf16.msra.mxu0 0
    %877 = vmatprep.subr.bf16.mxu0 0
    %878 = vmatpush1.bf16.msra.mxu0 0
    %879 = vmatprep.subr.bf16.mxu0 0
    %880 = vmatpush1.bf16.msra.mxu0 0
    %881 = vmatprep.subr.bf16.mxu0 0
    %882 = vmatpush1.bf16.msra.mxu0 0
    %883 = vmatprep.subr.bf16.mxu0 0
    %884 = vmatpush1.bf16.msra.mxu0 0
    %885 = vmatprep.subr.bf16.mxu0 0
    %886 = vmatpush1.bf16.msra.mxu0 0
    %887 = vmatprep.mubr.bf16.mxu0 0
    %888 = vmatmul.mubr.bf16.gmra.mrb[0].mxu0 %v853
    %v889 = vpop.f32.mrb[0].mxu0
    %v890 = vadd.f32 0.0, %v889
    %v891 = vpop.f32.mrb[0].mxu0
    %v892 = vpop.f32.mrb[0].mxu0
    %v893 = vpop.f32.mrb[0].mxu0
    %894 = vdwg.mxu0
    %v896 = vrot.slane %v890, 3
    %v897 = vrot.slane %v890, 4
    %v900 = vadd.f32 %v196, %v896
    %v901 = vadd.f32 %v199, %v897
    %v902 = vxor.u32 %v900, 2147483648
    %v903 = vxor.u32 %v901, 2147483648
    %v904 = vmul.f32 %v902, 1.442695
    %v905 = vpow.pop %v904
    %v906 = vmul.f32 %v903, 1.442695
    %v907 = vpow.pop %v906
    %v908 = vadd.f32 %v905, 1.0
    %v909 = vadd.f32 %v907, 1.0
    %v910 = vrcp.pop %v908
    %v911 = vmul.f32 1.0, %v910
    %v912 = vrcp.pop %v909
    %v913 = vmul.f32 1.0, %v912
    %v914 = vtanh.pop %v900
    %v915 = vtanh.pop %v901
    %v918 = vrot.slane %v815, 7
    %v919 = vrot.slane %v816, 7
    %v922 = vmul.f32 %v911, %v918
    %v923 = vmul.f32 %v913, %v919
    %926 = vrot.lane.b32.xlu0 %v914, 64
    %v927 = vpop.permute.xlu0 %926
    %928 = vrot.lane.b32.xlu0 %v915, 64
    %v929 = vpop.permute.xlu0 %928
    %v932 = vmul.f32 %v911, %v927
    %v933 = vmul.f32 %v913, %v929
    %936 = vrot.lane.b32.xlu0 %v932, 32
    %v937 = vpop.permute.xlu0 %936
    %938 = vrot.lane.b32.xlu0 %v933, 32
    %v939 = vpop.permute.xlu0 %938
    %v942 = vadd.f32 %v922, %v937
    %v943 = vadd.f32 %v923, %v939
    %v944 = vtanh.pop %v942
    %v945 = vtanh.pop %v943
    %948 = vrot.lane.b32.xlu0 %v944, 64
    %v949 = vpop.permute.xlu0 %948
    %950 = vrot.lane.b32.xlu0 %v945, 64
    %v951 = vpop.permute.xlu0 %950
    %v954 = vmul.f32 %v911, %v949
    %v955 = vmul.f32 %v913, %v951
    %958 = vrot.lane.b32.xlu0 %v954, 32
    %v959 = vpop.permute.xlu0 %958
    %960 = vrot.lane.b32.xlu0 %v955, 32
    %v961 = vpop.permute.xlu0 %960
    %vm964 = vcmask 259077
    %965 = vst.msk [vmem:[#allocation2] sm:$0x20] %vm964, %v959
    %966 = vst.msk [vmem:[#allocation2 + $0x8] sm:$0x20] %vm964, %v961
    %v967 = vpack.c.bf16 %v954, %v954
    %v968 = vpack.c.bf16 %v955, %v955
    %v971 = vunpack.c.l.b16 %v967
    %v972 = vunpack.c.l.b16 %v968
    %v973 = vrot.slane %v971, 5
    %v974 = vrot.slane %v972, 4
    %v975 = vsel %vm341, %v974, %v973
    %v976 = vpack.c.b16 %v975, %v975
    %977 = vrot.lane.b32.xlu0 %v976, 32
    %v978 = vpop.permute.xlu0 %977
    %v980 = vsel %vm217, %v978, 0
    %982 = vmatprep.subr.bf16.mxu0 0
    %983 = vmatpush1.bf16.msra.mxu0 %v213
    %984 = vmatprep.subr.bf16.mxu0 0
    %985 = vmatpush1.bf16.msra.mxu0 %v214
    %986 = vmatprep.subr.bf16.mxu0 0
    %987 = vmatpush1.bf16.msra.mxu0 0
    %988 = vmatprep.subr.bf16.mxu0 0
    %989 = vmatpush1.bf16.msra.mxu0 0
    %990 = vmatprep.subr.bf16.mxu0 0
    %991 = vmatpush1.bf16.msra.mxu0 0
    %992 = vmatprep.subr.bf16.mxu0 0
    %993 = vmatpush1.bf16.msra.mxu0 0
    %994 = vmatprep.subr.bf16.mxu0 0
    %995 = vmatpush1.bf16.msra.mxu0 0
    %996 = vmatprep.subr.bf16.mxu0 0
    %997 = vmatpush1.bf16.msra.mxu0 0
    %998 = vmatprep.subr.bf16.mxu0 0
    %999 = vmatpush1.bf16.msra.mxu0 0
    %1000 = vmatprep.subr.bf16.mxu0 0
    %1001 = vmatpush1.bf16.msra.mxu0 0
    %1002 = vmatprep.subr.bf16.mxu0 0
    %1003 = vmatpush1.bf16.msra.mxu0 0
    %1004 = vmatprep.subr.bf16.mxu0 0
    %1005 = vmatpush1.bf16.msra.mxu0 0
    %1006 = vmatprep.subr.bf16.mxu0 0
    %1007 = vmatpush1.bf16.msra.mxu0 0
    %1008 = vmatprep.subr.bf16.mxu0 0
    %1009 = vmatpush1.bf16.msra.mxu0 0
    %1010 = vmatprep.subr.bf16.mxu0 0
    %1011 = vmatpush1.bf16.msra.mxu0 0
    %1012 = vmatprep.subr.bf16.mxu0 0
    %1013 = vmatpush1.bf16.msra.mxu0 0
    %1014 = vmatprep.mubr.bf16.mxu0 0
    %1015 = vmatmul.mubr.bf16.gmra.mrb[0].mxu0 %v980
    %v1016 = vpop.f32.mrb[0].mxu0
    %v1017 = vadd.f32 0.0, %v1016
    %v1018 = vpop.f32.mrb[0].mxu0
    %v1019 = vpop.f32.mrb[0].mxu0
    %v1020 = vpop.f32.mrb[0].mxu0
    %1021 = vdwg.mxu0
    %v1023 = vrot.slane %v1017, 2
    %v1024 = vrot.slane %v1017, 3
    %v1027 = vadd.f32 %v196, %v1023
    %v1028 = vadd.f32 %v199, %v1024
    %v1029 = vxor.u32 %v1027, 2147483648
    %v1030 = vxor.u32 %v1028, 2147483648
    %v1031 = vmul.f32 %v1029, 1.442695
    %v1032 = vpow.pop %v1031
    %v1033 = vmul.f32 %v1030, 1.442695
    %v1034 = vpow.pop %v1033
    %v1035 = vadd.f32 %v1032, 1.0
    %v1036 = vadd.f32 %v1034, 1.0
    %v1037 = vrcp.pop %v1035
    %v1038 = vmul.f32 1.0, %v1037
    %v1039 = vrcp.pop %v1036
    %v1040 = vmul.f32 1.0, %v1039
    %v1041 = vtanh.pop %v1027
    %v1042 = vtanh.pop %v1028
    %v1045 = vrot.slane %v942, 7
    %v1046 = vrot.slane %v943, 7
    %v1049 = vmul.f32 %v1038, %v1045
    %v1050 = vmul.f32 %v1040, %v1046
    %1053 = vrot.lane.b32.xlu0 %v1041, 64
    %v1054 = vpop.permute.xlu0 %1053
    %1055 = vrot.lane.b32.xlu0 %v1042, 64
    %v1056 = vpop.permute.xlu0 %1055
    %v1059 = vmul.f32 %v1038, %v1054
    %v1060 = vmul.f32 %v1040, %v1056
    %1063 = vrot.lane.b32.xlu0 %v1059, 32
    %v1064 = vpop.permute.xlu0 %1063
    %1065 = vrot.lane.b32.xlu0 %v1060, 32
    %v1066 = vpop.permute.xlu0 %1065
    %v1069 = vadd.f32 %v1049, %v1064
    %v1070 = vadd.f32 %v1050, %v1066
    %v1071 = vtanh.pop %v1069
    %v1072 = vtanh.pop %v1070
    %1075 = vrot.lane.b32.xlu0 %v1071, 64
    %v1076 = vpop.permute.xlu0 %1075
    %1077 = vrot.lane.b32.xlu0 %v1072, 64
    %v1078 = vpop.permute.xlu0 %1077
    %v1081 = vmul.f32 %v1038, %v1076
    %v1082 = vmul.f32 %v1040, %v1078
    %1085 = vrot.lane.b32.xlu0 %v1081, 32
    %v1086 = vpop.permute.xlu0 %1085
    %1087 = vrot.lane.b32.xlu0 %v1082, 32
    %v1088 = vpop.permute.xlu0 %1087
    %vm1091 = vcmask 260102
    %1092 = vst.msk [vmem:[#allocation2] sm:$0x40] %vm1091, %v1086
    %1093 = vst.msk [vmem:[#allocation2 + $0x8] sm:$0x40] %vm1091, %v1088
    %v1094 = vpack.c.bf16 %v1081, %v1081
    %v1095 = vpack.c.bf16 %v1082, %v1082
    %v1098 = vunpack.c.l.b16 %v1094
    %v1099 = vunpack.c.l.b16 %v1095
    %v1100 = vrot.slane %v1098, 6
    %v1101 = vrot.slane %v1099, 5
    %v1102 = vsel %vm341, %v1101, %v1100
    %v1103 = vpack.c.b16 %v1102, %v1102
    %1104 = vrot.lane.b32.xlu0 %v1103, 32
    %v1105 = vpop.permute.xlu0 %1104
    %v1107 = vsel %vm217, %v1105, 0
    %1109 = vmatprep.subr.bf16.mxu0 0
    %1110 = vmatpush1.bf16.msra.mxu0 %v213
    %1111 = vmatprep.subr.bf16.mxu0 0
    %1112 = vmatpush1.bf16.msra.mxu0 %v214
    %1113 = vmatprep.subr.bf16.mxu0 0
    %1114 = vmatpush1.bf16.msra.mxu0 0
    %1115 = vmatprep.subr.bf16.mxu0 0
    %1116 = vmatpush1.bf16.msra.mxu0 0
    %1117 = vmatprep.subr.bf16.mxu0 0
    %1118 = vmatpush1.bf16.msra.mxu0 0
    %1119 = vmatprep.subr.bf16.mxu0 0
    %1120 = vmatpush1.bf16.msra.mxu0 0
    %1121 = vmatprep.subr.bf16.mxu0 0
    %1122 = vmatpush1.bf16.msra.mxu0 0
    %1123 = vmatprep.subr.bf16.mxu0 0
    %1124 = vmatpush1.bf16.msra.mxu0 0
    %1125 = vmatprep.subr.bf16.mxu0 0
    %1126 = vmatpush1.bf16.msra.mxu0 0
    %1127 = vmatprep.subr.bf16.mxu0 0
    %1128 = vmatpush1.bf16.msra.mxu0 0
    %1129 = vmatprep.subr.bf16.mxu0 0
    %1130 = vmatpush1.bf16.msra.mxu0 0
    %1131 = vmatprep.subr.bf16.mxu0 0
    %1132 = vmatpush1.bf16.msra.mxu0 0
    %1133 = vmatprep.subr.bf16.mxu0 0
    %1134 = vmatpush1.bf16.msra.mxu0 0
    %1135 = vmatprep.subr.bf16.mxu0 0
    %1136 = vmatpush1.bf16.msra.mxu0 0
    %1137 = vmatprep.subr.bf16.mxu0 0
    %1138 = vmatpush1.bf16.msra.mxu0 0
    %1139 = vmatprep.subr.bf16.mxu0 0
    %1140 = vmatpush1.bf16.msra.mxu0 0
    %1141 = vmatprep.mubr.bf16.mxu0 0
    %1142 = vmatmul.mubr.bf16.gmra.mrb[0].mxu0 %v1107
    %v1143 = vpop.f32.mrb[0].mxu0
    %v1144 = vadd.f32 0.0, %v1143
    %v1145 = vpop.f32.mrb[0].mxu0
    %v1146 = vpop.f32.mrb[0].mxu0
    %v1147 = vpop.f32.mrb[0].mxu0
    %1148 = vdwg.mxu0
    %v1150 = vrot.slane %v1144, 1
    %v1151 = vrot.slane %v1144, 2
    %v1154 = vadd.f32 %v196, %v1150
    %v1155 = vadd.f32 %v199, %v1151
    %v1156 = vxor.u32 %v1154, 2147483648
    %v1157 = vxor.u32 %v1155, 2147483648
    %v1158 = vmul.f32 %v1156, 1.442695
    %v1159 = vpow.pop %v1158
    %v1160 = vmul.f32 %v1157, 1.442695
    %v1161 = vpow.pop %v1160
    %v1162 = vadd.f32 %v1159, 1.0
    %v1163 = vadd.f32 %v1161, 1.0
    %v1164 = vrcp.pop %v1162
    %v1165 = vmul.f32 1.0, %v1164
    %v1166 = vrcp.pop %v1163
    %v1167 = vmul.f32 1.0, %v1166
    %v1168 = vtanh.pop %v1154
    %v1169 = vtanh.pop %v1155
    %v1172 = vrot.slane %v1069, 7
    %v1173 = vrot.slane %v1070, 7
    %v1176 = vmul.f32 %v1165, %v1172
    %v1177 = vmul.f32 %v1167, %v1173
    %1180 = vrot.lane.b32.xlu0 %v1168, 64
    %v1181 = vpop.permute.xlu0 %1180
    %1182 = vrot.lane.b32.xlu0 %v1169, 64
    %v1183 = vpop.permute.xlu0 %1182
    %v1186 = vmul.f32 %v1165, %v1181
    %v1187 = vmul.f32 %v1167, %v1183
    %1190 = vrot.lane.b32.xlu0 %v1186, 32
    %v1191 = vpop.permute.xlu0 %1190
    %1192 = vrot.lane.b32.xlu0 %v1187, 32
    %v1193 = vpop.permute.xlu0 %1192
    %v1196 = vadd.f32 %v1176, %v1191
    %v1197 = vadd.f32 %v1177, %v1193
    %v1198 = vtanh.pop %v1196
    %v1199 = vtanh.pop %v1197
    %1202 = vrot.lane.b32.xlu0 %v1198, 64
    %v1203 = vpop.permute.xlu0 %1202
    %1204 = vrot.lane.b32.xlu0 %v1199, 64
    %v1205 = vpop.permute.xlu0 %1204
    %v1208 = vmul.f32 %v1165, %v1203
    %v1209 = vmul.f32 %v1167, %v1205
    %1212 = vrot.lane.b32.xlu0 %v1208, 32
    %v1213 = vpop.permute.xlu0 %1212
    %1214 = vrot.lane.b32.xlu0 %v1209, 32
    %v1215 = vpop.permute.xlu0 %1214
    %vm1218 = vcmask 261127
    %1219 = vst.msk [vmem:[#allocation2] sm:$0x80] %vm1218, %v1213
    %1220 = vst.msk [vmem:[#allocation2 + $0x8] sm:$0x80] %vm1218, %v1215
    %v1221 = vrot.slane %v1209, 7
    %1222 = vrot.lane.b32.xlu0 %v1221, 32
    %v1223 = vpop.permute.xlu0 %1222
    %1225 = vst.msk [vmem:[#allocation15 - $0x7] sm:$0x80] %vm1218, %v1213
    %1226 = vst.msk [vmem:[#allocation15 + $0x1] sm:$0x1] %vm331, %v1223
    %v1229 = vrot.slane %v1197, 7
    %1230 = vrot.lane.b32.xlu0 %v1196, 96
    %v1231 = vpop.permute.xlu0 %1230
    %1232 = vrot.lane.b32.xlu0 %v1229, 96
    %v1233 = vpop.permute.xlu0 %1232
    %1236 = vst.msk [vmem:[#allocation17 - $0x7] sm:$0x80] %vm1218, %v1231
    %1237 = vst.msk [vmem:[#allocation17 + $0x1] sm:$0x1] %vm331, %v1233
    %v1238 = vld [vmem:[#allocation2] sm:$0xff]
    %v1239 = vld [vmem:[#allocation2 + $0x8] sm:$0xff]
    %v1240 = vld [vmem:[#allocation9] sm:$0xf]
    %v1241 = vld [vmem:[#allocation9 + $0x4] sm:$0xf]
    %v1242 = vld [vmem:[#allocation9 + $0x8] sm:$0xf]
    %v1243 = vld [vmem:[#allocation9 + $0xc] sm:$0xf]
    %v1244 = vld [vmem:[%s7] sm:$0xf]
    %v1245 = vld [vmem:[%s7 + $0x4] sm:$0xf]
    %v1246 = vld [vmem:[%s7 + $0x8] sm:$0xf]
    %v1247 = vld [vmem:[%s7 + $0xc] sm:$0xf]
    %v1248 = vld [vmem:[%s8] sm:$0x1]
    %v1249 = vpack.c.bf16 %v1239, %v1238
    %v1251 = vlaneseq
    %v1252 = vshrl.u32 %v1251, 7
    %v1253 = vsub.s32 0, %v1252
    %v1254 = vrot.slane %v1248, %v1253
    %v1260 = vunpack.c.l.b16 %v1240
    %v1261 = vunpack.c.l.b16 %v1241
    %v1262 = vunpack.c.l.b16 %v1242
    %v1263 = vunpack.c.l.b16 %v1243
    %v1264 = vpack.c.b16 %v1261, %v1260
    %v1265 = vpack.c.b16 %v1263, %v1262
    %v1269 = vsel %vm217, %v1249, 0
    %1271 = vmatprep.subr.bf16.mxu0 0
    %1272 = vmatpush1.bf16.msra.mxu0 %v1264
    %1273 = vmatprep.subr.bf16.mxu0 0
    %1274 = vmatpush1.bf16.msra.mxu0 %v1265
    %1275 = vmatprep.subr.bf16.mxu0 0
    %1276 = vmatpush1.bf16.msra.mxu0 0
    %1277 = vmatprep.subr.bf16.mxu0 0
    %1278 = vmatpush1.bf16.msra.mxu0 0
    %1279 = vmatprep.subr.bf16.mxu0 0
    %1280 = vmatpush1.bf16.msra.mxu0 0
    %1281 = vmatprep.subr.bf16.mxu0 0
    %1282 = vmatpush1.bf16.msra.mxu0 0
    %1283 = vmatprep.subr.bf16.mxu0 0
    %1284 = vmatpush1.bf16.msra.mxu0 0
    %1285 = vmatprep.subr.bf16.mxu0 0
    %1286 = vmatpush1.bf16.msra.mxu0 0
    %1287 = vmatprep.subr.bf16.mxu0 0
    %1288 = vmatpush1.bf16.msra.mxu0 0
    %1289 = vmatprep.subr.bf16.mxu0 0
    %1290 = vmatpush1.bf16.msra.mxu0 0
    %1291 = vmatprep.subr.bf16.mxu0 0
    %1292 = vmatpush1.bf16.msra.mxu0 0
    %1293 = vmatprep.subr.bf16.mxu0 0
    %1294 = vmatpush1.bf16.msra.mxu0 0
    %1295 = vmatprep.subr.bf16.mxu0 0
    %1296 = vmatpush1.bf16.msra.mxu0 0
    %1297 = vmatprep.subr.bf16.mxu0 0
    %1298 = vmatpush1.bf16.msra.mxu0 0
    %1299 = vmatprep.subr.bf16.mxu0 0
    %1300 = vmatpush1.bf16.msra.mxu0 0
    %1301 = vmatprep.subr.bf16.mxu0 0
    %1302 = vmatpush1.bf16.msra.mxu0 0
    %1303 = vmatprep.mubr.bf16.mxu0 0
    %1304 = vmatmul.mubr.bf16.gmra.mrb[0].mxu0 %v1269
    %v1305 = vpop.f32.mrb[0].mxu0
    %v1306 = vadd.f32 %v1254, %v1305
    %v1307 = vpop.f32.mrb[0].mxu0
    %v1308 = vpop.f32.mrb[0].mxu0
    %v1309 = vadd.f32 %v1254, %v1308
    %v1310 = vpop.f32.mrb[0].mxu0
    %1311 = vdwg.mxu0
    %s1312 = scalar_lea.vmem [#allocation3], 2
    %v1313 = vld [vmem:[%s1312] sm:$0x3]
    %s1314 = scalar_lea.vmem [#allocation6], 2
    %v1315 = vld [vmem:[%s1314] sm:$0x3]
    %v1316 = vpack.c.bf16 %v1313, %v1313
    %v1321 = vunpack.c.l.b16 %v1244
    %v1322 = vunpack.c.l.b16 %v1245
    %v1323 = vunpack.c.l.b16 %v1246
    %v1324 = vunpack.c.l.b16 %v1247
    %v1325 = vpack.c.b16 %v1322, %v1321
    %v1326 = vpack.c.b16 %v1324, %v1323
    %v1330 = vsel %vm217, %v1316, 0
    %1332 = vmatprep.subr.bf16.mxu0 0
    %1333 = vmatpush1.bf16.msra.mxu0 %v1325
    %1334 = vmatprep.subr.bf16.mxu0 0
    %1335 = vmatpush1.bf16.msra.mxu0 %v1326
    %1336 = vmatprep.subr.bf16.mxu0 0
    %1337 = vmatpush1.bf16.msra.mxu0 0
    %1338 = vmatprep.subr.bf16.mxu0 0
    %1339 = vmatpush1.bf16.msra.mxu0 0
    %1340 = vmatprep.subr.bf16.mxu0 0
    %1341 = vmatpush1.bf16.msra.mxu0 0
    %1342 = vmatprep.subr.bf16.mxu0 0
    %1343 = vmatpush1.bf16.msra.mxu0 0
    %1344 = vmatprep.subr.bf16.mxu0 0
    %1345 = vmatpush1.bf16.msra.mxu0 0
    %1346 = vmatprep.subr.bf16.mxu0 0
    %1347 = vmatpush1.bf16.msra.mxu0 0
    %1348 = vmatprep.subr.bf16.mxu0 0
    %1349 = vmatpush1.bf16.msra.mxu0 0
    %1350 = vmatprep.subr.bf16.mxu0 0
    %1351 = vmatpush1.bf16.msra.mxu0 0
    %1352 = vmatprep.subr.bf16.mxu0 0
    %1353 = vmatpush1.bf16.msra.mxu0 0
    %1354 = vmatprep.subr.bf16.mxu0 0
    %1355 = vmatpush1.bf16.msra.mxu0 0
    %1356 = vmatprep.subr.bf16.mxu0 0
    %1357 = vmatpush1.bf16.msra.mxu0 0
    %1358 = vmatprep.subr.bf16.mxu0 0
    %1359 = vmatpush1.bf16.msra.mxu0 0
    %1360 = vmatprep.subr.bf16.mxu0 0
    %1361 = vmatpush1.bf16.msra.mxu0 0
    %1362 = vmatprep.subr.bf16.mxu0 0
    %1363 = vmatpush1.bf16.msra.mxu0 0
    %1364 = vmatprep.mubr.bf16.mxu0 0
    %1365 = vmatmul.mubr.bf16.gmra.mrb[0].mxu0 %v1330
    %v1366 = vpop.f32.mrb[0].mxu0
    %v1367 = vadd.f32 0.0, %v1366
    %v1368 = vpop.f32.mrb[0].mxu0
    %v1369 = vpop.f32.mrb[0].mxu0
    %v1370 = vpop.f32.mrb[0].mxu0
    %1371 = vdwg.mxu0
    %v1373 = vrot.slane %v1367, 1
    %v1376 = vadd.f32 %v1306, %v1367
    %v1377 = vadd.f32 %v1309, %v1373
    %v1378 = vxor.u32 %v1376, 2147483648
    %v1379 = vxor.u32 %v1377, 2147483648
    %v1380 = vmul.f32 %v1378, 1.442695
    %v1381 = vpow.pop %v1380
    %v1382 = vmul.f32 %v1379, 1.442695
    %v1383 = vpow.pop %v1382
    %v1384 = vadd.f32 %v1381, 1.0
    %v1385 = vadd.f32 %v1383, 1.0
    %v1386 = vrcp.pop %v1384
    %v1387 = vmul.f32 1.0, %v1386
    %v1388 = vrcp.pop %v1385
    %v1389 = vmul.f32 1.0, %v1388
    %v1390 = vtanh.pop %v1376
    %v1391 = vtanh.pop %v1377
    %v1393 = vrot.slane %v1315, 1
    %1394 = vrot.lane.b32.xlu0 %v1315, 32
    %v1395 = vpop.permute.xlu0 %1394
    %1396 = vrot.lane.b32.xlu0 %v1393, 32
    %v1397 = vpop.permute.xlu0 %1396
    %v1400 = vmul.f32 %v1387, %v1395
    %v1401 = vmul.f32 %v1389, %v1397
    %1404 = vrot.lane.b32.xlu0 %v1390, 64
    %v1405 = vpop.permute.xlu0 %1404
    %1406 = vrot.lane.b32.xlu0 %v1391, 64
    %v1407 = vpop.permute.xlu0 %1406
    %v1410 = vmul.f32 %v1387, %v1405
    %v1411 = vmul.f32 %v1389, %v1407
    %1414 = vrot.lane.b32.xlu0 %v1410, 32
    %v1415 = vpop.permute.xlu0 %1414
    %1416 = vrot.lane.b32.xlu0 %v1411, 32
    %v1417 = vpop.permute.xlu0 %1416
    %v1420 = vadd.f32 %v1400, %v1415
    %v1421 = vadd.f32 %v1401, %v1417
    %v1422 = vtanh.pop %v1420
    %v1423 = vtanh.pop %v1421
    %1426 = vrot.lane.b32.xlu0 %v1422, 64
    %v1427 = vpop.permute.xlu0 %1426
    %1428 = vrot.lane.b32.xlu0 %v1423, 64
    %v1429 = vpop.permute.xlu0 %1428
    %v1432 = vmul.f32 %v1387, %v1427
    %v1433 = vmul.f32 %v1389, %v1429
    %1436 = vrot.lane.b32.xlu0 %v1432, 32
    %v1437 = vpop.permute.xlu0 %1436
    %1438 = vrot.lane.b32.xlu0 %v1433, 32
    %v1439 = vpop.permute.xlu0 %1438
    %1442 = vst.msk [vmem:[#allocation2] sm:$0x1] %vm331, %v1437
    %1443 = vst.msk [vmem:[#allocation2 + $0x8] sm:$0x1] %vm331, %v1439
    %v1444 = vpack.c.bf16 %v1432, %v1432
    %v1445 = vpack.c.bf16 %v1433, %v1433
    %v1448 = vunpack.c.l.b16 %v1444
    %v1449 = vunpack.c.l.b16 %v1445
    %v1450 = vrot.slane %v1449, 7
    %v1451 = vsel %vm341, %v1450, %v1448
    %v1452 = vpack.c.b16 %v1451, %v1451
    %1453 = vrot.lane.b32.xlu0 %v1452, 32
    %v1454 = vpop.permute.xlu0 %1453
    %v1456 = vsel %vm217, %v1454, 0
    %1458 = vmatprep.subr.bf16.mxu0 0
    %1459 = vmatpush1.bf16.msra.mxu0 %v1325
    %1460 = vmatprep.subr.bf16.mxu0 0
    %1461 = vmatpush1.bf16.msra.mxu0 %v1326
    %1462 = vmatprep.subr.bf16.mxu0 0
    %1463 = vmatpush1.bf16.msra.mxu0 0
    %1464 = vmatprep.subr.bf16.mxu0 0
    %1465 = vmatpush1.bf16.msra.mxu0 0
    %1466 = vmatprep.subr.bf16.mxu0 0
    %1467 = vmatpush1.bf16.msra.mxu0 0
    %1468 = vmatprep.subr.bf16.mxu0 0
    %1469 = vmatpush1.bf16.msra.mxu0 0
    %1470 = vmatprep.subr.bf16.mxu0 0
    %1471 = vmatpush1.bf16.msra.mxu0 0
    %1472 = vmatprep.subr.bf16.mxu0 0
    %1473 = vmatpush1.bf16.msra.mxu0 0
    %1474 = vmatprep.subr.bf16.mxu0 0
    %1475 = vmatpush1.bf16.msra.mxu0 0
    %1476 = vmatprep.subr.bf16.mxu0 0
    %1477 = vmatpush1.bf16.msra.mxu0 0
    %1478 = vmatprep.subr.bf16.mxu0 0
    %1479 = vmatpush1.bf16.msra.mxu0 0
    %1480 = vmatprep.subr.bf16.mxu0 0
    %1481 = vmatpush1.bf16.msra.mxu0 0
    %1482 = vmatprep.subr.bf16.mxu0 0
    %1483 = vmatpush1.bf16.msra.mxu0 0
    %1484 = vmatprep.subr.bf16.mxu0 0
    %1485 = vmatpush1.bf16.msra.mxu0 0
    %1486 = vmatprep.subr.bf16.mxu0 0
    %1487 = vmatpush1.bf16.msra.mxu0 0
    %1488 = vmatprep.subr.bf16.mxu0 0
    %1489 = vmatpush1.bf16.msra.mxu0 0
    %1490 = vmatprep.mubr.bf16.mxu0 0
    %1491 = vmatmul.mubr.bf16.gmra.mrb[0].mxu0 %v1456
    %v1492 = vpop.f32.mrb[0].mxu0
    %v1493 = vadd.f32 0.0, %v1492
    %v1494 = vpop.f32.mrb[0].mxu0
    %v1495 = vpop.f32.mrb[0].mxu0
    %v1496 = vpop.f32.mrb[0].mxu0
    %1497 = vdwg.mxu0
    %v1499 = vrot.slane %v1493, 7
    %v1502 = vadd.f32 %v1306, %v1499
    %v1503 = vadd.f32 %v1309, %v1493
    %v1504 = vxor.u32 %v1502, 2147483648
    %v1505 = vxor.u32 %v1503, 2147483648
    %v1506 = vmul.f32 %v1504, 1.442695
    %v1507 = vpow.pop %v1506
    %v1508 = vmul.f32 %v1505, 1.442695
    %v1509 = vpow.pop %v1508
    %v1510 = vadd.f32 %v1507, 1.0
    %v1511 = vadd.f32 %v1509, 1.0
    %v1512 = vrcp.pop %v1510
    %v1513 = vmul.f32 1.0, %v1512
    %v1514 = vrcp.pop %v1511
    %v1515 = vmul.f32 1.0, %v1514
    %v1516 = vtanh.pop %v1502
    %v1517 = vtanh.pop %v1503
    %v1520 = vrot.slane %v1420, 7
    %v1521 = vrot.slane %v1421, 7
    %v1524 = vmul.f32 %v1513, %v1520
    %v1525 = vmul.f32 %v1515, %v1521
    %1528 = vrot.lane.b32.xlu0 %v1516, 64
    %v1529 = vpop.permute.xlu0 %1528
    %1530 = vrot.lane.b32.xlu0 %v1517, 64
    %v1531 = vpop.permute.xlu0 %1530
    %v1534 = vmul.f32 %v1513, %v1529
    %v1535 = vmul.f32 %v1515, %v1531
    %1538 = vrot.lane.b32.xlu0 %v1534, 32
    %v1539 = vpop.permute.xlu0 %1538
    %1540 = vrot.lane.b32.xlu0 %v1535, 32
    %v1541 = vpop.permute.xlu0 %1540
    %v1544 = vadd.f32 %v1524, %v1539
    %v1545 = vadd.f32 %v1525, %v1541
    %v1546 = vtanh.pop %v1544
    %v1547 = vtanh.pop %v1545
    %1550 = vrot.lane.b32.xlu0 %v1546, 64
    %v1551 = vpop.permute.xlu0 %1550
    %1552 = vrot.lane.b32.xlu0 %v1547, 64
    %v1553 = vpop.permute.xlu0 %1552
    %v1556 = vmul.f32 %v1513, %v1551
    %v1557 = vmul.f32 %v1515, %v1553
    %1560 = vrot.lane.b32.xlu0 %v1556, 32
    %v1561 = vpop.permute.xlu0 %1560
    %1562 = vrot.lane.b32.xlu0 %v1557, 32
    %v1563 = vpop.permute.xlu0 %1562
    %1566 = vst.msk [vmem:[#allocation2] sm:$0x2] %vm457, %v1561
    %1567 = vst.msk [vmem:[#allocation2 + $0x8] sm:$0x2] %vm457, %v1563
    %v1568 = vpack.c.bf16 %v1556, %v1556
    %v1569 = vpack.c.bf16 %v1557, %v1557
    %v1572 = vunpack.c.l.b16 %v1568
    %v1573 = vunpack.c.l.b16 %v1569
    %v1574 = vrot.slane %v1572, 1
    %v1575 = vsel %vm341, %v1573, %v1574
    %v1576 = vpack.c.b16 %v1575, %v1575
    %1577 = vrot.lane.b32.xlu0 %v1576, 32
    %v1578 = vpop.permute.xlu0 %1577
    %v1580 = vsel %vm217, %v1578, 0
    %1582 = vmatprep.subr.bf16.mxu0 0
    %1583 = vmatpush1.bf16.msra.mxu0 %v1325
    %1584 = vmatprep.subr.bf16.mxu0 0
    %1585 = vmatpush1.bf16.msra.mxu0 %v1326
    %1586 = vmatprep.subr.bf16.mxu0 0
    %1587 = vmatpush1.bf16.msra.mxu0 0
    %1588 = vmatprep.subr.bf16.mxu0 0
    %1589 = vmatpush1.bf16.msra.mxu0 0
    %1590 = vmatprep.subr.bf16.mxu0 0
    %1591 = vmatpush1.bf16.msra.mxu0 0
    %1592 = vmatprep.subr.bf16.mxu0 0
    %1593 = vmatpush1.bf16.msra.mxu0 0
    %1594 = vmatprep.subr.bf16.mxu0 0
    %1595 = vmatpush1.bf16.msra.mxu0 0
    %1596 = vmatprep.subr.bf16.mxu0 0
    %1597 = vmatpush1.bf16.msra.mxu0 0
    %1598 = vmatprep.subr.bf16.mxu0 0
    %1599 = vmatpush1.bf16.msra.mxu0 0
    %1600 = vmatprep.subr.bf16.mxu0 0
    %1601 = vmatpush1.bf16.msra.mxu0 0
    %1602 = vmatprep.subr.bf16.mxu0 0
    %1603 = vmatpush1.bf16.msra.mxu0 0
    %1604 = vmatprep.subr.bf16.mxu0 0
    %1605 = vmatpush1.bf16.msra.mxu0 0
    %1606 = vmatprep.subr.bf16.mxu0 0
    %1607 = vmatpush1.bf16.msra.mxu0 0
    %1608 = vmatprep.subr.bf16.mxu0 0
    %1609 = vmatpush1.bf16.msra.mxu0 0
    %1610 = vmatprep.subr.bf16.mxu0 0
    %1611 = vmatpush1.bf16.msra.mxu0 0
    %1612 = vmatprep.subr.bf16.mxu0 0
    %1613 = vmatpush1.bf16.msra.mxu0 0
    %1614 = vmatprep.mubr.bf16.mxu0 0
    %1615 = vmatmul.mubr.bf16.gmra.mrb[0].mxu0 %v1580
    %v1616 = vpop.f32.mrb[0].mxu0
    %v1617 = vadd.f32 0.0, %v1616
    %v1618 = vpop.f32.mrb[0].mxu0
    %v1619 = vpop.f32.mrb[0].mxu0
    %v1620 = vpop.f32.mrb[0].mxu0
    %1621 = vdwg.mxu0
    %v1623 = vrot.slane %v1617, 6
    %v1624 = vrot.slane %v1617, 7
    %v1627 = vadd.f32 %v1306, %v1623
    %v1628 = vadd.f32 %v1309, %v1624
    %v1629 = vxor.u32 %v1627, 2147483648
    %v1630 = vxor.u32 %v1628, 2147483648
    %v1631 = vmul.f32 %v1629, 1.442695
    %v1632 = vpow.pop %v1631
    %v1633 = vmul.f32 %v1630, 1.442695
    %v1634 = vpow.pop %v1633
    %v1635 = vadd.f32 %v1632, 1.0
    %v1636 = vadd.f32 %v1634, 1.0
    %v1637 = vrcp.pop %v1635
    %v1638 = vmul.f32 1.0, %v1637
    %v1639 = vrcp.pop %v1636
    %v1640 = vmul.f32 1.0, %v1639
    %v1641 = vtanh.pop %v1627
    %v1642 = vtanh.pop %v1628
    %v1645 = vrot.slane %v1544, 7
    %v1646 = vrot.slane %v1545, 7
    %v1649 = vmul.f32 %v1638, %v1645
    %v1650 = vmul.f32 %v1640, %v1646
    %1653 = vrot.lane.b32.xlu0 %v1641, 64
    %v1654 = vpop.permute.xlu0 %1653
    %1655 = vrot.lane.b32.xlu0 %v1642, 64
    %v1656 = vpop.permute.xlu0 %1655
    %v1659 = vmul.f32 %v1638, %v1654
    %v1660 = vmul.f32 %v1640, %v1656
    %1663 = vrot.lane.b32.xlu0 %v1659, 32
    %v1664 = vpop.permute.xlu0 %1663
    %1665 = vrot.lane.b32.xlu0 %v1660, 32
    %v1666 = vpop.permute.xlu0 %1665
    %v1669 = vadd.f32 %v1649, %v1664
    %v1670 = vadd.f32 %v1650, %v1666
    %v1671 = vtanh.pop %v1669
    %v1672 = vtanh.pop %v1670
    %1675 = vrot.lane.b32.xlu0 %v1671, 64
    %v1676 = vpop.permute.xlu0 %1675
    %1677 = vrot.lane.b32.xlu0 %v1672, 64
    %v1678 = vpop.permute.xlu0 %1677
    %v1681 = vmul.f32 %v1638, %v1676
    %v1682 = vmul.f32 %v1640, %v1678
    %1685 = vrot.lane.b32.xlu0 %v1681, 32
    %v1686 = vpop.permute.xlu0 %1685
    %1687 = vrot.lane.b32.xlu0 %v1682, 32
    %v1688 = vpop.permute.xlu0 %1687
    %1691 = vst.msk [vmem:[#allocation2] sm:$0x4] %vm583, %v1686
    %1692 = vst.msk [vmem:[#allocation2 + $0x8] sm:$0x4] %vm583, %v1688
    %v1693 = vpack.c.bf16 %v1681, %v1681
    %v1694 = vpack.c.bf16 %v1682, %v1682
    %v1697 = vunpack.c.l.b16 %v1693
    %v1698 = vunpack.c.l.b16 %v1694
    %v1699 = vrot.slane %v1697, 2
    %v1700 = vrot.slane %v1698, 1
    %v1701 = vsel %vm341, %v1700, %v1699
    %v1702 = vpack.c.b16 %v1701, %v1701
    %1703 = vrot.lane.b32.xlu0 %v1702, 32
    %v1704 = vpop.permute.xlu0 %1703
    %v1706 = vsel %vm217, %v1704, 0
    %1708 = vmatprep.subr.bf16.mxu0 0
    %1709 = vmatpush1.bf16.msra.mxu0 %v1325
    %1710 = vmatprep.subr.bf16.mxu0 0
    %1711 = vmatpush1.bf16.msra.mxu0 %v1326
    %1712 = vmatprep.subr.bf16.mxu0 0
    %1713 = vmatpush1.bf16.msra.mxu0 0
    %1714 = vmatprep.subr.bf16.mxu0 0
    %1715 = vmatpush1.bf16.msra.mxu0 0
    %1716 = vmatprep.subr.bf16.mxu0 0
    %1717 = vmatpush1.bf16.msra.mxu0 0
    %1718 = vmatprep.subr.bf16.mxu0 0
    %1719 = vmatpush1.bf16.msra.mxu0 0
    %1720 = vmatprep.subr.bf16.mxu0 0
    %1721 = vmatpush1.bf16.msra.mxu0 0
    %1722 = vmatprep.subr.bf16.mxu0 0
    %1723 = vmatpush1.bf16.msra.mxu0 0
    %1724 = vmatprep.subr.bf16.mxu0 0
    %1725 = vmatpush1.bf16.msra.mxu0 0
    %1726 = vmatprep.subr.bf16.mxu0 0
    %1727 = vmatpush1.bf16.msra.mxu0 0
    %1728 = vmatprep.subr.bf16.mxu0 0
    %1729 = vmatpush1.bf16.msra.mxu0 0
    %1730 = vmatprep.subr.bf16.mxu0 0
    %1731 = vmatpush1.bf16.msra.mxu0 0
    %1732 = vmatprep.subr.bf16.mxu0 0
    %1733 = vmatpush1.bf16.msra.mxu0 0
    %1734 = vmatprep.subr.bf16.mxu0 0
    %1735 = vmatpush1.bf16.msra.mxu0 0
    %1736 = vmatprep.subr.bf16.mxu0 0
    %1737 = vmatpush1.bf16.msra.mxu0 0
    %1738 = vmatprep.subr.bf16.mxu0 0
    %1739 = vmatpush1.bf16.msra.mxu0 0
    %1740 = vmatprep.mubr.bf16.mxu0 0
    %1741 = vmatmul.mubr.bf16.gmra.mrb[0].mxu0 %v1706
    %v1742 = vpop.f32.mrb[0].mxu0
    %v1743 = vadd.f32 0.0, %v1742
    %v1744 = vpop.f32.mrb[0].mxu0
    %v1745 = vpop.f32.mrb[0].mxu0
    %v1746 = vpop.f32.mrb[0].mxu0
    %1747 = vdwg.mxu0
    %v1749 = vrot.slane %v1743, 5
    %v1750 = vrot.slane %v1743, 6
    %v1753 = vadd.f32 %v1306, %v1749
    %v1754 = vadd.f32 %v1309, %v1750
    %v1755 = vxor.u32 %v1753, 2147483648
    %v1756 = vxor.u32 %v1754, 2147483648
    %v1757 = vmul.f32 %v1755, 1.442695
    %v1758 = vpow.pop %v1757
    %v1759 = vmul.f32 %v1756, 1.442695
    %v1760 = vpow.pop %v1759
    %v1761 = vadd.f32 %v1758, 1.0
    %v1762 = vadd.f32 %v1760, 1.0
    %v1763 = vrcp.pop %v1761
    %v1764 = vmul.f32 1.0, %v1763
    %v1765 = vrcp.pop %v1762
    %v1766 = vmul.f32 1.0, %v1765
    %v1767 = vtanh.pop %v1753
    %v1768 = vtanh.pop %v1754
    %v1771 = vrot.slane %v1669, 7
    %v1772 = vrot.slane %v1670, 7
    %v1775 = vmul.f32 %v1764, %v1771
    %v1776 = vmul.f32 %v1766, %v1772
    %1779 = vrot.lane.b32.xlu0 %v1767, 64
    %v1780 = vpop.permute.xlu0 %1779
    %1781 = vrot.lane.b32.xlu0 %v1768, 64
    %v1782 = vpop.permute.xlu0 %1781
    %v1785 = vmul.f32 %v1764, %v1780
    %v1786 = vmul.f32 %v1766, %v1782
    %1789 = vrot.lane.b32.xlu0 %v1785, 32
    %v1790 = vpop.permute.xlu0 %1789
    %1791 = vrot.lane.b32.xlu0 %v1786, 32
    %v1792 = vpop.permute.xlu0 %1791
    %v1795 = vadd.f32 %v1775, %v1790
    %v1796 = vadd.f32 %v1776, %v1792
    %v1797 = vtanh.pop %v1795
    %v1798 = vtanh.pop %v1796
    %1801 = vrot.lane.b32.xlu0 %v1797, 64
    %v1802 = vpop.permute.xlu0 %1801
    %1803 = vrot.lane.b32.xlu0 %v1798, 64
    %v1804 = vpop.permute.xlu0 %1803
    %v1807 = vmul.f32 %v1764, %v1802
    %v1808 = vmul.f32 %v1766, %v1804
    %1811 = vrot.lane.b32.xlu0 %v1807, 32
    %v1812 = vpop.permute.xlu0 %1811
    %1813 = vrot.lane.b32.xlu0 %v1808, 32
    %v1814 = vpop.permute.xlu0 %1813
    %1817 = vst.msk [vmem:[#allocation2] sm:$0x8] %vm710, %v1812
    %1818 = vst.msk [vmem:[#allocation2 + $0x8] sm:$0x8] %vm710, %v1814
    %v1819 = vpack.c.bf16 %v1807, %v1807
    %v1820 = vpack.c.bf16 %v1808, %v1808
    %v1823 = vunpack.c.l.b16 %v1819
    %v1824 = vunpack.c.l.b16 %v1820
    %v1825 = vrot.slane %v1823, 3
    %v1826 = vrot.slane %v1824, 2
    %v1827 = vsel %vm341, %v1826, %v1825
    %v1828 = vpack.c.b16 %v1827, %v1827
    %1829 = vrot.lane.b32.xlu0 %v1828, 32
    %v1830 = vpop.permute.xlu0 %1829
    %v1832 = vsel %vm217, %v1830, 0
    %1834 = vmatprep.subr.bf16.mxu0 0
    %1835 = vmatpush1.bf16.msra.mxu0 %v1325
    %1836 = vmatprep.subr.bf16.mxu0 0
    %1837 = vmatpush1.bf16.msra.mxu0 %v1326
    %1838 = vmatprep.subr.bf16.mxu0 0
    %1839 = vmatpush1.bf16.msra.mxu0 0
    %1840 = vmatprep.subr.bf16.mxu0 0
    %1841 = vmatpush1.bf16.msra.mxu0 0
    %1842 = vmatprep.subr.bf16.mxu0 0
    %1843 = vmatpush1.bf16.msra.mxu0 0
    %1844 = vmatprep.subr.bf16.mxu0 0
    %1845 = vmatpush1.bf16.msra.mxu0 0
    %1846 = vmatprep.subr.bf16.mxu0 0
    %1847 = vmatpush1.bf16.msra.mxu0 0
    %1848 = vmatprep.subr.bf16.mxu0 0
    %1849 = vmatpush1.bf16.msra.mxu0 0
    %1850 = vmatprep.subr.bf16.mxu0 0
    %1851 = vmatpush1.bf16.msra.mxu0 0
    %1852 = vmatprep.subr.bf16.mxu0 0
    %1853 = vmatpush1.bf16.msra.mxu0 0
    %1854 = vmatprep.subr.bf16.mxu0 0
    %1855 = vmatpush1.bf16.msra.mxu0 0
    %1856 = vmatprep.subr.bf16.mxu0 0
    %1857 = vmatpush1.bf16.msra.mxu0 0
    %1858 = vmatprep.subr.bf16.mxu0 0
    %1859 = vmatpush1.bf16.msra.mxu0 0
    %1860 = vmatprep.subr.bf16.mxu0 0
    %1861 = vmatpush1.bf16.msra.mxu0 0
    %1862 = vmatprep.subr.bf16.mxu0 0
    %1863 = vmatpush1.bf16.msra.mxu0 0
    %1864 = vmatprep.subr.bf16.mxu0 0
    %1865 = vmatpush1.bf16.msra.mxu0 0
    %1866 = vmatprep.mubr.bf16.mxu0 0
    %1867 = vmatmul.mubr.bf16.gmra.mrb[0].mxu0 %v1832
    %v1868 = vpop.f32.mrb[0].mxu0
    %v1869 = vadd.f32 0.0, %v1868
    %v1870 = vpop.f32.mrb[0].mxu0
    %v1871 = vpop.f32.mrb[0].mxu0
    %v1872 = vpop.f32.mrb[0].mxu0
    %1873 = vdwg.mxu0
    %v1875 = vrot.slane %v1869, 4
    %v1876 = vrot.slane %v1869, 5
    %v1879 = vadd.f32 %v1306, %v1875
    %v1880 = vadd.f32 %v1309, %v1876
    %v1881 = vxor.u32 %v1879, 2147483648
    %v1882 = vxor.u32 %v1880, 2147483648
    %v1883 = vmul.f32 %v1881, 1.442695
    %v1884 = vpow.pop %v1883
    %v1885 = vmul.f32 %v1882, 1.442695
    %v1886 = vpow.pop %v1885
    %v1887 = vadd.f32 %v1884, 1.0
    %v1888 = vadd.f32 %v1886, 1.0
    %v1889 = vrcp.pop %v1887
    %v1890 = vmul.f32 1.0, %v1889
    %v1891 = vrcp.pop %v1888
    %v1892 = vmul.f32 1.0, %v1891
    %v1893 = vtanh.pop %v1879
    %v1894 = vtanh.pop %v1880
    %v1897 = vrot.slane %v1795, 7
    %v1898 = vrot.slane %v1796, 7
    %v1901 = vmul.f32 %v1890, %v1897
    %v1902 = vmul.f32 %v1892, %v1898
    %1905 = vrot.lane.b32.xlu0 %v1893, 64
    %v1906 = vpop.permute.xlu0 %1905
    %1907 = vrot.lane.b32.xlu0 %v1894, 64
    %v1908 = vpop.permute.xlu0 %1907
    %v1911 = vmul.f32 %v1890, %v1906
    %v1912 = vmul.f32 %v1892, %v1908
    %1915 = vrot.lane.b32.xlu0 %v1911, 32
    %v1916 = vpop.permute.xlu0 %1915
    %1917 = vrot.lane.b32.xlu0 %v1912, 32
    %v1918 = vpop.permute.xlu0 %1917
    %v1921 = vadd.f32 %v1901, %v1916
    %v1922 = vadd.f32 %v1902, %v1918
    %v1923 = vtanh.pop %v1921
    %v1924 = vtanh.pop %v1922
    %1927 = vrot.lane.b32.xlu0 %v1923, 64
    %v1928 = vpop.permute.xlu0 %1927
    %1929 = vrot.lane.b32.xlu0 %v1924, 64
    %v1930 = vpop.permute.xlu0 %1929
    %v1933 = vmul.f32 %v1890, %v1928
    %v1934 = vmul.f32 %v1892, %v1930
    %1937 = vrot.lane.b32.xlu0 %v1933, 32
    %v1938 = vpop.permute.xlu0 %1937
    %1939 = vrot.lane.b32.xlu0 %v1934, 32
    %v1940 = vpop.permute.xlu0 %1939
    %1943 = vst.msk [vmem:[#allocation2] sm:$0x10] %vm837, %v1938
    %1944 = vst.msk [vmem:[#allocation2 + $0x8] sm:$0x10] %vm837, %v1940
    %v1945 = vpack.c.bf16 %v1933, %v1933
    %v1946 = vpack.c.bf16 %v1934, %v1934
    %v1949 = vunpack.c.l.b16 %v1945
    %v1950 = vunpack.c.l.b16 %v1946
    %v1951 = vrot.slane %v1949, 4
    %v1952 = vrot.slane %v1950, 3
    %v1953 = vsel %vm341, %v1952, %v1951
    %v1954 = vpack.c.b16 %v1953, %v1953
    %1955 = vrot.lane.b32.xlu0 %v1954, 32
    %v1956 = vpop.permute.xlu0 %1955
    %v1958 = vsel %vm217, %v1956, 0
    %1960 = vmatprep.subr.bf16.mxu0 0
    %1961 = vmatpush1.bf16.msra.mxu0 %v1325
    %1962 = vmatprep.subr.bf16.mxu0 0
    %1963 = vmatpush1.bf16.msra.mxu0 %v1326
    %1964 = vmatprep.subr.bf16.mxu0 0
    %1965 = vmatpush1.bf16.msra.mxu0 0
    %1966 = vmatprep.subr.bf16.mxu0 0
    %1967 = vmatpush1.bf16.msra.mxu0 0
    %1968 = vmatprep.subr.bf16.mxu0 0
    %1969 = vmatpush1.bf16.msra.mxu0 0
    %1970 = vmatprep.subr.bf16.mxu0 0
    %1971 = vmatpush1.bf16.msra.mxu0 0
    %1972 = vmatprep.subr.bf16.mxu0 0
    %1973 = vmatpush1.bf16.msra.mxu0 0
    %1974 = vmatprep.subr.bf16.mxu0 0
    %1975 = vmatpush1.bf16.msra.mxu0 0
    %1976 = vmatprep.subr.bf16.mxu0 0
    %1977 = vmatpush1.bf16.msra.mxu0 0
    %1978 = vmatprep.subr.bf16.mxu0 0
    %1979 = vmatpush1.bf16.msra.mxu0 0
    %1980 = vmatprep.subr.bf16.mxu0 0
    %1981 = vmatpush1.bf16.msra.mxu0 0
    %1982 = vmatprep.subr.bf16.mxu0 0
    %1983 = vmatpush1.bf16.msra.mxu0 0
    %1984 = vmatprep.subr.bf16.mxu0 0
    %1985 = vmatpush1.bf16.msra.mxu0 0
    %1986 = vmatprep.subr.bf16.mxu0 0
    %1987 = vmatpush1.bf16.msra.mxu0 0
    %1988 = vmatprep.subr.bf16.mxu0 0
    %1989 = vmatpush1.bf16.msra.mxu0 0
    %1990 = vmatprep.subr.bf16.mxu0 0
    %1991 = vmatpush1.bf16.msra.mxu0 0
    %1992 = vmatprep.mubr.bf16.mxu0 0
    %1993 = vmatmul.mubr.bf16.gmra.mrb[0].mxu0 %v1958
    %v1994 = vpop.f32.mrb[0].mxu0
    %v1995 = vadd.f32 0.0, %v1994
    %v1996 = vpop.f32.mrb[0].mxu0
    %v1997 = vpop.f32.mrb[0].mxu0
    %v1998 = vpop.f32.mrb[0].mxu0
    %1999 = vdwg.mxu0
    %v2001 = vrot.slane %v1995, 3
    %v2002 = vrot.slane %v1995, 4
    %v2005 = vadd.f32 %v1306, %v2001
    %v2006 = vadd.f32 %v1309, %v2002
    %v2007 = vxor.u32 %v2005, 2147483648
    %v2008 = vxor.u32 %v2006, 2147483648
    %v2009 = vmul.f32 %v2007, 1.442695
    %v2010 = vpow.pop %v2009
    %v2011 = vmul.f32 %v2008, 1.442695
    %v2012 = vpow.pop %v2011
    %v2013 = vadd.f32 %v2010, 1.0
    %v2014 = vadd.f32 %v2012, 1.0
    %v2015 = vrcp.pop %v2013
    %v2016 = vmul.f32 1.0, %v2015
    %v2017 = vrcp.pop %v2014
    %v2018 = vmul.f32 1.0, %v2017
    %v2019 = vtanh.pop %v2005
    %v2020 = vtanh.pop %v2006
    %v2023 = vrot.slane %v1921, 7
    %v2024 = vrot.slane %v1922, 7
    %v2027 = vmul.f32 %v2016, %v2023
    %v2028 = vmul.f32 %v2018, %v2024
    %2031 = vrot.lane.b32.xlu0 %v2019, 64
    %v2032 = vpop.permute.xlu0 %2031
    %2033 = vrot.lane.b32.xlu0 %v2020, 64
    %v2034 = vpop.permute.xlu0 %2033
    %v2037 = vmul.f32 %v2016, %v2032
    %v2038 = vmul.f32 %v2018, %v2034
    %2041 = vrot.lane.b32.xlu0 %v2037, 32
    %v2042 = vpop.permute.xlu0 %2041
    %2043 = vrot.lane.b32.xlu0 %v2038, 32
    %v2044 = vpop.permute.xlu0 %2043
    %v2047 = vadd.f32 %v2027, %v2042
    %v2048 = vadd.f32 %v2028, %v2044
    %v2049 = vtanh.pop %v2047
    %v2050 = vtanh.pop %v2048
    %2053 = vrot.lane.b32.xlu0 %v2049, 64
    %v2054 = vpop.permute.xlu0 %2053
    %2055 = vrot.lane.b32.xlu0 %v2050, 64
    %v2056 = vpop.permute.xlu0 %2055
    %v2059 = vmul.f32 %v2016, %v2054
    %v2060 = vmul.f32 %v2018, %v2056
    %2063 = vrot.lane.b32.xlu0 %v2059, 32
    %v2064 = vpop.permute.xlu0 %2063
    %2065 = vrot.lane.b32.xlu0 %v2060, 32
    %v2066 = vpop.permute.xlu0 %2065
    %2069 = vst.msk [vmem:[#allocation2] sm:$0x20] %vm964, %v2064
    %2070 = vst.msk [vmem:[#allocation2 + $0x8] sm:$0x20] %vm964, %v2066
    %v2071 = vpack.c.bf16 %v2059, %v2059
    %v2072 = vpack.c.bf16 %v2060, %v2060
    %v2075 = vunpack.c.l.b16 %v2071
    %v2076 = vunpack.c.l.b16 %v2072
    %v2077 = vrot.slane %v2075, 5
    %v2078 = vrot.slane %v2076, 4
    %v2079 = vsel %vm341, %v2078, %v2077
    %v2080 = vpack.c.b16 %v2079, %v2079
    %2081 = vrot.lane.b32.xlu0 %v2080, 32
    %v2082 = vpop.permute.xlu0 %2081
    %v2084 = vsel %vm217, %v2082, 0
    %2086 = vmatprep.subr.bf16.mxu0 0
    %2087 = vmatpush1.bf16.msra.mxu0 %v1325
    %2088 = vmatprep.subr.bf16.mxu0 0
    %2089 = vmatpush1.bf16.msra.mxu0 %v1326
    %2090 = vmatprep.subr.bf16.mxu0 0
    %2091 = vmatpush1.bf16.msra.mxu0 0
    %2092 = vmatprep.subr.bf16.mxu0 0
    %2093 = vmatpush1.bf16.msra.mxu0 0
    %2094 = vmatprep.subr.bf16.mxu0 0
    %2095 = vmatpush1.bf16.msra.mxu0 0
    %2096 = vmatprep.subr.bf16.mxu0 0
    %2097 = vmatpush1.bf16.msra.mxu0 0
    %2098 = vmatprep.subr.bf16.mxu0 0
    %2099 = vmatpush1.bf16.msra.mxu0 0
    %2100 = vmatprep.subr.bf16.mxu0 0
    %2101 = vmatpush1.bf16.msra.mxu0 0
    %2102 = vmatprep.subr.bf16.mxu0 0
    %2103 = vmatpush1.bf16.msra.mxu0 0
    %2104 = vmatprep.subr.bf16.mxu0 0
    %2105 = vmatpush1.bf16.msra.mxu0 0
    %2106 = vmatprep.subr.bf16.mxu0 0
    %2107 = vmatpush1.bf16.msra.mxu0 0
    %2108 = vmatprep.subr.bf16.mxu0 0
    %2109 = vmatpush1.bf16.msra.mxu0 0
    %2110 = vmatprep.subr.bf16.mxu0 0
    %2111 = vmatpush1.bf16.msra.mxu0 0
    %2112 = vmatprep.subr.bf16.mxu0 0
    %2113 = vmatpush1.bf16.msra.mxu0 0
    %2114 = vmatprep.subr.bf16.mxu0 0
    %2115 = vmatpush1.bf16.msra.mxu0 0
    %2116 = vmatprep.subr.bf16.mxu0 0
    %2117 = vmatpush1.bf16.msra.mxu0 0
    %2118 = vmatprep.mubr.bf16.mxu0 0
    %2119 = vmatmul.mubr.bf16.gmra.mrb[0].mxu0 %v2084
    %v2120 = vpop.f32.mrb[0].mxu0
    %v2121 = vadd.f32 0.0, %v2120
    %v2122 = vpop.f32.mrb[0].mxu0
    %v2123 = vpop.f32.mrb[0].mxu0
    %v2124 = vpop.f32.mrb[0].mxu0
    %2125 = vdwg.mxu0
    %v2127 = vrot.slane %v2121, 2
    %v2128 = vrot.slane %v2121, 3
    %v2131 = vadd.f32 %v1306, %v2127
    %v2132 = vadd.f32 %v1309, %v2128
    %v2133 = vxor.u32 %v2131, 2147483648
    %v2134 = vxor.u32 %v2132, 2147483648
    %v2135 = vmul.f32 %v2133, 1.442695
    %v2136 = vpow.pop %v2135
    %v2137 = vmul.f32 %v2134, 1.442695
    %v2138 = vpow.pop %v2137
    %v2139 = vadd.f32 %v2136, 1.0
    %v2140 = vadd.f32 %v2138, 1.0
    %v2141 = vrcp.pop %v2139
    %v2142 = vmul.f32 1.0, %v2141
    %v2143 = vrcp.pop %v2140
    %v2144 = vmul.f32 1.0, %v2143
    %v2145 = vtanh.pop %v2131
    %v2146 = vtanh.pop %v2132
    %v2149 = vrot.slane %v2047, 7
    %v2150 = vrot.slane %v2048, 7
    %v2153 = vmul.f32 %v2142, %v2149
    %v2154 = vmul.f32 %v2144, %v2150
    %2157 = vrot.lane.b32.xlu0 %v2145, 64
    %v2158 = vpop.permute.xlu0 %2157
    %2159 = vrot.lane.b32.xlu0 %v2146, 64
    %v2160 = vpop.permute.xlu0 %2159
    %v2163 = vmul.f32 %v2142, %v2158
    %v2164 = vmul.f32 %v2144, %v2160
    %2167 = vrot.lane.b32.xlu0 %v2163, 32
    %v2168 = vpop.permute.xlu0 %2167
    %2169 = vrot.lane.b32.xlu0 %v2164, 32
    %v2170 = vpop.permute.xlu0 %2169
    %v2173 = vadd.f32 %v2153, %v2168
    %v2174 = vadd.f32 %v2154, %v2170
    %v2175 = vtanh.pop %v2173
    %v2176 = vtanh.pop %v2174
    %2179 = vrot.lane.b32.xlu0 %v2175, 64
    %v2180 = vpop.permute.xlu0 %2179
    %2181 = vrot.lane.b32.xlu0 %v2176, 64
    %v2182 = vpop.permute.xlu0 %2181
    %v2185 = vmul.f32 %v2142, %v2180
    %v2186 = vmul.f32 %v2144, %v2182
    %2189 = vrot.lane.b32.xlu0 %v2185, 32
    %v2190 = vpop.permute.xlu0 %2189
    %2191 = vrot.lane.b32.xlu0 %v2186, 32
    %v2192 = vpop.permute.xlu0 %2191
    %2195 = vst.msk [vmem:[#allocation2] sm:$0x40] %vm1091, %v2190
    %2196 = vst.msk [vmem:[#allocation2 + $0x8] sm:$0x40] %vm1091, %v2192
    %v2197 = vpack.c.bf16 %v2185, %v2185
    %v2198 = vpack.c.bf16 %v2186, %v2186
    %v2201 = vunpack.c.l.b16 %v2197
    %v2202 = vunpack.c.l.b16 %v2198
    %v2203 = vrot.slane %v2201, 6
    %v2204 = vrot.slane %v2202, 5
    %v2205 = vsel %vm341, %v2204, %v2203
    %v2206 = vpack.c.b16 %v2205, %v2205
    %2207 = vrot.lane.b32.xlu0 %v2206, 32
    %v2208 = vpop.permute.xlu0 %2207
    %v2210 = vsel %vm217, %v2208, 0
    %2212 = vmatprep.subr.bf16.mxu0 0
    %2213 = vmatpush1.bf16.msra.mxu0 %v1325
    %2214 = vmatprep.subr.bf16.mxu0 0
    %2215 = vmatpush1.bf16.msra.mxu0 %v1326
    %2216 = vmatprep.subr.bf16.mxu0 0
    %2217 = vmatpush1.bf16.msra.mxu0 0
    %2218 = vmatprep.subr.bf16.mxu0 0
    %2219 = vmatpush1.bf16.msra.mxu0 0
    %2220 = vmatprep.subr.bf16.mxu0 0
    %2221 = vmatpush1.bf16.msra.mxu0 0
    %2222 = vmatprep.subr.bf16.mxu0 0
    %2223 = vmatpush1.bf16.msra.mxu0 0
    %2224 = vmatprep.subr.bf16.mxu0 0
    %2225 = vmatpush1.bf16.msra.mxu0 0
    %2226 = vmatprep.subr.bf16.mxu0 0
    %2227 = vmatpush1.bf16.msra.mxu0 0
    %2228 = vmatprep.subr.bf16.mxu0 0
    %2229 = vmatpush1.bf16.msra.mxu0 0
    %2230 = vmatprep.subr.bf16.mxu0 0
    %2231 = vmatpush1.bf16.msra.mxu0 0
    %2232 = vmatprep.subr.bf16.mxu0 0
    %2233 = vmatpush1.bf16.msra.mxu0 0
    %2234 = vmatprep.subr.bf16.mxu0 0
    %2235 = vmatpush1.bf16.msra.mxu0 0
    %2236 = vmatprep.subr.bf16.mxu0 0
    %2237 = vmatpush1.bf16.msra.mxu0 0
    %2238 = vmatprep.subr.bf16.mxu0 0
    %2239 = vmatpush1.bf16.msra.mxu0 0
    %2240 = vmatprep.subr.bf16.mxu0 0
    %2241 = vmatpush1.bf16.msra.mxu0 0
    %2242 = vmatprep.subr.bf16.mxu0 0
    %2243 = vmatpush1.bf16.msra.mxu0 0
    %2244 = vmatprep.mubr.bf16.mxu0 0
    %2245 = vmatmul.mubr.bf16.gmra.mrb[0].mxu0 %v2210
    %v2246 = vpop.f32.mrb[0].mxu0
    %v2247 = vadd.f32 0.0, %v2246
    %v2248 = vpop.f32.mrb[0].mxu0
    %v2249 = vpop.f32.mrb[0].mxu0
    %v2250 = vpop.f32.mrb[0].mxu0
    %2251 = vdwg.mxu0
    %v2253 = vrot.slane %v2247, 1
    %v2254 = vrot.slane %v2247, 2
    %v2257 = vadd.f32 %v1306, %v2253
    %v2258 = vadd.f32 %v1309, %v2254
    %v2259 = vxor.u32 %v2257, 2147483648
    %v2260 = vxor.u32 %v2258, 2147483648
    %v2261 = vmul.f32 %v2259, 1.442695
    %v2262 = vpow.pop %v2261
    %v2263 = vmul.f32 %v2260, 1.442695
    %v2264 = vpow.pop %v2263
    %v2265 = vadd.f32 %v2262, 1.0
    %v2266 = vadd.f32 %v2264, 1.0
    %v2267 = vrcp.pop %v2265
    %v2268 = vmul.f32 1.0, %v2267
    %v2269 = vrcp.pop %v2266
    %v2270 = vmul.f32 1.0, %v2269
    %v2271 = vtanh.pop %v2257
    %v2272 = vtanh.pop %v2258
    %v2275 = vrot.slane %v2173, 7
    %v2276 = vrot.slane %v2174, 7
    %v2279 = vmul.f32 %v2268, %v2275
    %v2280 = vmul.f32 %v2270, %v2276
    %2283 = vrot.lane.b32.xlu0 %v2271, 64
    %v2284 = vpop.permute.xlu0 %2283
    %2285 = vrot.lane.b32.xlu0 %v2272, 64
    %v2286 = vpop.permute.xlu0 %2285
    %v2289 = vmul.f32 %v2268, %v2284
    %v2290 = vmul.f32 %v2270, %v2286
    %2293 = vrot.lane.b32.xlu0 %v2289, 32
    %v2294 = vpop.permute.xlu0 %2293
    %2295 = vrot.lane.b32.xlu0 %v2290, 32
    %v2296 = vpop.permute.xlu0 %2295
    %v2299 = vadd.f32 %v2279, %v2294
    %v2300 = vadd.f32 %v2280, %v2296
    %v2301 = vtanh.pop %v2299
    %v2302 = vtanh.pop %v2300
    %2305 = vrot.lane.b32.xlu0 %v2301, 64
    %v2306 = vpop.permute.xlu0 %2305
    %2307 = vrot.lane.b32.xlu0 %v2302, 64
    %v2308 = vpop.permute.xlu0 %2307
    %v2311 = vmul.f32 %v2268, %v2306
    %v2312 = vmul.f32 %v2270, %v2308
    %2315 = vrot.lane.b32.xlu0 %v2311, 32
    %v2316 = vpop.permute.xlu0 %2315
    %2317 = vrot.lane.b32.xlu0 %v2312, 32
    %v2318 = vpop.permute.xlu0 %2317
    %2321 = vst.msk [vmem:[#allocation2] sm:$0x80] %vm1218, %v2316
    %2322 = vst.msk [vmem:[#allocation2 + $0x8] sm:$0x80] %vm1218, %v2318
    %v2323 = vrot.slane %v2312, 7
    %2324 = vrot.lane.b32.xlu0 %v2323, 32
    %v2325 = vpop.permute.xlu0 %2324
    %s2327 = scalar_lea.vmem [#allocation15], 2
    %2328 = vst.msk [vmem:[%s2327 - $0x7] sm:$0x80] %vm1218, %v2316
    %2329 = vst.msk [vmem:[%s2327 + $0x1] sm:$0x1] %vm331, %v2325
    %v2332 = vrot.slane %v2300, 7
    %2333 = vrot.lane.b32.xlu0 %v2299, 96
    %v2334 = vpop.permute.xlu0 %2333
    %2335 = vrot.lane.b32.xlu0 %v2332, 96
    %v2336 = vpop.permute.xlu0 %2335
    %s2339 = scalar_lea.vmem [#allocation17], 2
    %2340 = vst.msk [vmem:[%s2339 - $0x7] sm:$0x80] %vm1218, %v2334
    %2341 = vst.msk [vmem:[%s2339 + $0x1] sm:$0x1] %vm331, %v2336
    %v2342 = vld [vmem:[#allocation2] sm:$0xff]
    %v2343 = vld [vmem:[#allocation2 + $0x8] sm:$0xff]
    %v2344 = vld [vmem:[#allocation11] sm:$0xf]
    %v2345 = vld [vmem:[#allocation11 + $0x4] sm:$0xf]
    %v2346 = vld [vmem:[#allocation11 + $0x8] sm:$0xf]
    %v2347 = vld [vmem:[#allocation11 + $0xc] sm:$0xf]
    %v2348 = vld [vmem:[#allocation12] sm:$0xf]
    %v2349 = vld [vmem:[#allocation12 + $0x4] sm:$0xf]
    %v2350 = vld [vmem:[#allocation12 + $0x8] sm:$0xf]
    %v2351 = vld [vmem:[#allocation12 + $0xc] sm:$0xf]
    %v2352 = vld [vmem:[%s11] sm:$0x1]
    %v2353 = vpack.c.bf16 %v2343, %v2342
    %v2355 = vlaneseq
    %v2356 = vshrl.u32 %v2355, 7
    %v2357 = vsub.s32 0, %v2356
    %v2358 = vrot.slane %v2352, %v2357
    %v2364 = vunpack.c.l.b16 %v2344
    %v2365 = vunpack.c.l.b16 %v2345
    %v2366 = vunpack.c.l.b16 %v2346
    %v2367 = vunpack.c.l.b16 %v2347
    %v2368 = vpack.c.b16 %v2365, %v2364
    %v2369 = vpack.c.b16 %v2367, %v2366
    %v2373 = vsel %vm217, %v2353, 0
    %2375 = vmatprep.subr.bf16.mxu0 0
    %2376 = vmatpush1.bf16.msra.mxu0 %v2368
    %2377 = vmatprep.subr.bf16.mxu0 0
    %2378 = vmatpush1.bf16.msra.mxu0 %v2369
    %2379 = vmatprep.subr.bf16.mxu0 0
    %2380 = vmatpush1.bf16.msra.mxu0 0
    %2381 = vmatprep.subr.bf16.mxu0 0
    %2382 = vmatpush1.bf16.msra.mxu0 0
    %2383 = vmatprep.subr.bf16.mxu0 0
    %2384 = vmatpush1.bf16.msra.mxu0 0
    %2385 = vmatprep.subr.bf16.mxu0 0
    %2386 = vmatpush1.bf16.msra.mxu0 0
    %2387 = vmatprep.subr.bf16.mxu0 0
    %2388 = vmatpush1.bf16.msra.mxu0 0
    %2389 = vmatprep.subr.bf16.mxu0 0
    %2390 = vmatpush1.bf16.msra.mxu0 0
    %2391 = vmatprep.subr.bf16.mxu0 0
    %2392 = vmatpush1.bf16.msra.mxu0 0
    %2393 = vmatprep.subr.bf16.mxu0 0
    %2394 = vmatpush1.bf16.msra.mxu0 0
    %2395 = vmatprep.subr.bf16.mxu0 0
    %2396 = vmatpush1.bf16.msra.mxu0 0
    %2397 = vmatprep.subr.bf16.mxu0 0
    %2398 = vmatpush1.bf16.msra.mxu0 0
    %2399 = vmatprep.subr.bf16.mxu0 0
    %2400 = vmatpush1.bf16.msra.mxu0 0
    %2401 = vmatprep.subr.bf16.mxu0 0
    %2402 = vmatpush1.bf16.msra.mxu0 0
    %2403 = vmatprep.subr.bf16.mxu0 0
    %2404 = vmatpush1.bf16.msra.mxu0 0
    %2405 = vmatprep.subr.bf16.mxu0 0
    %2406 = vmatpush1.bf16.msra.mxu0 0
    %2407 = vmatprep.mubr.bf16.mxu0 0
    %2408 = vmatmul.mubr.bf16.gmra.mrb[0].mxu0 %v2373
    %v2409 = vpop.f32.mrb[0].mxu0
    %v2410 = vadd.f32 %v2358, %v2409
    %v2411 = vpop.f32.mrb[0].mxu0
    %v2412 = vpop.f32.mrb[0].mxu0
    %v2413 = vadd.f32 %v2358, %v2412
    %v2414 = vpop.f32.mrb[0].mxu0
    %2415 = vdwg.mxu0
    %s2416 = scalar_lea.vmem [#allocation3], 4
    %v2417 = vld [vmem:[%s2416] sm:$0x3]
    %s2418 = scalar_lea.vmem [#allocation6], 4
    %v2419 = vld [vmem:[%s2418] sm:$0x3]
    %v2420 = vpack.c.bf16 %v2417, %v2417
    %v2425 = vunpack.c.l.b16 %v2348
    %v2426 = vunpack.c.l.b16 %v2349
    %v2427 = vunpack.c.l.b16 %v2350
    %v2428 = vunpack.c.l.b16 %v2351
    %v2429 = vpack.c.b16 %v2426, %v2425
    %v2430 = vpack.c.b16 %v2428, %v2427
    %v2434 = vsel %vm217, %v2420, 0
    %2436 = vmatprep.subr.bf16.mxu0 0
    %2437 = vmatpush1.bf16.msra.mxu0 %v2429
    %2438 = vmatprep.subr.bf16.mxu0 0
    %2439 = vmatpush1.bf16.msra.mxu0 %v2430
    %2440 = vmatprep.subr.bf16.mxu0 0
    %2441 = vmatpush1.bf16.msra.mxu0 0
    %2442 = vmatprep.subr.bf16.mxu0 0
    %2443 = vmatpush1.bf16.msra.mxu0 0
    %2444 = vmatprep.subr.bf16.mxu0 0
    %2445 = vmatpush1.bf16.msra.mxu0 0
    %2446 = vmatprep.subr.bf16.mxu0 0
    %2447 = vmatpush1.bf16.msra.mxu0 0
    %2448 = vmatprep.subr.bf16.mxu0 0
    %2449 = vmatpush1.bf16.msra.mxu0 0
    %2450 = vmatprep.subr.bf16.mxu0 0
    %2451 = vmatpush1.bf16.msra.mxu0 0
    %2452 = vmatprep.subr.bf16.mxu0 0
    %2453 = vmatpush1.bf16.msra.mxu0 0
    %2454 = vmatprep.subr.bf16.mxu0 0
    %2455 = vmatpush1.bf16.msra.mxu0 0
    %2456 = vmatprep.subr.bf16.mxu0 0
    %2457 = vmatpush1.bf16.msra.mxu0 0
    %2458 = vmatprep.subr.bf16.mxu0 0
    %2459 = vmatpush1.bf16.msra.mxu0 0
    %2460 = vmatprep.subr.bf16.mxu0 0
    %2461 = vmatpush1.bf16.msra.mxu0 0
    %2462 = vmatprep.subr.bf16.mxu0 0
    %2463 = vmatpush1.bf16.msra.mxu0 0
    %2464 = vmatprep.subr.bf16.mxu0 0
    %2465 = vmatpush1.bf16.msra.mxu0 0
    %2466 = vmatprep.subr.bf16.mxu0 0
    %2467 = vmatpush1.bf16.msra.mxu0 0
    %2468 = vmatprep.mubr.bf16.mxu0 0
    %2469 = vmatmul.mubr.bf16.gmra.mrb[0].mxu0 %v2434
    %v2470 = vpop.f32.mrb[0].mxu0
    %v2471 = vadd.f32 0.0, %v2470
    %v2472 = vpop.f32.mrb[0].mxu0
    %v2473 = vpop.f32.mrb[0].mxu0
    %v2474 = vpop.f32.mrb[0].mxu0
    %2475 = vdwg.mxu0
    %v2477 = vrot.slane %v2471, 1
    %v2480 = vadd.f32 %v2410, %v2471
    %v2481 = vadd.f32 %v2413, %v2477
    %v2482 = vxor.u32 %v2480, 2147483648
    %v2483 = vxor.u32 %v2481, 2147483648
    %v2484 = vmul.f32 %v2482, 1.442695
    %v2485 = vpow.pop %v2484
    %v2486 = vmul.f32 %v2483, 1.442695
    %v2487 = vpow.pop %v2486
    %v2488 = vadd.f32 %v2485, 1.0
    %v2489 = vadd.f32 %v2487, 1.0
    %v2490 = vrcp.pop %v2488
    %v2491 = vmul.f32 1.0, %v2490
    %v2492 = vrcp.pop %v2489
    %v2493 = vmul.f32 1.0, %v2492
    %v2494 = vtanh.pop %v2480
    %v2495 = vtanh.pop %v2481
    %v2497 = vrot.slane %v2419, 1
    %2498 = vrot.lane.b32.xlu0 %v2419, 32
    %v2499 = vpop.permute.xlu0 %2498
    %2500 = vrot.lane.b32.xlu0 %v2497, 32
    %v2501 = vpop.permute.xlu0 %2500
    %v2504 = vmul.f32 %v2491, %v2499
    %v2505 = vmul.f32 %v2493, %v2501
    %2508 = vrot.lane.b32.xlu0 %v2494, 64
    %v2509 = vpop.permute.xlu0 %2508
    %2510 = vrot.lane.b32.xlu0 %v2495, 64
    %v2511 = vpop.permute.xlu0 %2510
    %v2514 = vmul.f32 %v2491, %v2509
    %v2515 = vmul.f32 %v2493, %v2511
    %2518 = vrot.lane.b32.xlu0 %v2514, 32
    %v2519 = vpop.permute.xlu0 %2518
    %2520 = vrot.lane.b32.xlu0 %v2515, 32
    %v2521 = vpop.permute.xlu0 %2520
    %v2524 = vadd.f32 %v2504, %v2519
    %v2525 = vadd.f32 %v2505, %v2521
    %v2526 = vtanh.pop %v2524
    %v2527 = vtanh.pop %v2525
    %2530 = vrot.lane.b32.xlu0 %v2526, 64
    %v2531 = vpop.permute.xlu0 %2530
    %2532 = vrot.lane.b32.xlu0 %v2527, 64
    %v2533 = vpop.permute.xlu0 %2532
    %v2536 = vmul.f32 %v2491, %v2531
    %v2537 = vmul.f32 %v2493, %v2533
    %2540 = vrot.lane.b32.xlu0 %v2536, 32
    %v2541 = vpop.permute.xlu0 %2540
    %2542 = vrot.lane.b32.xlu0 %v2537, 32
    %v2543 = vpop.permute.xlu0 %2542
    %2546 = vst.msk [vmem:[#allocation2] sm:$0x1] %vm331, %v2541
    %2547 = vst.msk [vmem:[#allocation2 + $0x8] sm:$0x1] %vm331, %v2543
    %v2548 = vpack.c.bf16 %v2536, %v2536
    %v2549 = vpack.c.bf16 %v2537, %v2537
    %v2552 = vunpack.c.l.b16 %v2548
    %v2553 = vunpack.c.l.b16 %v2549
    %v2554 = vrot.slane %v2553, 7
    %v2555 = vsel %vm341, %v2554, %v2552
    %v2556 = vpack.c.b16 %v2555, %v2555
    %2557 = vrot.lane.b32.xlu0 %v2556, 32
    %v2558 = vpop.permute.xlu0 %2557
    %v2560 = vsel %vm217, %v2558, 0
    %2562 = vmatprep.subr.bf16.mxu0 0
    %2563 = vmatpush1.bf16.msra.mxu0 %v2429
    %2564 = vmatprep.subr.bf16.mxu0 0
    %2565 = vmatpush1.bf16.msra.mxu0 %v2430
    %2566 = vmatprep.subr.bf16.mxu0 0
    %2567 = vmatpush1.bf16.msra.mxu0 0
    %2568 = vmatprep.subr.bf16.mxu0 0
    %2569 = vmatpush1.bf16.msra.mxu0 0
    %2570 = vmatprep.subr.bf16.mxu0 0
    %2571 = vmatpush1.bf16.msra.mxu0 0
    %2572 = vmatprep.subr.bf16.mxu0 0
    %2573 = vmatpush1.bf16.msra.mxu0 0
    %2574 = vmatprep.subr.bf16.mxu0 0
    %2575 = vmatpush1.bf16.msra.mxu0 0
    %2576 = vmatprep.subr.bf16.mxu0 0
    %2577 = vmatpush1.bf16.msra.mxu0 0
    %2578 = vmatprep.subr.bf16.mxu0 0
    %2579 = vmatpush1.bf16.msra.mxu0 0
    %2580 = vmatprep.subr.bf16.mxu0 0
    %2581 = vmatpush1.bf16.msra.mxu0 0
    %2582 = vmatprep.subr.bf16.mxu0 0
    %2583 = vmatpush1.bf16.msra.mxu0 0
    %2584 = vmatprep.subr.bf16.mxu0 0
    %2585 = vmatpush1.bf16.msra.mxu0 0
    %2586 = vmatprep.subr.bf16.mxu0 0
    %2587 = vmatpush1.bf16.msra.mxu0 0
    %2588 = vmatprep.subr.bf16.mxu0 0
    %2589 = vmatpush1.bf16.msra.mxu0 0
    %2590 = vmatprep.subr.bf16.mxu0 0
    %2591 = vmatpush1.bf16.msra.mxu0 0
    %2592 = vmatprep.subr.bf16.mxu0 0
    %2593 = vmatpush1.bf16.msra.mxu0 0
    %2594 = vmatprep.mubr.bf16.mxu0 0
    %2595 = vmatmul.mubr.bf16.gmra.mrb[0].mxu0 %v2560
    %v2596 = vpop.f32.mrb[0].mxu0
    %v2597 = vadd.f32 0.0, %v2596
    %v2598 = vpop.f32.mrb[0].mxu0
    %v2599 = vpop.f32.mrb[0].mxu0
    %v2600 = vpop.f32.mrb[0].mxu0
    %2601 = vdwg.mxu0
    %v2603 = vrot.slane %v2597, 7
    %v2606 = vadd.f32 %v2410, %v2603
    %v2607 = vadd.f32 %v2413, %v2597
    %v2608 = vxor.u32 %v2606, 2147483648
    %v2609 = vxor.u32 %v2607, 2147483648
    %v2610 = vmul.f32 %v2608, 1.442695
    %v2611 = vpow.pop %v2610
    %v2612 = vmul.f32 %v2609, 1.442695
    %v2613 = vpow.pop %v2612
    %v2614 = vadd.f32 %v2611, 1.0
    %v2615 = vadd.f32 %v2613, 1.0
    %v2616 = vrcp.pop %v2614
    %v2617 = vmul.f32 1.0, %v2616
    %v2618 = vrcp.pop %v2615
    %v2619 = vmul.f32 1.0, %v2618
    %v2620 = vtanh.pop %v2606
    %v2621 = vtanh.pop %v2607
    %v2624 = vrot.slane %v2524, 7
    %v2625 = vrot.slane %v2525, 7
    %v2628 = vmul.f32 %v2617, %v2624
    %v2629 = vmul.f32 %v2619, %v2625
    %2632 = vrot.lane.b32.xlu0 %v2620, 64
    %v2633 = vpop.permute.xlu0 %2632
    %2634 = vrot.lane.b32.xlu0 %v2621, 64
    %v2635 = vpop.permute.xlu0 %2634
    %v2638 = vmul.f32 %v2617, %v2633
    %v2639 = vmul.f32 %v2619, %v2635
    %2642 = vrot.lane.b32.xlu0 %v2638, 32
    %v2643 = vpop.permute.xlu0 %2642
    %2644 = vrot.lane.b32.xlu0 %v2639, 32
    %v2645 = vpop.permute.xlu0 %2644
    %v2648 = vadd.f32 %v2628, %v2643
    %v2649 = vadd.f32 %v2629, %v2645
    %v2650 = vtanh.pop %v2648
    %v2651 = vtanh.pop %v2649
    %2654 = vrot.lane.b32.xlu0 %v2650, 64
    %v2655 = vpop.permute.xlu0 %2654
    %2656 = vrot.lane.b32.xlu0 %v2651, 64
    %v2657 = vpop.permute.xlu0 %2656
    %v2660 = vmul.f32 %v2617, %v2655
    %v2661 = vmul.f32 %v2619, %v2657
    %2664 = vrot.lane.b32.xlu0 %v2660, 32
    %v2665 = vpop.permute.xlu0 %2664
    %2666 = vrot.lane.b32.xlu0 %v2661, 32
    %v2667 = vpop.permute.xlu0 %2666
    %2670 = vst.msk [vmem:[#allocation2] sm:$0x2] %vm457, %v2665
    %2671 = vst.msk [vmem:[#allocation2 + $0x8] sm:$0x2] %vm457, %v2667
    %v2672 = vpack.c.bf16 %v2660, %v2660
    %v2673 = vpack.c.bf16 %v2661, %v2661
    %v2676 = vunpack.c.l.b16 %v2672
    %v2677 = vunpack.c.l.b16 %v2673
    %v2678 = vrot.slane %v2676, 1
    %v2679 = vsel %vm341, %v2677, %v2678
    %v2680 = vpack.c.b16 %v2679, %v2679
    %2681 = vrot.lane.b32.xlu0 %v2680, 32
    %v2682 = vpop.permute.xlu0 %2681
    %v2684 = vsel %vm217, %v2682, 0
    %2686 = vmatprep.subr.bf16.mxu0 0
    %2687 = vmatpush1.bf16.msra.mxu0 %v2429
    %2688 = vmatprep.subr.bf16.mxu0 0
    %2689 = vmatpush1.bf16.msra.mxu0 %v2430
    %2690 = vmatprep.subr.bf16.mxu0 0
    %2691 = vmatpush1.bf16.msra.mxu0 0
    %2692 = vmatprep.subr.bf16.mxu0 0
    %2693 = vmatpush1.bf16.msra.mxu0 0
    %2694 = vmatprep.subr.bf16.mxu0 0
    %2695 = vmatpush1.bf16.msra.mxu0 0
    %2696 = vmatprep.subr.bf16.mxu0 0
    %2697 = vmatpush1.bf16.msra.mxu0 0
    %2698 = vmatprep.subr.bf16.mxu0 0
    %2699 = vmatpush1.bf16.msra.mxu0 0
    %2700 = vmatprep.subr.bf16.mxu0 0
    %2701 = vmatpush1.bf16.msra.mxu0 0
    %2702 = vmatprep.subr.bf16.mxu0 0
    %2703 = vmatpush1.bf16.msra.mxu0 0
    %2704 = vmatprep.subr.bf16.mxu0 0
    %2705 = vmatpush1.bf16.msra.mxu0 0
    %2706 = vmatprep.subr.bf16.mxu0 0
    %2707 = vmatpush1.bf16.msra.mxu0 0
    %2708 = vmatprep.subr.bf16.mxu0 0
    %2709 = vmatpush1.bf16.msra.mxu0 0
    %2710 = vmatprep.subr.bf16.mxu0 0
    %2711 = vmatpush1.bf16.msra.mxu0 0
    %2712 = vmatprep.subr.bf16.mxu0 0
    %2713 = vmatpush1.bf16.msra.mxu0 0
    %2714 = vmatprep.subr.bf16.mxu0 0
    %2715 = vmatpush1.bf16.msra.mxu0 0
    %2716 = vmatprep.subr.bf16.mxu0 0
    %2717 = vmatpush1.bf16.msra.mxu0 0
    %2718 = vmatprep.mubr.bf16.mxu0 0
    %2719 = vmatmul.mubr.bf16.gmra.mrb[0].mxu0 %v2684
    %v2720 = vpop.f32.mrb[0].mxu0
    %v2721 = vadd.f32 0.0, %v2720
    %v2722 = vpop.f32.mrb[0].mxu0
    %v2723 = vpop.f32.mrb[0].mxu0
    %v2724 = vpop.f32.mrb[0].mxu0
    %2725 = vdwg.mxu0
    %v2727 = vrot.slane %v2721, 6
    %v2728 = vrot.slane %v2721, 7
    %v2731 = vadd.f32 %v2410, %v2727
    %v2732 = vadd.f32 %v2413, %v2728
    %v2733 = vxor.u32 %v2731, 2147483648
    %v2734 = vxor.u32 %v2732, 2147483648
    %v2735 = vmul.f32 %v2733, 1.442695
    %v2736 = vpow.pop %v2735
    %v2737 = vmul.f32 %v2734, 1.442695
    %v2738 = vpow.pop %v2737
    %v2739 = vadd.f32 %v2736, 1.0
    %v2740 = vadd.f32 %v2738, 1.0
    %v2741 = vrcp.pop %v2739
    %v2742 = vmul.f32 1.0, %v2741
    %v2743 = vrcp.pop %v2740
    %v2744 = vmul.f32 1.0, %v2743
    %v2745 = vtanh.pop %v2731
    %v2746 = vtanh.pop %v2732
    %v2749 = vrot.slane %v2648, 7
    %v2750 = vrot.slane %v2649, 7
    %v2753 = vmul.f32 %v2742, %v2749
    %v2754 = vmul.f32 %v2744, %v2750
    %2757 = vrot.lane.b32.xlu0 %v2745, 64
    %v2758 = vpop.permute.xlu0 %2757
    %2759 = vrot.lane.b32.xlu0 %v2746, 64
    %v2760 = vpop.permute.xlu0 %2759
    %v2763 = vmul.f32 %v2742, %v2758
    %v2764 = vmul.f32 %v2744, %v2760
    %2767 = vrot.lane.b32.xlu0 %v2763, 32
    %v2768 = vpop.permute.xlu0 %2767
    %2769 = vrot.lane.b32.xlu0 %v2764, 32
    %v2770 = vpop.permute.xlu0 %2769
    %v2773 = vadd.f32 %v2753, %v2768
    %v2774 = vadd.f32 %v2754, %v2770
    %v2775 = vtanh.pop %v2773
    %v2776 = vtanh.pop %v2774
    %2779 = vrot.lane.b32.xlu0 %v2775, 64
    %v2780 = vpop.permute.xlu0 %2779
    %2781 = vrot.lane.b32.xlu0 %v2776, 64
    %v2782 = vpop.permute.xlu0 %2781
    %v2785 = vmul.f32 %v2742, %v2780
    %v2786 = vmul.f32 %v2744, %v2782
    %2789 = vrot.lane.b32.xlu0 %v2785, 32
    %v2790 = vpop.permute.xlu0 %2789
    %2791 = vrot.lane.b32.xlu0 %v2786, 32
    %v2792 = vpop.permute.xlu0 %2791
    %2795 = vst.msk [vmem:[#allocation2] sm:$0x4] %vm583, %v2790
    %2796 = vst.msk [vmem:[#allocation2 + $0x8] sm:$0x4] %vm583, %v2792
    %v2797 = vpack.c.bf16 %v2785, %v2785
    %v2798 = vpack.c.bf16 %v2786, %v2786
    %v2801 = vunpack.c.l.b16 %v2797
    %v2802 = vunpack.c.l.b16 %v2798
    %v2803 = vrot.slane %v2801, 2
    %v2804 = vrot.slane %v2802, 1
    %v2805 = vsel %vm341, %v2804, %v2803
    %v2806 = vpack.c.b16 %v2805, %v2805
    %2807 = vrot.lane.b32.xlu0 %v2806, 32
    %v2808 = vpop.permute.xlu0 %2807
    %v2810 = vsel %vm217, %v2808, 0
    %2812 = vmatprep.subr.bf16.mxu0 0
    %2813 = vmatpush1.bf16.msra.mxu0 %v2429
    %2814 = vmatprep.subr.bf16.mxu0 0
    %2815 = vmatpush1.bf16.msra.mxu0 %v2430
    %2816 = vmatprep.subr.bf16.mxu0 0
    %2817 = vmatpush1.bf16.msra.mxu0 0
    %2818 = vmatprep.subr.bf16.mxu0 0
    %2819 = vmatpush1.bf16.msra.mxu0 0
    %2820 = vmatprep.subr.bf16.mxu0 0
    %2821 = vmatpush1.bf16.msra.mxu0 0
    %2822 = vmatprep.subr.bf16.mxu0 0
    %2823 = vmatpush1.bf16.msra.mxu0 0
    %2824 = vmatprep.subr.bf16.mxu0 0
    %2825 = vmatpush1.bf16.msra.mxu0 0
    %2826 = vmatprep.subr.bf16.mxu0 0
    %2827 = vmatpush1.bf16.msra.mxu0 0
    %2828 = vmatprep.subr.bf16.mxu0 0
    %2829 = vmatpush1.bf16.msra.mxu0 0
    %2830 = vmatprep.subr.bf16.mxu0 0
    %2831 = vmatpush1.bf16.msra.mxu0 0
    %2832 = vmatprep.subr.bf16.mxu0 0
    %2833 = vmatpush1.bf16.msra.mxu0 0
    %2834 = vmatprep.subr.bf16.mxu0 0
    %2835 = vmatpush1.bf16.msra.mxu0 0
    %2836 = vmatprep.subr.bf16.mxu0 0
    %2837 = vmatpush1.bf16.msra.mxu0 0
    %2838 = vmatprep.subr.bf16.mxu0 0
    %2839 = vmatpush1.bf16.msra.mxu0 0
    %2840 = vmatprep.subr.bf16.mxu0 0
    %2841 = vmatpush1.bf16.msra.mxu0 0
    %2842 = vmatprep.subr.bf16.mxu0 0
    %2843 = vmatpush1.bf16.msra.mxu0 0
    %2844 = vmatprep.mubr.bf16.mxu0 0
    %2845 = vmatmul.mubr.bf16.gmra.mrb[0].mxu0 %v2810
    %v2846 = vpop.f32.mrb[0].mxu0
    %v2847 = vadd.f32 0.0, %v2846
    %v2848 = vpop.f32.mrb[0].mxu0
    %v2849 = vpop.f32.mrb[0].mxu0
    %v2850 = vpop.f32.mrb[0].mxu0
    %2851 = vdwg.mxu0
    %v2853 = vrot.slane %v2847, 5
    %v2854 = vrot.slane %v2847, 6
    %v2857 = vadd.f32 %v2410, %v2853
    %v2858 = vadd.f32 %v2413, %v2854
    %v2859 = vxor.u32 %v2857, 2147483648
    %v2860 = vxor.u32 %v2858, 2147483648
    %v2861 = vmul.f32 %v2859, 1.442695
    %v2862 = vpow.pop %v2861
    %v2863 = vmul.f32 %v2860, 1.442695
    %v2864 = vpow.pop %v2863
    %v2865 = vadd.f32 %v2862, 1.0
    %v2866 = vadd.f32 %v2864, 1.0
    %v2867 = vrcp.pop %v2865
    %v2868 = vmul.f32 1.0, %v2867
    %v2869 = vrcp.pop %v2866
    %v2870 = vmul.f32 1.0, %v2869
    %v2871 = vtanh.pop %v2857
    %v2872 = vtanh.pop %v2858
    %v2875 = vrot.slane %v2773, 7
    %v2876 = vrot.slane %v2774, 7
    %v2879 = vmul.f32 %v2868, %v2875
    %v2880 = vmul.f32 %v2870, %v2876
    %2883 = vrot.lane.b32.xlu0 %v2871, 64
    %v2884 = vpop.permute.xlu0 %2883
    %2885 = vrot.lane.b32.xlu0 %v2872, 64
    %v2886 = vpop.permute.xlu0 %2885
    %v2889 = vmul.f32 %v2868, %v2884
    %v2890 = vmul.f32 %v2870, %v2886
    %2893 = vrot.lane.b32.xlu0 %v2889, 32
    %v2894 = vpop.permute.xlu0 %2893
    %2895 = vrot.lane.b32.xlu0 %v2890, 32
    %v2896 = vpop.permute.xlu0 %2895
    %v2899 = vadd.f32 %v2879, %v2894
    %v2900 = vadd.f32 %v2880, %v2896
    %v2901 = vtanh.pop %v2899
    %v2902 = vtanh.pop %v2900
    %2905 = vrot.lane.b32.xlu0 %v2901, 64
    %v2906 = vpop.permute.xlu0 %2905
    %2907 = vrot.lane.b32.xlu0 %v2902, 64
    %v2908 = vpop.permute.xlu0 %2907
    %v2911 = vmul.f32 %v2868, %v2906
    %v2912 = vmul.f32 %v2870, %v2908
    %2915 = vrot.lane.b32.xlu0 %v2911, 32
    %v2916 = vpop.permute.xlu0 %2915
    %2917 = vrot.lane.b32.xlu0 %v2912, 32
    %v2918 = vpop.permute.xlu0 %2917
    %2921 = vst.msk [vmem:[#allocation2] sm:$0x8] %vm710, %v2916
    %2922 = vst.msk [vmem:[#allocation2 + $0x8] sm:$0x8] %vm710, %v2918
    %v2923 = vpack.c.bf16 %v2911, %v2911
    %v2924 = vpack.c.bf16 %v2912, %v2912
    %v2927 = vunpack.c.l.b16 %v2923
    %v2928 = vunpack.c.l.b16 %v2924
    %v2929 = vrot.slane %v2927, 3
    %v2930 = vrot.slane %v2928, 2
    %v2931 = vsel %vm341, %v2930, %v2929
    %v2932 = vpack.c.b16 %v2931, %v2931
    %2933 = vrot.lane.b32.xlu0 %v2932, 32
    %v2934 = vpop.permute.xlu0 %2933
    %v2936 = vsel %vm217, %v2934, 0
    %2938 = vmatprep.subr.bf16.mxu0 0
    %2939 = vmatpush1.bf16.msra.mxu0 %v2429
    %2940 = vmatprep.subr.bf16.mxu0 0
    %2941 = vmatpush1.bf16.msra.mxu0 %v2430
    %2942 = vmatprep.subr.bf16.mxu0 0
    %2943 = vmatpush1.bf16.msra.mxu0 0
    %2944 = vmatprep.subr.bf16.mxu0 0
    %2945 = vmatpush1.bf16.msra.mxu0 0
    %2946 = vmatprep.subr.bf16.mxu0 0
    %2947 = vmatpush1.bf16.msra.mxu0 0
    %2948 = vmatprep.subr.bf16.mxu0 0
    %2949 = vmatpush1.bf16.msra.mxu0 0
    %2950 = vmatprep.subr.bf16.mxu0 0
    %2951 = vmatpush1.bf16.msra.mxu0 0
    %2952 = vmatprep.subr.bf16.mxu0 0
    %2953 = vmatpush1.bf16.msra.mxu0 0
    %2954 = vmatprep.subr.bf16.mxu0 0
    %2955 = vmatpush1.bf16.msra.mxu0 0
    %2956 = vmatprep.subr.bf16.mxu0 0
    %2957 = vmatpush1.bf16.msra.mxu0 0
    %2958 = vmatprep.subr.bf16.mxu0 0
    %2959 = vmatpush1.bf16.msra.mxu0 0
    %2960 = vmatprep.subr.bf16.mxu0 0
    %2961 = vmatpush1.bf16.msra.mxu0 0
    %2962 = vmatprep.subr.bf16.mxu0 0
    %2963 = vmatpush1.bf16.msra.mxu0 0
    %2964 = vmatprep.subr.bf16.mxu0 0
    %2965 = vmatpush1.bf16.msra.mxu0 0
    %2966 = vmatprep.subr.bf16.mxu0 0
    %2967 = vmatpush1.bf16.msra.mxu0 0
    %2968 = vmatprep.subr.bf16.mxu0 0
    %2969 = vmatpush1.bf16.msra.mxu0 0
    %2970 = vmatprep.mubr.bf16.mxu0 0
    %2971 = vmatmul.mubr.bf16.gmra.mrb[0].mxu0 %v2936
    %v2972 = vpop.f32.mrb[0].mxu0
    %v2973 = vadd.f32 0.0, %v2972
    %v2974 = vpop.f32.mrb[0].mxu0
    %v2975 = vpop.f32.mrb[0].mxu0
    %v2976 = vpop.f32.mrb[0].mxu0
    %2977 = vdwg.mxu0
    %v2979 = vrot.slane %v2973, 4
    %v2980 = vrot.slane %v2973, 5
    %v2983 = vadd.f32 %v2410, %v2979
    %v2984 = vadd.f32 %v2413, %v2980
    %v2985 = vxor.u32 %v2983, 2147483648
    %v2986 = vxor.u32 %v2984, 2147483648
    %v2987 = vmul.f32 %v2985, 1.442695
    %v2988 = vpow.pop %v2987
    %v2989 = vmul.f32 %v2986, 1.442695
    %v2990 = vpow.pop %v2989
    %v2991 = vadd.f32 %v2988, 1.0
    %v2992 = vadd.f32 %v2990, 1.0
    %v2993 = vrcp.pop %v2991
    %v2994 = vmul.f32 1.0, %v2993
    %v2995 = vrcp.pop %v2992
    %v2996 = vmul.f32 1.0, %v2995
    %v2997 = vtanh.pop %v2983
    %v2998 = vtanh.pop %v2984
    %v3001 = vrot.slane %v2899, 7
    %v3002 = vrot.slane %v2900, 7
    %v3005 = vmul.f32 %v2994, %v3001
    %v3006 = vmul.f32 %v2996, %v3002
    %3009 = vrot.lane.b32.xlu0 %v2997, 64
    %v3010 = vpop.permute.xlu0 %3009
    %3011 = vrot.lane.b32.xlu0 %v2998, 64
    %v3012 = vpop.permute.xlu0 %3011
    %v3015 = vmul.f32 %v2994, %v3010
    %v3016 = vmul.f32 %v2996, %v3012
    %3019 = vrot.lane.b32.xlu0 %v3015, 32
    %v3020 = vpop.permute.xlu0 %3019
    %3021 = vrot.lane.b32.xlu0 %v3016, 32
    %v3022 = vpop.permute.xlu0 %3021
    %v3025 = vadd.f32 %v3005, %v3020
    %v3026 = vadd.f32 %v3006, %v3022
    %v3027 = vtanh.pop %v3025
    %v3028 = vtanh.pop %v3026
    %3031 = vrot.lane.b32.xlu0 %v3027, 64
    %v3032 = vpop.permute.xlu0 %3031
    %3033 = vrot.lane.b32.xlu0 %v3028, 64
    %v3034 = vpop.permute.xlu0 %3033
    %v3037 = vmul.f32 %v2994, %v3032
    %v3038 = vmul.f32 %v2996, %v3034
    %3041 = vrot.lane.b32.xlu0 %v3037, 32
    %v3042 = vpop.permute.xlu0 %3041
    %3043 = vrot.lane.b32.xlu0 %v3038, 32
    %v3044 = vpop.permute.xlu0 %3043
    %3047 = vst.msk [vmem:[#allocation2] sm:$0x10] %vm837, %v3042
    %3048 = vst.msk [vmem:[#allocation2 + $0x8] sm:$0x10] %vm837, %v3044
    %v3049 = vpack.c.bf16 %v3037, %v3037
    %v3050 = vpack.c.bf16 %v3038, %v3038
    %v3053 = vunpack.c.l.b16 %v3049
    %v3054 = vunpack.c.l.b16 %v3050
    %v3055 = vrot.slane %v3053, 4
    %v3056 = vrot.slane %v3054, 3
    %v3057 = vsel %vm341, %v3056, %v3055
    %v3058 = vpack.c.b16 %v3057, %v3057
    %3059 = vrot.lane.b32.xlu0 %v3058, 32
    %v3060 = vpop.permute.xlu0 %3059
    %v3062 = vsel %vm217, %v3060, 0
    %3064 = vmatprep.subr.bf16.mxu0 0
    %3065 = vmatpush1.bf16.msra.mxu0 %v2429
    %3066 = vmatprep.subr.bf16.mxu0 0
    %3067 = vmatpush1.bf16.msra.mxu0 %v2430
    %3068 = vmatprep.subr.bf16.mxu0 0
    %3069 = vmatpush1.bf16.msra.mxu0 0
    %3070 = vmatprep.subr.bf16.mxu0 0
    %3071 = vmatpush1.bf16.msra.mxu0 0
    %3072 = vmatprep.subr.bf16.mxu0 0
    %3073 = vmatpush1.bf16.msra.mxu0 0
    %3074 = vmatprep.subr.bf16.mxu0 0
    %3075 = vmatpush1.bf16.msra.mxu0 0
    %3076 = vmatprep.subr.bf16.mxu0 0
    %3077 = vmatpush1.bf16.msra.mxu0 0
    %3078 = vmatprep.subr.bf16.mxu0 0
    %3079 = vmatpush1.bf16.msra.mxu0 0
    %3080 = vmatprep.subr.bf16.mxu0 0
    %3081 = vmatpush1.bf16.msra.mxu0 0
    %3082 = vmatprep.subr.bf16.mxu0 0
    %3083 = vmatpush1.bf16.msra.mxu0 0
    %3084 = vmatprep.subr.bf16.mxu0 0
    %3085 = vmatpush1.bf16.msra.mxu0 0
    %3086 = vmatprep.subr.bf16.mxu0 0
    %3087 = vmatpush1.bf16.msra.mxu0 0
    %3088 = vmatprep.subr.bf16.mxu0 0
    %3089 = vmatpush1.bf16.msra.mxu0 0
    %3090 = vmatprep.subr.bf16.mxu0 0
    %3091 = vmatpush1.bf16.msra.mxu0 0
    %3092 = vmatprep.subr.bf16.mxu0 0
    %3093 = vmatpush1.bf16.msra.mxu0 0
    %3094 = vmatprep.subr.bf16.mxu0 0
    %3095 = vmatpush1.bf16.msra.mxu0 0
    %3096 = vmatprep.mubr.bf16.mxu0 0
    %3097 = vmatmul.mubr.bf16.gmra.mrb[0].mxu0 %v3062
    %v3098 = vpop.f32.mrb[0].mxu0
    %v3099 = vadd.f32 0.0, %v3098
    %v3100 = vpop.f32.mrb[0].mxu0
    %v3101 = vpop.f32.mrb[0].mxu0
    %v3102 = vpop.f32.mrb[0].mxu0
    %3103 = vdwg.mxu0
    %v3105 = vrot.slane %v3099, 3
    %v3106 = vrot.slane %v3099, 4
    %v3109 = vadd.f32 %v2410, %v3105
    %v3110 = vadd.f32 %v2413, %v3106
    %v3111 = vxor.u32 %v3109, 2147483648
    %v3112 = vxor.u32 %v3110, 2147483648
    %v3113 = vmul.f32 %v3111, 1.442695
    %v3114 = vpow.pop %v3113
    %v3115 = vmul.f32 %v3112, 1.442695
    %v3116 = vpow.pop %v3115
    %v3117 = vadd.f32 %v3114, 1.0
    %v3118 = vadd.f32 %v3116, 1.0
    %v3119 = vrcp.pop %v3117
    %v3120 = vmul.f32 1.0, %v3119
    %v3121 = vrcp.pop %v3118
    %v3122 = vmul.f32 1.0, %v3121
    %v3123 = vtanh.pop %v3109
    %v3124 = vtanh.pop %v3110
    %v3127 = vrot.slane %v3025, 7
    %v3128 = vrot.slane %v3026, 7
    %v3131 = vmul.f32 %v3120, %v3127
    %v3132 = vmul.f32 %v3122, %v3128
    %3135 = vrot.lane.b32.xlu0 %v3123, 64
    %v3136 = vpop.permute.xlu0 %3135
    %3137 = vrot.lane.b32.xlu0 %v3124, 64
    %v3138 = vpop.permute.xlu0 %3137
    %v3141 = vmul.f32 %v3120, %v3136
    %v3142 = vmul.f32 %v3122, %v3138
    %3145 = vrot.lane.b32.xlu0 %v3141, 32
    %v3146 = vpop.permute.xlu0 %3145
    %3147 = vrot.lane.b32.xlu0 %v3142, 32
    %v3148 = vpop.permute.xlu0 %3147
    %v3151 = vadd.f32 %v3131, %v3146
    %v3152 = vadd.f32 %v3132, %v3148
    %v3153 = vtanh.pop %v3151
    %v3154 = vtanh.pop %v3152
    %3157 = vrot.lane.b32.xlu0 %v3153, 64
    %v3158 = vpop.permute.xlu0 %3157
    %3159 = vrot.lane.b32.xlu0 %v3154, 64
    %v3160 = vpop.permute.xlu0 %3159
    %v3163 = vmul.f32 %v3120, %v3158
    %v3164 = vmul.f32 %v3122, %v3160
    %3167 = vrot.lane.b32.xlu0 %v3163, 32
    %v3168 = vpop.permute.xlu0 %3167
    %3169 = vrot.lane.b32.xlu0 %v3164, 32
    %v3170 = vpop.permute.xlu0 %3169
    %3173 = vst.msk [vmem:[#allocation2] sm:$0x20] %vm964, %v3168
    %3174 = vst.msk [vmem:[#allocation2 + $0x8] sm:$0x20] %vm964, %v3170
    %v3175 = vpack.c.bf16 %v3163, %v3163
    %v3176 = vpack.c.bf16 %v3164, %v3164
    %v3179 = vunpack.c.l.b16 %v3175
    %v3180 = vunpack.c.l.b16 %v3176
    %v3181 = vrot.slane %v3179, 5
    %v3182 = vrot.slane %v3180, 4
    %v3183 = vsel %vm341, %v3182, %v3181
    %v3184 = vpack.c.b16 %v3183, %v3183
    %3185 = vrot.lane.b32.xlu0 %v3184, 32
    %v3186 = vpop.permute.xlu0 %3185
    %v3188 = vsel %vm217, %v3186, 0
    %3190 = vmatprep.subr.bf16.mxu0 0
    %3191 = vmatpush1.bf16.msra.mxu0 %v2429
    %3192 = vmatprep.subr.bf16.mxu0 0
    %3193 = vmatpush1.bf16.msra.mxu0 %v2430
    %3194 = vmatprep.subr.bf16.mxu0 0
    %3195 = vmatpush1.bf16.msra.mxu0 0
    %3196 = vmatprep.subr.bf16.mxu0 0
    %3197 = vmatpush1.bf16.msra.mxu0 0
    %3198 = vmatprep.subr.bf16.mxu0 0
    %3199 = vmatpush1.bf16.msra.mxu0 0
    %3200 = vmatprep.subr.bf16.mxu0 0
    %3201 = vmatpush1.bf16.msra.mxu0 0
    %3202 = vmatprep.subr.bf16.mxu0 0
    %3203 = vmatpush1.bf16.msra.mxu0 0
    %3204 = vmatprep.subr.bf16.mxu0 0
    %3205 = vmatpush1.bf16.msra.mxu0 0
    %3206 = vmatprep.subr.bf16.mxu0 0
    %3207 = vmatpush1.bf16.msra.mxu0 0
    %3208 = vmatprep.subr.bf16.mxu0 0
    %3209 = vmatpush1.bf16.msra.mxu0 0
    %3210 = vmatprep.subr.bf16.mxu0 0
    %3211 = vmatpush1.bf16.msra.mxu0 0
    %3212 = vmatprep.subr.bf16.mxu0 0
    %3213 = vmatpush1.bf16.msra.mxu0 0
    %3214 = vmatprep.subr.bf16.mxu0 0
    %3215 = vmatpush1.bf16.msra.mxu0 0
    %3216 = vmatprep.subr.bf16.mxu0 0
    %3217 = vmatpush1.bf16.msra.mxu0 0
    %3218 = vmatprep.subr.bf16.mxu0 0
    %3219 = vmatpush1.bf16.msra.mxu0 0
    %3220 = vmatprep.subr.bf16.mxu0 0
    %3221 = vmatpush1.bf16.msra.mxu0 0
    %3222 = vmatprep.mubr.bf16.mxu0 0
    %3223 = vmatmul.mubr.bf16.gmra.mrb[0].mxu0 %v3188
    %v3224 = vpop.f32.mrb[0].mxu0
    %v3225 = vadd.f32 0.0, %v3224
    %v3226 = vpop.f32.mrb[0].mxu0
    %v3227 = vpop.f32.mrb[0].mxu0
    %v3228 = vpop.f32.mrb[0].mxu0
    %3229 = vdwg.mxu0
    %v3231 = vrot.slane %v3225, 2
    %v3232 = vrot.slane %v3225, 3
    %v3235 = vadd.f32 %v2410, %v3231
    %v3236 = vadd.f32 %v2413, %v3232
    %v3237 = vxor.u32 %v3235, 2147483648
    %v3238 = vxor.u32 %v3236, 2147483648
    %v3239 = vmul.f32 %v3237, 1.442695
    %v3240 = vpow.pop %v3239
    %v3241 = vmul.f32 %v3238, 1.442695
    %v3242 = vpow.pop %v3241
    %v3243 = vadd.f32 %v3240, 1.0
    %v3244 = vadd.f32 %v3242, 1.0
    %v3245 = vrcp.pop %v3243
    %v3246 = vmul.f32 1.0, %v3245
    %v3247 = vrcp.pop %v3244
    %v3248 = vmul.f32 1.0, %v3247
    %v3249 = vtanh.pop %v3235
    %v3250 = vtanh.pop %v3236
    %v3253 = vrot.slane %v3151, 7
    %v3254 = vrot.slane %v3152, 7
    %v3257 = vmul.f32 %v3246, %v3253
    %v3258 = vmul.f32 %v3248, %v3254
    %3261 = vrot.lane.b32.xlu0 %v3249, 64
    %v3262 = vpop.permute.xlu0 %3261
    %3263 = vrot.lane.b32.xlu0 %v3250, 64
    %v3264 = vpop.permute.xlu0 %3263
    %v3267 = vmul.f32 %v3246, %v3262
    %v3268 = vmul.f32 %v3248, %v3264
    %3271 = vrot.lane.b32.xlu0 %v3267, 32
    %v3272 = vpop.permute.xlu0 %3271
    %3273 = vrot.lane.b32.xlu0 %v3268, 32
    %v3274 = vpop.permute.xlu0 %3273
    %v3277 = vadd.f32 %v3257, %v3272
    %v3278 = vadd.f32 %v3258, %v3274
    %v3279 = vtanh.pop %v3277
    %v3280 = vtanh.pop %v3278
    %3283 = vrot.lane.b32.xlu0 %v3279, 64
    %v3284 = vpop.permute.xlu0 %3283
    %3285 = vrot.lane.b32.xlu0 %v3280, 64
    %v3286 = vpop.permute.xlu0 %3285
    %v3289 = vmul.f32 %v3246, %v3284
    %v3290 = vmul.f32 %v3248, %v3286
    %3293 = vrot.lane.b32.xlu0 %v3289, 32
    %v3294 = vpop.permute.xlu0 %3293
    %3295 = vrot.lane.b32.xlu0 %v3290, 32
    %v3296 = vpop.permute.xlu0 %3295
    %3299 = vst.msk [vmem:[#allocation2] sm:$0x40] %vm1091, %v3294
    %3300 = vst.msk [vmem:[#allocation2 + $0x8] sm:$0x40] %vm1091, %v3296
    %v3301 = vpack.c.bf16 %v3289, %v3289
    %v3302 = vpack.c.bf16 %v3290, %v3290
    %v3305 = vunpack.c.l.b16 %v3301
    %v3306 = vunpack.c.l.b16 %v3302
    %v3307 = vrot.slane %v3305, 6
    %v3308 = vrot.slane %v3306, 5
    %v3309 = vsel %vm341, %v3308, %v3307
    %v3310 = vpack.c.b16 %v3309, %v3309
    %3311 = vrot.lane.b32.xlu0 %v3310, 32
    %v3312 = vpop.permute.xlu0 %3311
    %v3314 = vsel %vm217, %v3312, 0
    %3316 = vmatprep.subr.bf16.mxu0 0
    %3317 = vmatpush1.bf16.msra.mxu0 %v2429
    %3318 = vmatprep.subr.bf16.mxu0 0
    %3319 = vmatpush1.bf16.msra.mxu0 %v2430
    %3320 = vmatprep.subr.bf16.mxu0 0
    %3321 = vmatpush1.bf16.msra.mxu0 0
    %3322 = vmatprep.subr.bf16.mxu0 0
    %3323 = vmatpush1.bf16.msra.mxu0 0
    %3324 = vmatprep.subr.bf16.mxu0 0
    %3325 = vmatpush1.bf16.msra.mxu0 0
    %3326 = vmatprep.subr.bf16.mxu0 0
    %3327 = vmatpush1.bf16.msra.mxu0 0
    %3328 = vmatprep.subr.bf16.mxu0 0
    %3329 = vmatpush1.bf16.msra.mxu0 0
    %3330 = vmatprep.subr.bf16.mxu0 0
    %3331 = vmatpush1.bf16.msra.mxu0 0
    %3332 = vmatprep.subr.bf16.mxu0 0
    %3333 = vmatpush1.bf16.msra.mxu0 0
    %3334 = vmatprep.subr.bf16.mxu0 0
    %3335 = vmatpush1.bf16.msra.mxu0 0
    %3336 = vmatprep.subr.bf16.mxu0 0
    %3337 = vmatpush1.bf16.msra.mxu0 0
    %3338 = vmatprep.subr.bf16.mxu0 0
    %3339 = vmatpush1.bf16.msra.mxu0 0
    %3340 = vmatprep.subr.bf16.mxu0 0
    %3341 = vmatpush1.bf16.msra.mxu0 0
    %3342 = vmatprep.subr.bf16.mxu0 0
    %3343 = vmatpush1.bf16.msra.mxu0 0
    %3344 = vmatprep.subr.bf16.mxu0 0
    %3345 = vmatpush1.bf16.msra.mxu0 0
    %3346 = vmatprep.subr.bf16.mxu0 0
    %3347 = vmatpush1.bf16.msra.mxu0 0
    %3348 = vmatprep.mubr.bf16.mxu0 0
    %3349 = vmatmul.mubr.bf16.gmra.mrb[0].mxu0 %v3314
    %v3350 = vpop.f32.mrb[0].mxu0
    %v3351 = vadd.f32 0.0, %v3350
    %v3352 = vpop.f32.mrb[0].mxu0
    %v3353 = vpop.f32.mrb[0].mxu0
    %v3354 = vpop.f32.mrb[0].mxu0
    %3355 = vdwg.mxu0
    %v3357 = vrot.slane %v3351, 1
    %v3358 = vrot.slane %v3351, 2
    %v3361 = vadd.f32 %v2410, %v3357
    %v3362 = vadd.f32 %v2413, %v3358
    %v3363 = vxor.u32 %v3361, 2147483648
    %v3364 = vxor.u32 %v3362, 2147483648
    %v3365 = vmul.f32 %v3363, 1.442695
    %v3366 = vpow.pop %v3365
    %v3367 = vmul.f32 %v3364, 1.442695
    %v3368 = vpow.pop %v3367
    %v3369 = vadd.f32 %v3366, 1.0
    %v3370 = vadd.f32 %v3368, 1.0
    %v3371 = vrcp.pop %v3369
    %v3372 = vmul.f32 1.0, %v3371
    %v3373 = vrcp.pop %v3370
    %v3374 = vmul.f32 1.0, %v3373
    %v3375 = vtanh.pop %v3361
    %v3376 = vtanh.pop %v3362
    %v3379 = vrot.slane %v3277, 7
    %v3380 = vrot.slane %v3278, 7
    %v3383 = vmul.f32 %v3372, %v3379
    %v3384 = vmul.f32 %v3374, %v3380
    %3387 = vrot.lane.b32.xlu0 %v3375, 64
    %v3388 = vpop.permute.xlu0 %3387
    %3389 = vrot.lane.b32.xlu0 %v3376, 64
    %v3390 = vpop.permute.xlu0 %3389
    %v3393 = vmul.f32 %v3372, %v3388
    %v3394 = vmul.f32 %v3374, %v3390
    %3397 = vrot.lane.b32.xlu0 %v3393, 32
    %v3398 = vpop.permute.xlu0 %3397
    %3399 = vrot.lane.b32.xlu0 %v3394, 32
    %v3400 = vpop.permute.xlu0 %3399
    %v3403 = vadd.f32 %v3383, %v3398
    %v3404 = vadd.f32 %v3384, %v3400
    %v3405 = vtanh.pop %v3403
    %v3406 = vtanh.pop %v3404
    %3409 = vrot.lane.b32.xlu0 %v3405, 64
    %v3410 = vpop.permute.xlu0 %3409
    %3411 = vrot.lane.b32.xlu0 %v3406, 64
    %v3412 = vpop.permute.xlu0 %3411
    %v3415 = vmul.f32 %v3372, %v3410
    %v3416 = vmul.f32 %v3374, %v3412
    %3419 = vrot.lane.b32.xlu0 %v3415, 32
    %v3420 = vpop.permute.xlu0 %3419
    %3421 = vrot.lane.b32.xlu0 %v3416, 32
    %v3422 = vpop.permute.xlu0 %3421
    %3425 = vst.msk [vmem:[#allocation2] sm:$0x80] %vm1218, %v3420
    %3426 = vst.msk [vmem:[#allocation2 + $0x8] sm:$0x80] %vm1218, %v3422
    %v3427 = vrot.slane %v3416, 7
    %3428 = vrot.lane.b32.xlu0 %v3427, 32
    %v3429 = vpop.permute.xlu0 %3428
    %s3431 = scalar_lea.vmem [#allocation15], 4
    %3432 = vst.msk [vmem:[%s3431 - $0x7] sm:$0x80] %vm1218, %v3420
    %3433 = vst.msk [vmem:[%s3431 + $0x1] sm:$0x1] %vm331, %v3429
    %v3436 = vrot.slane %v3404, 7
    %3437 = vrot.lane.b32.xlu0 %v3403, 96
    %v3438 = vpop.permute.xlu0 %3437
    %3439 = vrot.lane.b32.xlu0 %v3436, 96
    %v3440 = vpop.permute.xlu0 %3439
    %s3443 = scalar_lea.vmem [#allocation17], 4
    %3444 = vst.msk [vmem:[%s3443 - $0x7] sm:$0x80] %vm1218, %v3438
    %3445 = vst.msk [vmem:[%s3443 + $0x1] sm:$0x1] %vm331, %v3440
    %v3446 = vld [vmem:[#allocation2] sm:$0xff]
    %v3447 = vld [vmem:[#allocation2 + $0x8] sm:$0xff]
    %v3448 = vpack.c.bf16 %v3447, %v3446
    %v3449 = vld [vmem:[%s12] sm:$0xf]
    %v3450 = vld [vmem:[%s12 + $0x4] sm:$0xf]
    %v3451 = vld [vmem:[%s12 + $0x8] sm:$0xf]
    %v3452 = vld [vmem:[%s12 + $0xc] sm:$0xf]
    %v3453 = vld [vmem:[%s13] sm:$0x1]
    %v3455 = vlaneseq
    %v3456 = vshrl.u32 %v3455, 7
    %v3457 = vsub.s32 0, %v3456
    %v3458 = vrot.slane %v3453, %v3457
    %v3464 = vunpack.c.l.b16 %v3449
    %v3465 = vunpack.c.l.b16 %v3450
    %v3466 = vunpack.c.l.b16 %v3451
    %v3467 = vunpack.c.l.b16 %v3452
    %v3468 = vpack.c.b16 %v3465, %v3464
    %v3469 = vpack.c.b16 %v3467, %v3466
    %v3473 = vsel %vm217, %v3448, 0
    %3475 = vmatprep.subr.bf16.mxu0 0
    %3476 = vmatpush1.bf16.msra.mxu0 %v3468
    %3477 = vmatprep.subr.bf16.mxu0 0
    %3478 = vmatpush1.bf16.msra.mxu0 %v3469
    %3479 = vmatprep.subr.bf16.mxu0 0
    %3480 = vmatpush1.bf16.msra.mxu0 0
    %3481 = vmatprep.subr.bf16.mxu0 0
    %3482 = vmatpush1.bf16.msra.mxu0 0
    %3483 = vmatprep.subr.bf16.mxu0 0
    %3484 = vmatpush1.bf16.msra.mxu0 0
    %3485 = vmatprep.subr.bf16.mxu0 0
    %3486 = vmatpush1.bf16.msra.mxu0 0
    %3487 = vmatprep.subr.bf16.mxu0 0
    %3488 = vmatpush1.bf16.msra.mxu0 0
    %3489 = vmatprep.subr.bf16.mxu0 0
    %3490 = vmatpush1.bf16.msra.mxu0 0
    %3491 = vmatprep.subr.bf16.mxu0 0
    %3492 = vmatpush1.bf16.msra.mxu0 0
    %3493 = vmatprep.subr.bf16.mxu0 0
    %3494 = vmatpush1.bf16.msra.mxu0 0
    %3495 = vmatprep.subr.bf16.mxu0 0
    %3496 = vmatpush1.bf16.msra.mxu0 0
    %3497 = vmatprep.subr.bf16.mxu0 0
    %3498 = vmatpush1.bf16.msra.mxu0 0
    %3499 = vmatprep.subr.bf16.mxu0 0
    %3500 = vmatpush1.bf16.msra.mxu0 0
    %3501 = vmatprep.subr.bf16.mxu0 0
    %3502 = vmatpush1.bf16.msra.mxu0 0
    %3503 = vmatprep.subr.bf16.mxu0 0
    %3504 = vmatpush1.bf16.msra.mxu0 0
    %3505 = vmatprep.subr.bf16.mxu0 0
    %3506 = vmatpush1.bf16.msra.mxu0 0
    %3507 = vmatprep.mubr.bf16.mxu0 0
    %3508 = vmatmul.mubr.bf16.gmra.mrb[0].mxu0 %v3473
    %v3509 = vpop.f32.mrb[0].mxu0
    %v3510 = vadd.f32 %v3458, %v3509
    %v3511 = vpop.f32.mrb[0].mxu0
    %v3512 = vpop.f32.mrb[0].mxu0
    %v3513 = vadd.f32 %v3458, %v3512
    %v3514 = vpop.f32.mrb[0].mxu0
    %3515 = vdwg.mxu0
    %3516 = vst.msk [vmem:[#allocation14] sm:$0xff] %vm157, %v3510
    %3517 = vst.msk [vmem:[#allocation14 + $0x8] sm:$0xff] %vm157, %v3513
    // Predicated region
    $region82: #{tpu_custom_call.1} parent=1 // pred_check
      _
    $region83: #{tpu_custom_call.1} parent=1 // pred_check_branch
      %3519 = sbr.rel (0) target = $region85
    $region84: #{tpu_custom_call.1} parent=1 // pred_region
      %s3521 = ssub.s32 256, 256
      %3522 = vsyncadd [#allocation5], %s3521
      %s3523 = sshll.u32 [#allocation14], 4
      %s3524 = int_to_ptr.vmem [resolvable:$true] %s3523
      %3529 = dma.vmem_to_hbm [thread:$0]  %s3524, 256, %s14, [#allocation5], 128, 128, 8
    $region85: #{tpu_custom_call.1} parent=1 // pred_fallthru
      _
    // Predicated region
    $region86: #{tpu_custom_call.1} parent=1 // pred_check
      _
    $region87: #{tpu_custom_call.1} parent=1 // pred_check_branch
      %3531 = sbr.rel (0) target = $region89
    $region88: #{tpu_custom_call.1} parent=1 // pred_region
      %s3533 = ssub.s32 96, 96
      %3534 = vsyncadd [#allocation16], %s3533
      %s3535 = sshll.u32 [#allocation15], 4
      %s3536 = int_to_ptr.vmem [resolvable:$true] %s3535
      %3541 = dma.vmem_to_hbm [thread:$0]  %s3536, 96, %s15, [#allocation16], 32, 32, 2
    $region89: #{tpu_custom_call.1} parent=1 // pred_fallthru
      _
    // Predicated region
    $region90: #{tpu_custom_call.1} parent=1 // pred_check
      _
    $region91: #{tpu_custom_call.1} parent=1 // pred_check_branch
      %3543 = sbr.rel (0) target = $region93
    $region92: #{tpu_custom_call.1} parent=1 // pred_region
      %s3545 = ssub.s32 96, 96
      %3546 = vsyncadd [#allocation16], %s3545
      %s3547 = sshll.u32 [#allocation17], 4
      %s3548 = int_to_ptr.vmem [resolvable:$true] %s3547
      %3553 = dma.vmem_to_hbm [thread:$0]  %s3548, 96, %s16, [#allocation16], 32, 32, 2
    $region93: #{tpu_custom_call.1} parent=1 // pred_fallthru
      _
    // Predicated region
    $region94: #{tpu_custom_call.1} parent=1 // pred_check
      _
    $region95: #{tpu_custom_call.1} parent=1 // pred_check_branch
      %3555 = sbr.rel (0) target = $region97
    $region96: #{tpu_custom_call.1} parent=1 // pred_region
      %3556 = dma.done [#allocation5], 256
    $region97: #{tpu_custom_call.1} parent=1 // pred_fallthru
      _
    // Predicated region
    $region98: #{tpu_custom_call.1} parent=1 // pred_check
      _
    $region99: #{tpu_custom_call.1} parent=1 // pred_check_branch
      %3558 = sbr.rel (0) target = $region101
    $region100: #{tpu_custom_call.1} parent=1 // pred_region
      %3559 = dma.done [#allocation16], 96
    $region101: #{tpu_custom_call.1} parent=1 // pred_fallthru
      _
    // Predicated region
    $region102: #{tpu_custom_call.1} parent=1 // pred_check
      _
    $region103: #{tpu_custom_call.1} parent=1 // pred_check_branch
      %3561 = sbr.rel (0) target = $region105
    $region104: #{tpu_custom_call.1} parent=1 // pred_region
      %3562 = dma.done [#allocation16], 96
    $region105: #{tpu_custom_call.1} parent=1 // pred_fallthru
      _
    %3563 = vsyncpa [#allocation4], 1
    %3564 = vsyncpa [#allocation7], 1
    %3565 = vsyncpa [#allocation10], 1
    %3566 = vsyncpa [#allocation13], 1
    %3567 = vsyncpa [#allocation5], 1
    %3568 = vsyncpa [#allocation16], 1

</llo_original>
